<compile_context>
chip_gen: v7x
topology: tpu7x:2x2x1
jax: 0.10.0
libtpu: 0.0.40
codegen_flags: <defaults>
</compile_context>

<pallas_src>
import math
from functools import partial

import jax
import jax.numpy as jnp
from jax.experimental import pallas as pl
from jax.experimental.pallas import tpu as pltpu

# ---------------- mini-BERT config (synthetic, small) ----------------
VOCAB = 64
TYPE_VOCAB = 2
SEQ = 8
HIDDEN = 32
N_HEADS = 2
HEAD_DIM = HIDDEN // N_HEADS
INTERMEDIATE = 64
N_LAYERS = 2
BATCH = 2
N_ENCODERS = 2          # concept encoder + property encoder
LN_EPS = 1e-12          # BERT LayerNorm eps
NORM_EPS = 1e-12        # torch.nn.functional.normalize eps

# packed-slab layout constants
WCOLS = 3 * HIDDEN + HIDDEN + INTERMEDIATE   # wqkv | wo | w1 concatenated along lanes
VEC_LANES = 128                              # lane-padded row width of the vector slab
NVEC_PER_LAYER = 8                           # bqkv, bo, ln1_g, ln1_b, b1, b2, ln2_g, ln2_b
NVEC_ROWS = 2 + NVEC_PER_LAYER * N_LAYERS    # + emb_ln_g, emb_ln_b


# ---------------- in-kernel math helpers ----------------
def _layer_norm(h, g, b):
    mu = jnp.mean(h, axis=-1, keepdims=True)
    var = jnp.mean(jnp.square(h - mu), axis=-1, keepdims=True)
    return (h - mu) * jax.lax.rsqrt(var + LN_EPS) * g + b


def _erf(x):
    # Abramowitz & Stegun 7.1.26 polynomial erf; |error| < 1.5e-7 (effectively exact
    # erf-GELU in f32), built only from ops guaranteed to lower in Mosaic.
    p = 0.3275911
    a1, a2, a3, a4, a5 = (0.254829592, -0.284496736, 1.421413741,
                          -1.453152027, 1.061405429)
    ax = jnp.abs(x)
    t = 1.0 / (1.0 + p * ax)
    poly = ((((a5 * t + a4) * t + a3) * t + a2) * t + a1) * t
    e = 1.0 - poly * jnp.exp(-ax * ax)
    return jnp.where(x >= 0.0, e, -e)


def _gelu_erf(x):
    return 0.5 * x * (1.0 + _erf(x * (1.0 / math.sqrt(2.0))))


# ---------------- fused encoder + pooling kernel ----------------
# grid = (N_ENCODERS,) ["parallel"]: one grid step per encoder (sharded across
# TensorCores on v7x; on 1-TC v5e/v6e it is just a 2-iteration loop).
# All layers are statically unrolled inside the body; the hidden state lives purely in
# vregs/VMEM and never touches HBM.  The masked-mean pool (+ L2 normalize for the
# concept encoder) is fused into the tail, so the only output is the (B, H) pooled
# vector per encoder.
def _encoder_pool_kernel(emb_ref, mask_ref, wmat_ref, w2_ref, vec_ref, pool_ref,
                         *, B, S, H, I, L, nH, Dh):
    e = pl.program_id(0)

    mask = mask_ref[0]                                   # (B, S) float32 attention mask
    vecs = vec_ref[0]                                    # (NVEC_ROWS, 128) vector slab

    # ---- embedding LayerNorm (no zero-residual tensor streamed from HBM) ----
    x = _layer_norm(emb_ref[0], vecs[0:1, :H], vecs[1:2, :H])        # (B*S, H)

    # additive key-mask bias, broadcast ONCE per encoder (hoisted out of all loops)
    bias = ((1.0 - mask) * -10000.0).reshape(B, 1, S)                # (B, 1, S)
    bias_bh = jnp.concatenate([bias] * nH, axis=0)                   # (nH*B, 1, S)

    # ---- all transformer layers, statically unrolled; weights fully VMEM-resident ----
    for l in range(L):
        base = 2 + l * NVEC_PER_LAYER
        wm = wmat_ref[0, l]                              # (H, 3H + H + I) matrix slab
        wqkv = wm[:, 0:3 * H]                            # Wq*scale | Wk | Wv
        wo = wm[:, 3 * H:4 * H]
        w1 = wm[:, 4 * H:4 * H + I]
        w2 = w2_ref[0, l]                                # (I, H)
        bqkv = vecs[base + 0:base + 1, :3 * H]
        bo = vecs[base + 1:base + 2, :H]
        g1 = vecs[base + 2:base + 3, :H]
        be1 = vecs[base + 3:base + 4, :H]
        b1 = vecs[base + 4:base + 5, :I]
        b2 = vecs[base + 5:base + 6, :H]
        g2 = vecs[base + 6:base + 7, :H]
        be2 = vecs[base + 7:base + 8, :H]

        # fused QKV projection (Wq/bq pre-scaled by 1/sqrt(Dh))
        qkv = jnp.dot(x, wqkv, preferred_element_type=jnp.float32) + bqkv   # (B*S, 3H)

        # heads stacked into the leading batch axis -> one batched einsum per stage
        def split_heads(off):
            return jnp.concatenate(
                [qkv[:, off + h * Dh: off + (h + 1) * Dh].reshape(B, S, Dh)
                 for h in range(nH)], axis=0)            # (nH*B, S, Dh), head-major

        q = split_heads(0)
        k = split_heads(H)
        v = split_heads(2 * H)

        s = jnp.einsum('bqd,bkd->bqk', q, k, preferred_element_type=jnp.float32)
        s = s + bias_bh
        s = s - jnp.max(s, axis=-1, keepdims=True)
        p = jnp.exp(s)
        p = p / jnp.sum(p, axis=-1, keepdims=True)       # exact softmax (torch parity)
        ctx = jnp.einsum('bqk,bkd->bqd', p, v, preferred_element_type=jnp.float32)
        # merge heads back into lanes: (nH*B, S, Dh) -> (B*S, H)
        ctx = jnp.concatenate(
            [ctx[h * B:(h + 1) * B].reshape(B * S, Dh) for h in range(nH)], axis=-1)

        attn = jnp.dot(ctx, wo, preferred_element_type=jnp.float32) + bo
        x = _layer_norm(attn + x, g1, be1)

        # ---- feed-forward (exact erf GELU) ----
        ff = jnp.dot(x, w1, preferred_element_type=jnp.float32) + b1
        ff = _gelu_erf(ff)
        ff = jnp.dot(ff, w2, preferred_element_type=jnp.float32) + b2
        x = _layer_norm(ff + x, g2, be2)

    # ---- fused masked-mean pooling (+ L2 normalize for the concept encoder, e == 0) ----
    h3 = x.reshape(B, S, H)
    denom = jnp.sum(mask, axis=1, keepdims=True)                     # (B, 1)
    vm = jnp.sum(h3 * mask[:, :, None], axis=1) / denom              # (B, H)
    nrm = jnp.maximum(jnp.sqrt(jnp.sum(vm * vm, axis=-1, keepdims=True)), NORM_EPS)
    is_concept = (e == 0).astype(jnp.float32)
    pool_ref[0] = is_concept * (vm / nrm) + (1.0 - is_concept) * vm


def pallas_encode_and_pool(packed, emb_stacked, masks):
    """Both encoders (all layers + pooling) in ONE pallas_call.

    emb_stacked : (2, B*S, H)  post-embedding sums (word+pos+type), pre-LN
    masks       : (2, B, S)    float attention masks
    returns     : (2, B, H)    pooled vectors; encoder 0 (concept) is L2-normalized
    """
    B_S = BATCH * SEQ
    H, I, L = HIDDEN, INTERMEDIATE, N_LAYERS

    enc3 = lambda e: (e, 0, 0)
    enc4 = lambda e: (e, 0, 0, 0)

    in_specs = [
        pl.BlockSpec((1, B_S, H), enc3),                  # embeddings
        pl.BlockSpec((1, BATCH, SEQ), enc3),              # attention masks
        pl.BlockSpec((1, L, H, WCOLS), enc4),             # matrix slab: wqkv|wo|w1
        pl.BlockSpec((1, L, I, H), enc4),                 # w2
        pl.BlockSpec((1, NVEC_ROWS, VEC_LANES), enc3),    # vector slab: biases + LN params
    ]
    out_spec = pl.BlockSpec((1, BATCH, H), enc3)

    kern = partial(_encoder_pool_kernel, B=BATCH, S=SEQ, H=H, I=I, L=L,
                   nH=N_HEADS, Dh=HEAD_DIM)
    return pl.pallas_call(
        kern,
        out_shape=jax.ShapeDtypeStruct((N_ENCODERS, BATCH, H), jnp.float32),
        grid_spec=pltpu.PrefetchScalarGridSpec(
            num_scalar_prefetch=0,
            grid=(N_ENCODERS,),
            in_specs=in_specs,
            out_specs=out_spec),
        compiler_params=pltpu.CompilerParams(
            dimension_semantics=("parallel",),            # 2-TC split on v7x; no-op on 1-TC
            vmem_limit_bytes=32 * 1024 * 1024),
    )(emb_stacked, masks, packed['wmat'], packed['w2'], packed['vec'])


# ---------------- synthetic BERT parameters ----------------
def init_bert_params(key):
    keys = jax.random.split(key, 3 + N_LAYERS)

    def dense(k, shape):
        return jax.random.normal(k, shape, jnp.float32) * 0.02

    params = {
        'word_emb': dense(keys[0], (VOCAB, HIDDEN)),
        'pos_emb': dense(keys[1], (SEQ, HIDDEN)),
        'type_emb': dense(keys[2], (TYPE_VOCAB, HIDDEN)),
        'emb_ln_g': jnp.ones((HIDDEN,), jnp.float32),
        'emb_ln_b': jnp.zeros((HIDDEN,), jnp.float32),
        'layers': [],
    }
    for i in range(N_LAYERS):
        lk = jax.random.split(keys[3 + i], 6)
        params['layers'].append({
            'wq': dense(lk[0], (HIDDEN, HIDDEN)), 'bq': jnp.zeros((HIDDEN,), jnp.float32),
            'wk': dense(lk[1], (HIDDEN, HIDDEN)), 'bk': jnp.zeros((HIDDEN,), jnp.float32),
            'wv': dense(lk[2], (HIDDEN, HIDDEN)), 'bv': jnp.zeros((HIDDEN,), jnp.float32),
            'wo': dense(lk[3], (HIDDEN, HIDDEN)), 'bo': jnp.zeros((HIDDEN,), jnp.float32),
            'ln1_g': jnp.ones((HIDDEN,), jnp.float32), 'ln1_b': jnp.zeros((HIDDEN,), jnp.float32),
            'w1': dense(lk[4], (HIDDEN, INTERMEDIATE)), 'b1': jnp.zeros((INTERMEDIATE,), jnp.float32),
            'w2': dense(lk[5], (INTERMEDIATE, HIDDEN)), 'b2': jnp.zeros((HIDDEN,), jnp.float32),
            'ln2_g': jnp.ones((HIDDEN,), jnp.float32), 'ln2_b': jnp.zeros((HIDDEN,), jnp.float32),
        })
    # Note: the BERT pooler head is omitted — the module's 'mean' strategy never uses
    # pooler_output. Dropout layers are identity at inference.
    return params


def pack_params(param_sets):
    """One-time packing: fold 1/sqrt(Dh) into Wq/bq, fuse Wq|Wk|Wv, and coalesce all
    per-layer weights into three contiguous slabs per encoder so the kernel needs only
    a handful of DMAs per grid step."""
    scale = 1.0 / math.sqrt(HEAD_DIM)
    H, I = HIDDEN, INTERMEDIATE

    def pad_row(v):
        return jnp.pad(v, (0, VEC_LANES - v.shape[0]))

    wmats, w2s, vec_slabs = [], [], []
    word_e, pos_e, type_e = [], [], []
    for p in param_sets:
        rows = [pad_row(p['emb_ln_g']), pad_row(p['emb_ln_b'])]
        lw, l2 = [], []
        for l in p['layers']:
            wqkv = jnp.concatenate([l['wq'] * scale, l['wk'], l['wv']], axis=1)  # (H, 3H)
            lw.append(jnp.concatenate([wqkv, l['wo'], l['w1']], axis=1))         # (H, WCOLS)
            l2.append(l['w2'])                                                   # (I, H)
            bqkv = jnp.concatenate([l['bq'] * scale, l['bk'], l['bv']])          # (3H,)
            rows += [pad_row(bqkv), pad_row(l['bo']),
                     pad_row(l['ln1_g']), pad_row(l['ln1_b']),
                     pad_row(l['b1']), pad_row(l['b2']),
                     pad_row(l['ln2_g']), pad_row(l['ln2_b'])]
        wmats.append(jnp.stack(lw))
        w2s.append(jnp.stack(l2))
        vec_slabs.append(jnp.stack(rows))
        word_e.append(p['word_emb']); pos_e.append(p['pos_emb']); type_e.append(p['type_emb'])

    return {
        'word_emb': jnp.stack(word_e),     # (2, V, H)
        'pos_emb': jnp.stack(pos_e),       # (2, S, H)
        'type_emb': jnp.stack(type_e),     # (2, T, H)
        'wmat': jnp.stack(wmats),          # (2, L, H, WCOLS)
        'w2': jnp.stack(w2s),              # (2, L, I, H)
        'vec': jnp.stack(vec_slabs),       # (2, NVEC_ROWS, 128)
    }


# ---------------- forward (glue in JAX, compute in 1 Pallas call) ----------------
def _embed(packed, e, ids):
    # embedding lookup (gather) stays in plain JAX; token_type_ids == 0
    B, S = ids.shape
    return (packed['word_emb'][e][ids]
            + packed['pos_emb'][e][None, :S, :]
            + packed['type_emb'][e][0][None, None, :])


def concept_property_forward(packed,
                             concept_input_id, concept_attention_mask,
                             property_input_id, property_attention_mask):
    B, S = concept_input_id.shape
    H = HIDDEN

    emb_c = _embed(packed, 0, concept_input_id).reshape(B * S, H)
    emb_p = _embed(packed, 1, property_input_id).reshape(B * S, H)
    emb_stacked = jnp.stack([emb_c, emb_p])                            # (2, B*S, H)

    masks = jnp.stack([concept_attention_mask,
                       property_attention_mask]).astype(jnp.float32)   # (2, B, S)

    pooled = pallas_encode_and_pool(packed, emb_stacked, masks)        # (2, B, H)
    v_concept_avg = pooled[0]                                          # already L2-normalized
    v_property_avg = pooled[1]
    # trivial 64-FLOP logits dot kept as a JAX op (cheaper than another kernel launch)
    logits = jnp.sum(v_concept_avg * v_property_avg, axis=-1, keepdims=True)
    return v_concept_avg, v_property_avg, logits


concept_property_forward_jit = jax.jit(concept_property_forward)


# ---------------- demo ----------------
if __name__ == "__main__":
    key = jax.random.PRNGKey(0)
    k1, k2, k3, k4 = jax.random.split(key, 4)

    concept_params = init_bert_params(k1)       # two *separate* encoders
    property_params = init_bert_params(k2)
    packed = pack_params([concept_params, property_params])

    concept_input_id = jax.random.randint(k3, (BATCH, SEQ), 0, VOCAB, dtype=jnp.int32)
    property_input_id = jax.random.randint(k4, (BATCH, SEQ), 0, VOCAB, dtype=jnp.int32)

    pos = jnp.arange(SEQ)[None, :]
    concept_attention_mask = (pos < jnp.array([[5], [8]])).astype(jnp.int32)
    property_attention_mask = (pos < jnp.array([[3], [6]])).astype(jnp.int32)

    v_concept_avg, v_property_avg, logits = concept_property_forward_jit(
        packed,
        concept_input_id, concept_attention_mask,
        property_input_id, property_attention_mask)

    jax.block_until_ready((v_concept_avg, v_property_avg, logits))
    assert v_concept_avg.shape == (BATCH, HIDDEN)
    assert v_property_avg.shape == (BATCH, HIDDEN)
    assert logits.shape == (BATCH, 1)
    print("KERNEL_OK")
</pallas_src>

<mosaic_0001>
module attributes {stable_mosaic.version = 11 : i64} {
  func.func @_encoder_pool_kernel(%arg0: i32, %arg1: memref<1x16x32xf32, #tpu.memory_space<vmem>>, %arg2: memref<1x2x8xf32, #tpu.memory_space<vmem>>, %arg3: memref<1x2x32x192xf32, #tpu.memory_space<vmem>>, %arg4: memref<1x2x64x32xf32, #tpu.memory_space<vmem>>, %arg5: memref<1x18x128xf32, #tpu.memory_space<vmem>>, %arg6: memref<1x2x32xf32, #tpu.memory_space<vmem>>) attributes {dimension_semantics = [#tpu.dimension_semantics<parallel>], iteration_bounds = array<i64: 2>, scalar_prefetch = 0 : i64, scratch_operands = 0 : i64, tpu.core_type = #tpu.core_type<tc>, window_params = [{transform_indices = @transform_0, window_bounds = array<i64: 1, 16, 32>}, {transform_indices = @transform_1, window_bounds = array<i64: 1, 2, 8>}, {transform_indices = @transform_2, window_bounds = array<i64: 1, 2, 32, 192>}, {transform_indices = @transform_3, window_bounds = array<i64: 1, 2, 64, 32>}, {transform_indices = @transform_4, window_bounds = array<i64: 1, 18, 128>}, {transform_indices = @transform_5, window_bounds = array<i64: 1, 2, 32>}]} {
    %c0 = arith.constant 0 : index
    %c0_0 = arith.constant 0 : index
    %c0_1 = arith.constant 0 : index
    %0 = vector.load %arg2[%c0, %c0_0, %c0_1] : memref<1x2x8xf32, #tpu.memory_space<vmem>>, vector<1x2x8xf32>
    %1 = vector.shape_cast %0 : vector<1x2x8xf32> to vector<2x8xf32>
    %c0_2 = arith.constant 0 : index
    %c0_3 = arith.constant 0 : index
    %c0_4 = arith.constant 0 : index
    %2 = vector.load %arg5[%c0_2, %c0_3, %c0_4] : memref<1x18x128xf32, #tpu.memory_space<vmem>>, vector<1x18x128xf32>
    %3 = vector.shape_cast %2 : vector<1x18x128xf32> to vector<18x128xf32>
    %c0_5 = arith.constant 0 : index
    %c0_6 = arith.constant 0 : index
    %c0_7 = arith.constant 0 : index
    %4 = vector.load %arg1[%c0_5, %c0_6, %c0_7] : memref<1x16x32xf32, #tpu.memory_space<vmem>>, vector<1x16x32xf32>
    %5 = vector.shape_cast %4 : vector<1x16x32xf32> to vector<16x32xf32>
    %6 = vector.extract_strided_slice %3 {offsets = [0, 0], sizes = [1, 32], strides = [1, 1]} : vector<18x128xf32> to vector<1x32xf32>
    %7 = vector.extract_strided_slice %3 {offsets = [1, 0], sizes = [1, 32], strides = [1, 1]} : vector<18x128xf32> to vector<1x32xf32>
    %cst = arith.constant dense<0.000000e+00> : vector<16xf32>
    %8 = vector.multi_reduction <add>, %5, %cst [1] : vector<16x32xf32> to vector<16xf32>
    %9 = vector.shape_cast %8 : vector<16xf32> to vector<16x1xf32>
    %cst_8 = arith.constant 3.200000e+01 : f32
    %10 = vector.broadcast %cst_8 : f32 to vector<16x1xf32>
    %11 = arith.divf %9, %10 : vector<16x1xf32>
    %12 = vector.broadcast %11 : vector<16x1xf32> to vector<16x32xf32>
    %13 = arith.subf %5, %12 : vector<16x32xf32>
    %14 = arith.mulf %13, %13 : vector<16x32xf32>
    %cst_9 = arith.constant dense<0.000000e+00> : vector<16xf32>
    %15 = vector.multi_reduction <add>, %14, %cst_9 [1] : vector<16x32xf32> to vector<16xf32>
    %16 = vector.shape_cast %15 : vector<16xf32> to vector<16x1xf32>
    %cst_10 = arith.constant 3.200000e+01 : f32
    %17 = vector.broadcast %cst_10 : f32 to vector<16x1xf32>
    %18 = arith.divf %16, %17 : vector<16x1xf32>
    %19 = vector.broadcast %11 : vector<16x1xf32> to vector<16x32xf32>
    %20 = arith.subf %5, %19 : vector<16x32xf32>
    %cst_11 = arith.constant 9.99999996E-13 : f32
    %21 = vector.broadcast %cst_11 : f32 to vector<16x1xf32>
    %22 = arith.addf %18, %21 : vector<16x1xf32>
    %23 = math.rsqrt %22 : vector<16x1xf32>
    %24 = vector.broadcast %23 : vector<16x1xf32> to vector<16x32xf32>
    %25 = arith.mulf %20, %24 : vector<16x32xf32>
    %26 = vector.broadcast %6 : vector<1x32xf32> to vector<16x32xf32>
    %27 = arith.mulf %25, %26 : vector<16x32xf32>
    %28 = vector.broadcast %7 : vector<1x32xf32> to vector<16x32xf32>
    %29 = arith.addf %27, %28 : vector<16x32xf32>
    %cst_12 = arith.constant 1.000000e+00 : f32
    %30 = vector.broadcast %cst_12 : f32 to vector<2x8xf32>
    %31 = arith.subf %30, %1 : vector<2x8xf32>
    %cst_13 = arith.constant -1.000000e+04 : f32
    %32 = vector.broadcast %cst_13 : f32 to vector<2x8xf32>
    %33 = arith.mulf %31, %32 : vector<2x8xf32>
    %34 = vector.shape_cast %33 : vector<2x8xf32> to vector<2x1x8xf32>
    %35 = tpu.concatenate %34, %34 in 0 : vector<2x1x8xf32>, vector<2x1x8xf32> -> vector<4x1x8xf32>
    %c0_14 = arith.constant 0 : index
    %c0_15 = arith.constant 0 : index
    %c0_16 = arith.constant 0 : index
    %c0_17 = arith.constant 0 : index
    %36 = vector.load %arg3[%c0_14, %c0_15, %c0_16, %c0_17] : memref<1x2x32x192xf32, #tpu.memory_space<vmem>>, vector<1x1x32x192xf32>
    %37 = vector.shape_cast %36 : vector<1x1x32x192xf32> to vector<32x192xf32>
    %38 = vector.extract_strided_slice %37 {offsets = [0, 0], sizes = [32, 96], strides = [1, 1]} : vector<32x192xf32> to vector<32x96xf32>
    %39 = vector.extract_strided_slice %37 {offsets = [0, 96], sizes = [32, 32], strides = [1, 1]} : vector<32x192xf32> to vector<32x32xf32>
    %40 = vector.extract_strided_slice %37 {offsets = [0, 128], sizes = [32, 64], strides = [1, 1]} : vector<32x192xf32> to vector<32x64xf32>
    %c0_18 = arith.constant 0 : index
    %c0_19 = arith.constant 0 : index
    %c0_20 = arith.constant 0 : index
    %c0_21 = arith.constant 0 : index
    %41 = vector.load %arg4[%c0_18, %c0_19, %c0_20, %c0_21] : memref<1x2x64x32xf32, #tpu.memory_space<vmem>>, vector<1x1x64x32xf32>
    %42 = vector.shape_cast %41 : vector<1x1x64x32xf32> to vector<64x32xf32>
    %43 = vector.extract_strided_slice %3 {offsets = [2, 0], sizes = [1, 96], strides = [1, 1]} : vector<18x128xf32> to vector<1x96xf32>
    %44 = vector.extract_strided_slice %3 {offsets = [3, 0], sizes = [1, 32], strides = [1, 1]} : vector<18x128xf32> to vector<1x32xf32>
    %45 = vector.extract_strided_slice %3 {offsets = [4, 0], sizes = [1, 32], strides = [1, 1]} : vector<18x128xf32> to vector<1x32xf32>
    %46 = vector.extract_strided_slice %3 {offsets = [5, 0], sizes = [1, 32], strides = [1, 1]} : vector<18x128xf32> to vector<1x32xf32>
    %47 = vector.extract_strided_slice %3 {offsets = [6, 0], sizes = [1, 64], strides = [1, 1]} : vector<18x128xf32> to vector<1x64xf32>
    %48 = vector.extract_strided_slice %3 {offsets = [7, 0], sizes = [1, 32], strides = [1, 1]} : vector<18x128xf32> to vector<1x32xf32>
    %49 = vector.extract_strided_slice %3 {offsets = [8, 0], sizes = [1, 32], strides = [1, 1]} : vector<18x128xf32> to vector<1x32xf32>
    %50 = vector.extract_strided_slice %3 {offsets = [9, 0], sizes = [1, 32], strides = [1, 1]} : vector<18x128xf32> to vector<1x32xf32>
    %cst_22 = arith.constant dense<0.000000e+00> : vector<16x96xf32>
    %51 = tpu.matmul %29, %38, %cst_22 {dimension_numbers = #tpu.dot_dimension_numbers<[1], [0], [0], [1], [0, 0, 1, 1], [], []>} : vector<16x32xf32>, vector<32x96xf32>, vector<16x96xf32> -> vector<16x96xf32>
    %52 = vector.broadcast %43 : vector<1x96xf32> to vector<16x96xf32>
    %53 = arith.addf %51, %52 : vector<16x96xf32>
    %54 = vector.extract_strided_slice %53 {offsets = [0, 0], sizes = [16, 16], strides = [1, 1]} : vector<16x96xf32> to vector<16x16xf32>
    %55 = vector.shape_cast %54 : vector<16x16xf32> to vector<2x8x16xf32>
    %56 = vector.extract_strided_slice %53 {offsets = [0, 16], sizes = [16, 16], strides = [1, 1]} : vector<16x96xf32> to vector<16x16xf32>
    %57 = vector.shape_cast %56 : vector<16x16xf32> to vector<2x8x16xf32>
    %58 = tpu.concatenate %55, %57 in 0 : vector<2x8x16xf32>, vector<2x8x16xf32> -> vector<4x8x16xf32>
    %59 = vector.extract_strided_slice %53 {offsets = [0, 32], sizes = [16, 16], strides = [1, 1]} : vector<16x96xf32> to vector<16x16xf32>
    %60 = vector.shape_cast %59 : vector<16x16xf32> to vector<2x8x16xf32>
    %61 = vector.extract_strided_slice %53 {offsets = [0, 48], sizes = [16, 16], strides = [1, 1]} : vector<16x96xf32> to vector<16x16xf32>
    %62 = vector.shape_cast %61 : vector<16x16xf32> to vector<2x8x16xf32>
    %63 = tpu.concatenate %60, %62 in 0 : vector<2x8x16xf32>, vector<2x8x16xf32> -> vector<4x8x16xf32>
    %64 = vector.extract_strided_slice %53 {offsets = [0, 64], sizes = [16, 16], strides = [1, 1]} : vector<16x96xf32> to vector<16x16xf32>
    %65 = vector.shape_cast %64 : vector<16x16xf32> to vector<2x8x16xf32>
    %66 = vector.extract_strided_slice %53 {offsets = [0, 80], sizes = [16, 16], strides = [1, 1]} : vector<16x96xf32> to vector<16x16xf32>
    %67 = vector.shape_cast %66 : vector<16x16xf32> to vector<2x8x16xf32>
    %68 = tpu.concatenate %65, %67 in 0 : vector<2x8x16xf32>, vector<2x8x16xf32> -> vector<4x8x16xf32>
    "tpu.trace_start"() <{level = 10 : i32, message = "bqd,bkd->bqk"}> : () -> ()
    %cst_23 = arith.constant dense<0.000000e+00> : vector<4x8x8xf32>
    %69 = tpu.matmul %58, %63, %cst_23 {dimension_numbers = #tpu.dot_dimension_numbers<[2], [2], [1], [1], [0, 0, 0, 1, 1, 1], [0], [0]>} : vector<4x8x16xf32>, vector<4x8x16xf32>, vector<4x8x8xf32> -> vector<4x8x8xf32>
    "tpu.trace_stop"() : () -> ()
    %70 = vector.broadcast %35 : vector<4x1x8xf32> to vector<4x8x8xf32>
    %71 = arith.addf %69, %70 : vector<4x8x8xf32>
    %cst_24 = arith.constant dense<0xFF800000> : vector<4x8xf32>
    %72 = vector.multi_reduction <maximumf>, %71, %cst_24 [2] : vector<4x8x8xf32> to vector<4x8xf32>
    %73 = vector.shape_cast %72 : vector<4x8xf32> to vector<4x8x1xf32>
    %74 = vector.broadcast %73 : vector<4x8x1xf32> to vector<4x8x8xf32>
    %75 = arith.subf %71, %74 : vector<4x8x8xf32>
    %76 = math.exp %75 : vector<4x8x8xf32>
    %cst_25 = arith.constant dense<0.000000e+00> : vector<4x8xf32>
    %77 = vector.multi_reduction <add>, %76, %cst_25 [2] : vector<4x8x8xf32> to vector<4x8xf32>
    %78 = vector.shape_cast %77 : vector<4x8xf32> to vector<4x8x1xf32>
    %79 = vector.broadcast %78 : vector<4x8x1xf32> to vector<4x8x8xf32>
    %80 = arith.divf %76, %79 : vector<4x8x8xf32>
    "tpu.trace_start"() <{level = 10 : i32, message = "bqk,bkd->bqd"}> : () -> ()
    %cst_26 = arith.constant dense<0.000000e+00> : vector<4x8x16xf32>
    %81 = tpu.matmul %80, %68, %cst_26 {dimension_numbers = #tpu.dot_dimension_numbers<[2], [1], [1], [2], [0, 0, 0, 1, 1, 2], [0], [0]>} : vector<4x8x8xf32>, vector<4x8x16xf32>, vector<4x8x16xf32> -> vector<4x8x16xf32>
    "tpu.trace_stop"() : () -> ()
    %82 = vector.extract_strided_slice %81 {offsets = [0, 0, 0], sizes = [2, 8, 16], strides = [1, 1, 1]} : vector<4x8x16xf32> to vector<2x8x16xf32>
    %83 = vector.shape_cast %82 : vector<2x8x16xf32> to vector<16x16xf32>
    %84 = vector.extract_strided_slice %81 {offsets = [2, 0, 0], sizes = [2, 8, 16], strides = [1, 1, 1]} : vector<4x8x16xf32> to vector<2x8x16xf32>
    %85 = vector.shape_cast %84 : vector<2x8x16xf32> to vector<16x16xf32>
    %86 = tpu.concatenate %83, %85 in 1 : vector<16x16xf32>, vector<16x16xf32> -> vector<16x32xf32>
    %cst_27 = arith.constant dense<0.000000e+00> : vector<16x32xf32>
    %87 = tpu.matmul %86, %39, %cst_27 {dimension_numbers = #tpu.dot_dimension_numbers<[1], [0], [0], [1], [0, 0, 1, 1], [], []>} : vector<16x32xf32>, vector<32x32xf32>, vector<16x32xf32> -> vector<16x32xf32>
    %88 = vector.broadcast %44 : vector<1x32xf32> to vector<16x32xf32>
    %89 = arith.addf %87, %88 : vector<16x32xf32>
    %90 = arith.addf %89, %29 : vector<16x32xf32>
    %cst_28 = arith.constant dense<0.000000e+00> : vector<16xf32>
    %91 = vector.multi_reduction <add>, %90, %cst_28 [1] : vector<16x32xf32> to vector<16xf32>
    %92 = vector.shape_cast %91 : vector<16xf32> to vector<16x1xf32>
    %cst_29 = arith.constant 3.200000e+01 : f32
    %93 = vector.broadcast %cst_29 : f32 to vector<16x1xf32>
    %94 = arith.divf %92, %93 : vector<16x1xf32>
    %95 = vector.broadcast %94 : vector<16x1xf32> to vector<16x32xf32>
    %96 = arith.subf %90, %95 : vector<16x32xf32>
    %97 = arith.mulf %96, %96 : vector<16x32xf32>
    %cst_30 = arith.constant dense<0.000000e+00> : vector<16xf32>
    %98 = vector.multi_reduction <add>, %97, %cst_30 [1] : vector<16x32xf32> to vector<16xf32>
    %99 = vector.shape_cast %98 : vector<16xf32> to vector<16x1xf32>
    %cst_31 = arith.constant 3.200000e+01 : f32
    %100 = vector.broadcast %cst_31 : f32 to vector<16x1xf32>
    %101 = arith.divf %99, %100 : vector<16x1xf32>
    %102 = vector.broadcast %94 : vector<16x1xf32> to vector<16x32xf32>
    %103 = arith.subf %90, %102 : vector<16x32xf32>
    %cst_32 = arith.constant 9.99999996E-13 : f32
    %104 = vector.broadcast %cst_32 : f32 to vector<16x1xf32>
    %105 = arith.addf %101, %104 : vector<16x1xf32>
    %106 = math.rsqrt %105 : vector<16x1xf32>
    %107 = vector.broadcast %106 : vector<16x1xf32> to vector<16x32xf32>
    %108 = arith.mulf %103, %107 : vector<16x32xf32>
    %109 = vector.broadcast %45 : vector<1x32xf32> to vector<16x32xf32>
    %110 = arith.mulf %108, %109 : vector<16x32xf32>
    %111 = vector.broadcast %46 : vector<1x32xf32> to vector<16x32xf32>
    %112 = arith.addf %110, %111 : vector<16x32xf32>
    %cst_33 = arith.constant dense<0.000000e+00> : vector<16x64xf32>
    %113 = tpu.matmul %112, %40, %cst_33 {dimension_numbers = #tpu.dot_dimension_numbers<[1], [0], [0], [1], [0, 0, 1, 1], [], []>} : vector<16x32xf32>, vector<32x64xf32>, vector<16x64xf32> -> vector<16x64xf32>
    %114 = vector.broadcast %47 : vector<1x64xf32> to vector<16x64xf32>
    %115 = arith.addf %113, %114 : vector<16x64xf32>
    %cst_34 = arith.constant 5.000000e-01 : f32
    %116 = vector.broadcast %cst_34 : f32 to vector<16x64xf32>
    %117 = arith.mulf %116, %115 : vector<16x64xf32>
    %cst_35 = arith.constant 0.707106769 : f32
    %118 = vector.broadcast %cst_35 : f32 to vector<16x64xf32>
    %119 = arith.mulf %115, %118 : vector<16x64xf32>
    %120 = math.absf %119 : vector<16x64xf32>
    %cst_36 = arith.constant 0.327591091 : f32
    %121 = vector.broadcast %cst_36 : f32 to vector<16x64xf32>
    %122 = arith.mulf %121, %120 : vector<16x64xf32>
    %cst_37 = arith.constant 1.000000e+00 : f32
    %123 = vector.broadcast %cst_37 : f32 to vector<16x64xf32>
    %124 = arith.addf %123, %122 : vector<16x64xf32>
    %cst_38 = arith.constant 1.000000e+00 : f32
    %125 = vector.broadcast %cst_38 : f32 to vector<16x64xf32>
    %126 = arith.divf %125, %124 : vector<16x64xf32>
    %cst_39 = arith.constant 1.06140542 : f32
    %127 = vector.broadcast %cst_39 : f32 to vector<16x64xf32>
    %128 = arith.mulf %127, %126 : vector<16x64xf32>
    %cst_40 = arith.constant -1.45315206 : f32
    %129 = vector.broadcast %cst_40 : f32 to vector<16x64xf32>
    %130 = arith.addf %128, %129 : vector<16x64xf32>
    %131 = arith.mulf %130, %126 : vector<16x64xf32>
    %cst_41 = arith.constant 1.42141378 : f32
    %132 = vector.broadcast %cst_41 : f32 to vector<16x64xf32>
    %133 = arith.addf %131, %132 : vector<16x64xf32>
    %134 = arith.mulf %133, %126 : vector<16x64xf32>
    %cst_42 = arith.constant -0.284496725 : f32
    %135 = vector.broadcast %cst_42 : f32 to vector<16x64xf32>
    %136 = arith.addf %134, %135 : vector<16x64xf32>
    %137 = arith.mulf %136, %126 : vector<16x64xf32>
    %cst_43 = arith.constant 0.254829586 : f32
    %138 = vector.broadcast %cst_43 : f32 to vector<16x64xf32>
    %139 = arith.addf %137, %138 : vector<16x64xf32>
    %140 = arith.mulf %139, %126 : vector<16x64xf32>
    %cst_44 = arith.constant 0.000000e+00 : f32
    %141 = vector.broadcast %cst_44 : f32 to vector<16x64xf32>
    %142 = arith.subf %141, %120 : vector<16x64xf32>
    %143 = arith.mulf %142, %120 : vector<16x64xf32>
    %144 = math.exp %143 : vector<16x64xf32>
    %145 = arith.mulf %140, %144 : vector<16x64xf32>
    %cst_45 = arith.constant 1.000000e+00 : f32
    %146 = vector.broadcast %cst_45 : f32 to vector<16x64xf32>
    %147 = arith.subf %146, %145 : vector<16x64xf32>
    %cst_46 = arith.constant 0.000000e+00 : f32
    %148 = vector.broadcast %cst_46 : f32 to vector<16x64xf32>
    %149 = arith.cmpf oge, %119, %148 : vector<16x64xf32>
    %cst_47 = arith.constant 0.000000e+00 : f32
    %150 = vector.broadcast %cst_47 : f32 to vector<16x64xf32>
    %151 = arith.subf %150, %147 : vector<16x64xf32>
    %152 = arith.select %149, %147, %151 : vector<16x64xi1>, vector<16x64xf32>
    %cst_48 = arith.constant 1.000000e+00 : f32
    %153 = vector.broadcast %cst_48 : f32 to vector<16x64xf32>
    %154 = arith.addf %153, %152 : vector<16x64xf32>
    %155 = arith.mulf %117, %154 : vector<16x64xf32>
    %cst_49 = arith.constant dense<0.000000e+00> : vector<16x32xf32>
    %156 = tpu.matmul %155, %42, %cst_49 {dimension_numbers = #tpu.dot_dimension_numbers<[1], [0], [0], [1], [0, 0, 1, 1], [], []>} : vector<16x64xf32>, vector<64x32xf32>, vector<16x32xf32> -> vector<16x32xf32>
    %157 = vector.broadcast %48 : vector<1x32xf32> to vector<16x32xf32>
    %158 = arith.addf %156, %157 : vector<16x32xf32>
    %159 = arith.addf %158, %112 : vector<16x32xf32>
    %cst_50 = arith.constant dense<0.000000e+00> : vector<16xf32>
    %160 = vector.multi_reduction <add>, %159, %cst_50 [1] : vector<16x32xf32> to vector<16xf32>
    %161 = vector.shape_cast %160 : vector<16xf32> to vector<16x1xf32>
    %cst_51 = arith.constant 3.200000e+01 : f32
    %162 = vector.broadcast %cst_51 : f32 to vector<16x1xf32>
    %163 = arith.divf %161, %162 : vector<16x1xf32>
    %164 = vector.broadcast %163 : vector<16x1xf32> to vector<16x32xf32>
    %165 = arith.subf %159, %164 : vector<16x32xf32>
    %166 = arith.mulf %165, %165 : vector<16x32xf32>
    %cst_52 = arith.constant dense<0.000000e+00> : vector<16xf32>
    %167 = vector.multi_reduction <add>, %166, %cst_52 [1] : vector<16x32xf32> to vector<16xf32>
    %168 = vector.shape_cast %167 : vector<16xf32> to vector<16x1xf32>
    %cst_53 = arith.constant 3.200000e+01 : f32
    %169 = vector.broadcast %cst_53 : f32 to vector<16x1xf32>
    %170 = arith.divf %168, %169 : vector<16x1xf32>
    %171 = vector.broadcast %163 : vector<16x1xf32> to vector<16x32xf32>
    %172 = arith.subf %159, %171 : vector<16x32xf32>
    %cst_54 = arith.constant 9.99999996E-13 : f32
    %173 = vector.broadcast %cst_54 : f32 to vector<16x1xf32>
    %174 = arith.addf %170, %173 : vector<16x1xf32>
    %175 = math.rsqrt %174 : vector<16x1xf32>
    %176 = vector.broadcast %175 : vector<16x1xf32> to vector<16x32xf32>
    %177 = arith.mulf %172, %176 : vector<16x32xf32>
    %178 = vector.broadcast %49 : vector<1x32xf32> to vector<16x32xf32>
    %179 = arith.mulf %177, %178 : vector<16x32xf32>
    %180 = vector.broadcast %50 : vector<1x32xf32> to vector<16x32xf32>
    %181 = arith.addf %179, %180 : vector<16x32xf32>
    %c0_55 = arith.constant 0 : index
    %c1 = arith.constant 1 : index
    %c0_56 = arith.constant 0 : index
    %c0_57 = arith.constant 0 : index
    %182 = vector.load %arg3[%c0_55, %c1, %c0_56, %c0_57] : memref<1x2x32x192xf32, #tpu.memory_space<vmem>>, vector<1x1x32x192xf32>
    %183 = vector.shape_cast %182 : vector<1x1x32x192xf32> to vector<32x192xf32>
    %184 = vector.extract_strided_slice %183 {offsets = [0, 0], sizes = [32, 96], strides = [1, 1]} : vector<32x192xf32> to vector<32x96xf32>
    %185 = vector.extract_strided_slice %183 {offsets = [0, 96], sizes = [32, 32], strides = [1, 1]} : vector<32x192xf32> to vector<32x32xf32>
    %186 = vector.extract_strided_slice %183 {offsets = [0, 128], sizes = [32, 64], strides = [1, 1]} : vector<32x192xf32> to vector<32x64xf32>
    %c0_58 = arith.constant 0 : index
    %c1_59 = arith.constant 1 : index
    %c0_60 = arith.constant 0 : index
    %c0_61 = arith.constant 0 : index
    %187 = vector.load %arg4[%c0_58, %c1_59, %c0_60, %c0_61] : memref<1x2x64x32xf32, #tpu.memory_space<vmem>>, vector<1x1x64x32xf32>
    %188 = vector.shape_cast %187 : vector<1x1x64x32xf32> to vector<64x32xf32>
    %189 = vector.extract_strided_slice %3 {offsets = [10, 0], sizes = [1, 96], strides = [1, 1]} : vector<18x128xf32> to vector<1x96xf32>
    %190 = vector.extract_strided_slice %3 {offsets = [11, 0], sizes = [1, 32], strides = [1, 1]} : vector<18x128xf32> to vector<1x32xf32>
    %191 = vector.extract_strided_slice %3 {offsets = [12, 0], sizes = [1, 32], strides = [1, 1]} : vector<18x128xf32> to vector<1x32xf32>
    %192 = vector.extract_strided_slice %3 {offsets = [13, 0], sizes = [1, 32], strides = [1, 1]} : vector<18x128xf32> to vector<1x32xf32>
    %193 = vector.extract_strided_slice %3 {offsets = [14, 0], sizes = [1, 64], strides = [1, 1]} : vector<18x128xf32> to vector<1x64xf32>
    %194 = vector.extract_strided_slice %3 {offsets = [15, 0], sizes = [1, 32], strides = [1, 1]} : vector<18x128xf32> to vector<1x32xf32>
    %195 = vector.extract_strided_slice %3 {offsets = [16, 0], sizes = [1, 32], strides = [1, 1]} : vector<18x128xf32> to vector<1x32xf32>
    %196 = vector.extract_strided_slice %3 {offsets = [17, 0], sizes = [1, 32], strides = [1, 1]} : vector<18x128xf32> to vector<1x32xf32>
    %cst_62 = arith.constant dense<0.000000e+00> : vector<16x96xf32>
    %197 = tpu.matmul %181, %184, %cst_62 {dimension_numbers = #tpu.dot_dimension_numbers<[1], [0], [0], [1], [0, 0, 1, 1], [], []>} : vector<16x32xf32>, vector<32x96xf32>, vector<16x96xf32> -> vector<16x96xf32>
    %198 = vector.broadcast %189 : vector<1x96xf32> to vector<16x96xf32>
    %199 = arith.addf %197, %198 : vector<16x96xf32>
    %200 = vector.extract_strided_slice %199 {offsets = [0, 0], sizes = [16, 16], strides = [1, 1]} : vector<16x96xf32> to vector<16x16xf32>
    %201 = vector.shape_cast %200 : vector<16x16xf32> to vector<2x8x16xf32>
    %202 = vector.extract_strided_slice %199 {offsets = [0, 16], sizes = [16, 16], strides = [1, 1]} : vector<16x96xf32> to vector<16x16xf32>
    %203 = vector.shape_cast %202 : vector<16x16xf32> to vector<2x8x16xf32>
    %204 = tpu.concatenate %201, %203 in 0 : vector<2x8x16xf32>, vector<2x8x16xf32> -> vector<4x8x16xf32>
    %205 = vector.extract_strided_slice %199 {offsets = [0, 32], sizes = [16, 16], strides = [1, 1]} : vector<16x96xf32> to vector<16x16xf32>
    %206 = vector.shape_cast %205 : vector<16x16xf32> to vector<2x8x16xf32>
    %207 = vector.extract_strided_slice %199 {offsets = [0, 48], sizes = [16, 16], strides = [1, 1]} : vector<16x96xf32> to vector<16x16xf32>
    %208 = vector.shape_cast %207 : vector<16x16xf32> to vector<2x8x16xf32>
    %209 = tpu.concatenate %206, %208 in 0 : vector<2x8x16xf32>, vector<2x8x16xf32> -> vector<4x8x16xf32>
    %210 = vector.extract_strided_slice %199 {offsets = [0, 64], sizes = [16, 16], strides = [1, 1]} : vector<16x96xf32> to vector<16x16xf32>
    %211 = vector.shape_cast %210 : vector<16x16xf32> to vector<2x8x16xf32>
    %212 = vector.extract_strided_slice %199 {offsets = [0, 80], sizes = [16, 16], strides = [1, 1]} : vector<16x96xf32> to vector<16x16xf32>
    %213 = vector.shape_cast %212 : vector<16x16xf32> to vector<2x8x16xf32>
    %214 = tpu.concatenate %211, %213 in 0 : vector<2x8x16xf32>, vector<2x8x16xf32> -> vector<4x8x16xf32>
    "tpu.trace_start"() <{level = 10 : i32, message = "bqd,bkd->bqk"}> : () -> ()
    %cst_63 = arith.constant dense<0.000000e+00> : vector<4x8x8xf32>
    %215 = tpu.matmul %204, %209, %cst_63 {dimension_numbers = #tpu.dot_dimension_numbers<[2], [2], [1], [1], [0, 0, 0, 1, 1, 1], [0], [0]>} : vector<4x8x16xf32>, vector<4x8x16xf32>, vector<4x8x8xf32> -> vector<4x8x8xf32>
    "tpu.trace_stop"() : () -> ()
    %216 = vector.broadcast %35 : vector<4x1x8xf32> to vector<4x8x8xf32>
    %217 = arith.addf %215, %216 : vector<4x8x8xf32>
    %cst_64 = arith.constant dense<0xFF800000> : vector<4x8xf32>
    %218 = vector.multi_reduction <maximumf>, %217, %cst_64 [2] : vector<4x8x8xf32> to vector<4x8xf32>
    %219 = vector.shape_cast %218 : vector<4x8xf32> to vector<4x8x1xf32>
    %220 = vector.broadcast %219 : vector<4x8x1xf32> to vector<4x8x8xf32>
    %221 = arith.subf %217, %220 : vector<4x8x8xf32>
    %222 = math.exp %221 : vector<4x8x8xf32>
    %cst_65 = arith.constant dense<0.000000e+00> : vector<4x8xf32>
    %223 = vector.multi_reduction <add>, %222, %cst_65 [2] : vector<4x8x8xf32> to vector<4x8xf32>
    %224 = vector.shape_cast %223 : vector<4x8xf32> to vector<4x8x1xf32>
    %225 = vector.broadcast %224 : vector<4x8x1xf32> to vector<4x8x8xf32>
    %226 = arith.divf %222, %225 : vector<4x8x8xf32>
    "tpu.trace_start"() <{level = 10 : i32, message = "bqk,bkd->bqd"}> : () -> ()
    %cst_66 = arith.constant dense<0.000000e+00> : vector<4x8x16xf32>
    %227 = tpu.matmul %226, %214, %cst_66 {dimension_numbers = #tpu.dot_dimension_numbers<[2], [1], [1], [2], [0, 0, 0, 1, 1, 2], [0], [0]>} : vector<4x8x8xf32>, vector<4x8x16xf32>, vector<4x8x16xf32> -> vector<4x8x16xf32>
    "tpu.trace_stop"() : () -> ()
    %228 = vector.extract_strided_slice %227 {offsets = [0, 0, 0], sizes = [2, 8, 16], strides = [1, 1, 1]} : vector<4x8x16xf32> to vector<2x8x16xf32>
    %229 = vector.shape_cast %228 : vector<2x8x16xf32> to vector<16x16xf32>
    %230 = vector.extract_strided_slice %227 {offsets = [2, 0, 0], sizes = [2, 8, 16], strides = [1, 1, 1]} : vector<4x8x16xf32> to vector<2x8x16xf32>
    %231 = vector.shape_cast %230 : vector<2x8x16xf32> to vector<16x16xf32>
    %232 = tpu.concatenate %229, %231 in 1 : vector<16x16xf32>, vector<16x16xf32> -> vector<16x32xf32>
    %cst_67 = arith.constant dense<0.000000e+00> : vector<16x32xf32>
    %233 = tpu.matmul %232, %185, %cst_67 {dimension_numbers = #tpu.dot_dimension_numbers<[1], [0], [0], [1], [0, 0, 1, 1], [], []>} : vector<16x32xf32>, vector<32x32xf32>, vector<16x32xf32> -> vector<16x32xf32>
    %234 = vector.broadcast %190 : vector<1x32xf32> to vector<16x32xf32>
    %235 = arith.addf %233, %234 : vector<16x32xf32>
    %236 = arith.addf %235, %181 : vector<16x32xf32>
    %cst_68 = arith.constant dense<0.000000e+00> : vector<16xf32>
    %237 = vector.multi_reduction <add>, %236, %cst_68 [1] : vector<16x32xf32> to vector<16xf32>
    %238 = vector.shape_cast %237 : vector<16xf32> to vector<16x1xf32>
    %cst_69 = arith.constant 3.200000e+01 : f32
    %239 = vector.broadcast %cst_69 : f32 to vector<16x1xf32>
    %240 = arith.divf %238, %239 : vector<16x1xf32>
    %241 = vector.broadcast %240 : vector<16x1xf32> to vector<16x32xf32>
    %242 = arith.subf %236, %241 : vector<16x32xf32>
    %243 = arith.mulf %242, %242 : vector<16x32xf32>
    %cst_70 = arith.constant dense<0.000000e+00> : vector<16xf32>
    %244 = vector.multi_reduction <add>, %243, %cst_70 [1] : vector<16x32xf32> to vector<16xf32>
    %245 = vector.shape_cast %244 : vector<16xf32> to vector<16x1xf32>
    %cst_71 = arith.constant 3.200000e+01 : f32
    %246 = vector.broadcast %cst_71 : f32 to vector<16x1xf32>
    %247 = arith.divf %245, %246 : vector<16x1xf32>
    %248 = vector.broadcast %240 : vector<16x1xf32> to vector<16x32xf32>
    %249 = arith.subf %236, %248 : vector<16x32xf32>
    %cst_72 = arith.constant 9.99999996E-13 : f32
    %250 = vector.broadcast %cst_72 : f32 to vector<16x1xf32>
    %251 = arith.addf %247, %250 : vector<16x1xf32>
    %252 = math.rsqrt %251 : vector<16x1xf32>
    %253 = vector.broadcast %252 : vector<16x1xf32> to vector<16x32xf32>
    %254 = arith.mulf %249, %253 : vector<16x32xf32>
    %255 = vector.broadcast %191 : vector<1x32xf32> to vector<16x32xf32>
    %256 = arith.mulf %254, %255 : vector<16x32xf32>
    %257 = vector.broadcast %192 : vector<1x32xf32> to vector<16x32xf32>
    %258 = arith.addf %256, %257 : vector<16x32xf32>
    %cst_73 = arith.constant dense<0.000000e+00> : vector<16x64xf32>
    %259 = tpu.matmul %258, %186, %cst_73 {dimension_numbers = #tpu.dot_dimension_numbers<[1], [0], [0], [1], [0, 0, 1, 1], [], []>} : vector<16x32xf32>, vector<32x64xf32>, vector<16x64xf32> -> vector<16x64xf32>
    %260 = vector.broadcast %193 : vector<1x64xf32> to vector<16x64xf32>
    %261 = arith.addf %259, %260 : vector<16x64xf32>
    %cst_74 = arith.constant 5.000000e-01 : f32
    %262 = vector.broadcast %cst_74 : f32 to vector<16x64xf32>
    %263 = arith.mulf %262, %261 : vector<16x64xf32>
    %cst_75 = arith.constant 0.707106769 : f32
    %264 = vector.broadcast %cst_75 : f32 to vector<16x64xf32>
    %265 = arith.mulf %261, %264 : vector<16x64xf32>
    %266 = math.absf %265 : vector<16x64xf32>
    %cst_76 = arith.constant 0.327591091 : f32
    %267 = vector.broadcast %cst_76 : f32 to vector<16x64xf32>
    %268 = arith.mulf %267, %266 : vector<16x64xf32>
    %cst_77 = arith.constant 1.000000e+00 : f32
    %269 = vector.broadcast %cst_77 : f32 to vector<16x64xf32>
    %270 = arith.addf %269, %268 : vector<16x64xf32>
    %cst_78 = arith.constant 1.000000e+00 : f32
    %271 = vector.broadcast %cst_78 : f32 to vector<16x64xf32>
    %272 = arith.divf %271, %270 : vector<16x64xf32>
    %cst_79 = arith.constant 1.06140542 : f32
    %273 = vector.broadcast %cst_79 : f32 to vector<16x64xf32>
    %274 = arith.mulf %273, %272 : vector<16x64xf32>
    %cst_80 = arith.constant -1.45315206 : f32
    %275 = vector.broadcast %cst_80 : f32 to vector<16x64xf32>
    %276 = arith.addf %274, %275 : vector<16x64xf32>
    %277 = arith.mulf %276, %272 : vector<16x64xf32>
    %cst_81 = arith.constant 1.42141378 : f32
    %278 = vector.broadcast %cst_81 : f32 to vector<16x64xf32>
    %279 = arith.addf %277, %278 : vector<16x64xf32>
    %280 = arith.mulf %279, %272 : vector<16x64xf32>
    %cst_82 = arith.constant -0.284496725 : f32
    %281 = vector.broadcast %cst_82 : f32 to vector<16x64xf32>
    %282 = arith.addf %280, %281 : vector<16x64xf32>
    %283 = arith.mulf %282, %272 : vector<16x64xf32>
    %cst_83 = arith.constant 0.254829586 : f32
    %284 = vector.broadcast %cst_83 : f32 to vector<16x64xf32>
    %285 = arith.addf %283, %284 : vector<16x64xf32>
    %286 = arith.mulf %285, %272 : vector<16x64xf32>
    %cst_84 = arith.constant 0.000000e+00 : f32
    %287 = vector.broadcast %cst_84 : f32 to vector<16x64xf32>
    %288 = arith.subf %287, %266 : vector<16x64xf32>
    %289 = arith.mulf %288, %266 : vector<16x64xf32>
    %290 = math.exp %289 : vector<16x64xf32>
    %291 = arith.mulf %286, %290 : vector<16x64xf32>
    %cst_85 = arith.constant 1.000000e+00 : f32
    %292 = vector.broadcast %cst_85 : f32 to vector<16x64xf32>
    %293 = arith.subf %292, %291 : vector<16x64xf32>
    %cst_86 = arith.constant 0.000000e+00 : f32
    %294 = vector.broadcast %cst_86 : f32 to vector<16x64xf32>
    %295 = arith.cmpf oge, %265, %294 : vector<16x64xf32>
    %cst_87 = arith.constant 0.000000e+00 : f32
    %296 = vector.broadcast %cst_87 : f32 to vector<16x64xf32>
    %297 = arith.subf %296, %293 : vector<16x64xf32>
    %298 = arith.select %295, %293, %297 : vector<16x64xi1>, vector<16x64xf32>
    %cst_88 = arith.constant 1.000000e+00 : f32
    %299 = vector.broadcast %cst_88 : f32 to vector<16x64xf32>
    %300 = arith.addf %299, %298 : vector<16x64xf32>
    %301 = arith.mulf %263, %300 : vector<16x64xf32>
    %cst_89 = arith.constant dense<0.000000e+00> : vector<16x32xf32>
    %302 = tpu.matmul %301, %188, %cst_89 {dimension_numbers = #tpu.dot_dimension_numbers<[1], [0], [0], [1], [0, 0, 1, 1], [], []>} : vector<16x64xf32>, vector<64x32xf32>, vector<16x32xf32> -> vector<16x32xf32>
    %303 = vector.broadcast %194 : vector<1x32xf32> to vector<16x32xf32>
    %304 = arith.addf %302, %303 : vector<16x32xf32>
    %305 = arith.addf %304, %258 : vector<16x32xf32>
    %cst_90 = arith.constant dense<0.000000e+00> : vector<16xf32>
    %306 = vector.multi_reduction <add>, %305, %cst_90 [1] : vector<16x32xf32> to vector<16xf32>
    %307 = vector.shape_cast %306 : vector<16xf32> to vector<16x1xf32>
    %cst_91 = arith.constant 3.200000e+01 : f32
    %308 = vector.broadcast %cst_91 : f32 to vector<16x1xf32>
    %309 = arith.divf %307, %308 : vector<16x1xf32>
    %310 = vector.broadcast %309 : vector<16x1xf32> to vector<16x32xf32>
    %311 = arith.subf %305, %310 : vector<16x32xf32>
    %312 = arith.mulf %311, %311 : vector<16x32xf32>
    %cst_92 = arith.constant dense<0.000000e+00> : vector<16xf32>
    %313 = vector.multi_reduction <add>, %312, %cst_92 [1] : vector<16x32xf32> to vector<16xf32>
    %314 = vector.shape_cast %313 : vector<16xf32> to vector<16x1xf32>
    %cst_93 = arith.constant 3.200000e+01 : f32
    %315 = vector.broadcast %cst_93 : f32 to vector<16x1xf32>
    %316 = arith.divf %314, %315 : vector<16x1xf32>
    %317 = vector.broadcast %309 : vector<16x1xf32> to vector<16x32xf32>
    %318 = arith.subf %305, %317 : vector<16x32xf32>
    %cst_94 = arith.constant 9.99999996E-13 : f32
    %319 = vector.broadcast %cst_94 : f32 to vector<16x1xf32>
    %320 = arith.addf %316, %319 : vector<16x1xf32>
    %321 = math.rsqrt %320 : vector<16x1xf32>
    %322 = vector.broadcast %321 : vector<16x1xf32> to vector<16x32xf32>
    %323 = arith.mulf %318, %322 : vector<16x32xf32>
    %324 = vector.broadcast %195 : vector<1x32xf32> to vector<16x32xf32>
    %325 = arith.mulf %323, %324 : vector<16x32xf32>
    %326 = vector.broadcast %196 : vector<1x32xf32> to vector<16x32xf32>
    %327 = arith.addf %325, %326 : vector<16x32xf32>
    %328 = vector.shape_cast %327 : vector<16x32xf32> to vector<2x8x32xf32>
    %cst_95 = arith.constant dense<0.000000e+00> : vector<2xf32>
    %329 = vector.multi_reduction <add>, %1, %cst_95 [1] : vector<2x8xf32> to vector<2xf32>
    %330 = vector.shape_cast %329 : vector<2xf32> to vector<2x1xf32>
    %331 = vector.shape_cast %1 : vector<2x8xf32> to vector<2x8x1xf32>
    %332 = vector.broadcast %331 : vector<2x8x1xf32> to vector<2x8x32xf32>
    %333 = arith.mulf %328, %332 : vector<2x8x32xf32>
    %cst_96 = arith.constant dense<0.000000e+00> : vector<2x32xf32>
    %334 = vector.multi_reduction <add>, %333, %cst_96 [1] : vector<2x8x32xf32> to vector<2x32xf32>
    %335 = vector.broadcast %330 : vector<2x1xf32> to vector<2x32xf32>
    %336 = arith.divf %334, %335 : vector<2x32xf32>
    %337 = arith.mulf %336, %336 : vector<2x32xf32>
    %cst_97 = arith.constant dense<0.000000e+00> : vector<2xf32>
    %338 = vector.multi_reduction <add>, %337, %cst_97 [1] : vector<2x32xf32> to vector<2xf32>
    %339 = vector.shape_cast %338 : vector<2xf32> to vector<2x1xf32>
    %340 = math.sqrt %339 : vector<2x1xf32>
    %cst_98 = arith.constant 9.99999996E-13 : f32
    %341 = vector.broadcast %cst_98 : f32 to vector<2x1xf32>
    %342 = arith.maximumf %340, %341 : vector<2x1xf32>
    %c0_i32 = arith.constant 0 : i32
    %343 = arith.cmpi eq, %arg0, %c0_i32 : i32
    %344 = arith.extui %343 : i1 to i32
    %345 = arith.sitofp %344 : i32 to f32
    %346 = vector.broadcast %342 : vector<2x1xf32> to vector<2x32xf32>
    %347 = arith.divf %336, %346 : vector<2x32xf32>
    %348 = vector.broadcast %345 : f32 to vector<2x32xf32>
    %349 = arith.mulf %348, %347 : vector<2x32xf32>
    %cst_99 = arith.constant 1.000000e+00 : f32
    %350 = arith.subf %cst_99, %345 : f32
    %351 = vector.broadcast %350 : f32 to vector<2x32xf32>
    %352 = arith.mulf %351, %336 : vector<2x32xf32>
    %353 = arith.addf %349, %352 : vector<2x32xf32>
    %c0_100 = arith.constant 0 : index
    %c0_101 = arith.constant 0 : index
    %c0_102 = arith.constant 0 : index
    %354 = vector.load %arg6[%c0_100, %c0_101, %c0_102] : memref<1x2x32xf32, #tpu.memory_space<vmem>>, vector<1x2x32xf32>
    %355 = vector.shape_cast %354 : vector<1x2x32xf32> to vector<2x32xf32>
    %356 = vector.shape_cast %353 : vector<2x32xf32> to vector<1x2x32xf32>
    tpu.vector_store %arg6[%c0_100, %c0_101, %c0_102], %356 {strides = array<i32>} : memref<1x2x32xf32, #tpu.memory_space<vmem>>, vector<1x2x32xf32>,
    return
  }
  func.func @transform_0(%arg0: i32) -> (i32, i32, i32) {
    %c0_i32 = arith.constant 0 : i32
    %c0_i32_0 = arith.constant 0 : i32
    %c0_i32_1 = arith.constant 0 : i32
    return %arg0, %c0_i32, %c0_i32_0 : i32, i32, i32
  }
  func.func @transform_1(%arg0: i32) -> (i32, i32, i32) {
    %c0_i32 = arith.constant 0 : i32
    %c0_i32_0 = arith.constant 0 : i32
    %c0_i32_1 = arith.constant 0 : i32
    return %arg0, %c0_i32, %c0_i32_0 : i32, i32, i32
  }
  func.func @transform_2(%arg0: i32) -> (i32, i32, i32, i32) {
    %c0_i32 = arith.constant 0 : i32
    %c0_i32_0 = arith.constant 0 : i32
    %c0_i32_1 = arith.constant 0 : i32
    %c0_i32_2 = arith.constant 0 : i32
    return %arg0, %c0_i32, %c0_i32_0, %c0_i32_1 : i32, i32, i32, i32
  }
  func.func @transform_3(%arg0: i32) -> (i32, i32, i32, i32) {
    %c0_i32 = arith.constant 0 : i32
    %c0_i32_0 = arith.constant 0 : i32
    %c0_i32_1 = arith.constant 0 : i32
    %c0_i32_2 = arith.constant 0 : i32
    return %arg0, %c0_i32, %c0_i32_0, %c0_i32_1 : i32, i32, i32, i32
  }
  func.func @transform_4(%arg0: i32) -> (i32, i32, i32) {
    %c0_i32 = arith.constant 0 : i32
    %c0_i32_0 = arith.constant 0 : i32
    %c0_i32_1 = arith.constant 0 : i32
    return %arg0, %c0_i32, %c0_i32_0 : i32, i32, i32
  }
  func.func @transform_5(%arg0: i32) -> (i32, i32, i32) {
    %c0_i32 = arith.constant 0 : i32
    %c0_i32_0 = arith.constant 0 : i32
    %c0_i32_1 = arith.constant 0 : i32
    return %arg0, %c0_i32, %c0_i32_0 : i32, i32, i32
  }
}

</mosaic_0001>

<llo_original>
// kernel: concept_property_forward.1
$region0: #{concept_property_forward.1}
  #allocation0 [shape = 'u32[]', space=smem, size = 0x4, offset = 0x4, fixed_abs, tag = 'smem constant byte address 0x4 - core index']
  #allocation1 [shape = 'u32[144,128]{1,0:T(1,128)}', space=vmem, size = 0x12000, scoped, tag = 'internal scratch']
  %s0 = inlined_call_operand.vmem [shape: f32[2,16,32], index: 0, kind: input, shape index: {}]
  %s1 = inlined_call_operand.vmem [shape: f32[2,2,8], index: 1, kind: input, shape index: {}]
  %s2 = inlined_call_operand.vmem [shape: f32[2,2,32,192], index: 2, kind: input, shape index: {}]
  %s3 = inlined_call_operand.vmem [shape: f32[2,2,64,32], index: 3, kind: input, shape index: {}]
  %s4 = inlined_call_operand.vmem [shape: f32[2,18,128], index: 4, kind: input, shape index: {}]
  %s5 = inlined_call_operand.vmem [shape: f32[2,2,32], index: 5, kind: output, shape index: {}]
  %s6 = sld [smem:[#allocation0]]
  $region53: #{concept_property_forward.1} parent=0
    _
  %s8 = ssub.s32 1, %s6
  %s9 = scalar_select 0, %s8, %s6
  loop: start=0, step=1, limit=4
  $region2: #{concept_property_forward.1} parent=0 // loop_pre_header
    _
  $region3: #{concept_property_forward.1} parent=0 // loop_header
    %s11 = sphi 0, %s15
    %p12 = scmp.ge.s32.totalorder %s11, 4
    %s21 = sphi 0, %s23
    %s24 = sphi 0, %s21
    %s25 = sphi 0, %s24
    %s41 = sphi 0, %s25
    %s47 = sphi 0, %s49
    %s50 = sphi 0, %s47
    %s51 = sphi 0, %s50
    %s67 = sphi 0, %s51
    %s73 = sphi 0, %s75
    %s76 = sphi 0, %s73
    %s77 = sphi 0, %s76
    %s93 = sphi 0, %s77
    %s99 = sphi 0, %s101
    %s102 = sphi 0, %s99
    %s103 = sphi 0, %s102
    %s119 = sphi 0, %s103
    %s125 = sphi 0, %s127
    %s128 = sphi 0, %s125
    %s129 = sphi 0, %s128
    %s145 = sphi 0, %s129
    %s151 = sphi 0, %s153
    %s154 = sphi 0, %s151
    %s155 = sphi 0, %s154
    %s171 = sphi 0, %s155
  $region4: #{concept_property_forward.1} parent=0 // loop_header_branch
    %14 = sbr.rel (%p12) target = $region8
  $region5: #{concept_property_forward.1} parent=0 // loop_body
    %s16 = ssub.s32 %s11, 1
    %s17 = ssub.s32 %s11, 2
    %s18 = sadd.s32 %s11, 1
    %s19 = ssub.s32 %s11, %s18
    %p20 = scmp.eq.s32.totalorder %s19, 0
    %s22 = sadd.s32 %s21, 1
    %s23 = scalar_select %p20, %s21, %s22
    %p26 = pneg %p20
    %p27 = scmp.eq.s32.totalorder %s11, 1
    %p28 = por %p26, %p27
    %p29 = scmp.ne.s32.totalorder %s21, %s24
    %p30 = scmp.eq.s32.totalorder %s11, 0
    %p31 = por %p29, %p30
    %p32 = scmp.ne.s32.totalorder %s21, %s24
    %p33 = scmp.eq.s32.totalorder %s16, 1
    %p34 = por %p32, %p33
    %p35 = scmp.ne.s32.totalorder %s24, %s25
    %p36 = scmp.eq.s32.totalorder %s16, 0
    %p37 = por %p35, %p36
    %p38 = scmp.ne.s32.totalorder %s24, %s25
    %p39 = scmp.eq.s32.totalorder %s17, 1
    %p40 = por %p38, %p39
    %p42 = scmp.ne.s32.totalorder %s25, %s41
    %p43 = scmp.eq.s32.totalorder %s17, 0
    %p44 = por %p42, %p43
    %s45 = ssub.s32 %s11, %s18
    %p46 = scmp.eq.s32.totalorder %s45, 0
    %s48 = sadd.s32 %s47, 1
    %s49 = scalar_select %p46, %s47, %s48
    %p52 = pneg %p46
    %p53 = scmp.eq.s32.totalorder %s11, 1
    %p54 = por %p52, %p53
    %p55 = scmp.ne.s32.totalorder %s47, %s50
    %p56 = scmp.eq.s32.totalorder %s11, 0
    %p57 = por %p55, %p56
    %p58 = scmp.ne.s32.totalorder %s47, %s50
    %p59 = scmp.eq.s32.totalorder %s16, 1
    %p60 = por %p58, %p59
    %p61 = scmp.ne.s32.totalorder %s50, %s51
    %p62 = scmp.eq.s32.totalorder %s16, 0
    %p63 = por %p61, %p62
    %p64 = scmp.ne.s32.totalorder %s50, %s51
    %p65 = scmp.eq.s32.totalorder %s17, 1
    %p66 = por %p64, %p65
    %p68 = scmp.ne.s32.totalorder %s51, %s67
    %p69 = scmp.eq.s32.totalorder %s17, 0
    %p70 = por %p68, %p69
    %s71 = ssub.s32 %s11, %s18
    %p72 = scmp.eq.s32.totalorder %s71, 0
    %s74 = sadd.s32 %s73, 1
    %s75 = scalar_select %p72, %s73, %s74
    %p78 = pneg %p72
    %p79 = scmp.eq.s32.totalorder %s11, 1
    %p80 = por %p78, %p79
    %p81 = scmp.ne.s32.totalorder %s73, %s76
    %p82 = scmp.eq.s32.totalorder %s11, 0
    %p83 = por %p81, %p82
    %p84 = scmp.ne.s32.totalorder %s73, %s76
    %p85 = scmp.eq.s32.totalorder %s16, 1
    %p86 = por %p84, %p85
    %p87 = scmp.ne.s32.totalorder %s76, %s77
    %p88 = scmp.eq.s32.totalorder %s16, 0
    %p89 = por %p87, %p88
    %p90 = scmp.ne.s32.totalorder %s76, %s77
    %p91 = scmp.eq.s32.totalorder %s17, 1
    %p92 = por %p90, %p91
    %p94 = scmp.ne.s32.totalorder %s77, %s93
    %p95 = scmp.eq.s32.totalorder %s17, 0
    %p96 = por %p94, %p95
    %s97 = ssub.s32 %s11, %s18
    %p98 = scmp.eq.s32.totalorder %s97, 0
    %s100 = sadd.s32 %s99, 1
    %s101 = scalar_select %p98, %s99, %s100
    %p104 = pneg %p98
    %p105 = scmp.eq.s32.totalorder %s11, 1
    %p106 = por %p104, %p105
    %p107 = scmp.ne.s32.totalorder %s99, %s102
    %p108 = scmp.eq.s32.totalorder %s11, 0
    %p109 = por %p107, %p108
    %p110 = scmp.ne.s32.totalorder %s99, %s102
    %p111 = scmp.eq.s32.totalorder %s16, 1
    %p112 = por %p110, %p111
    %p113 = scmp.ne.s32.totalorder %s102, %s103
    %p114 = scmp.eq.s32.totalorder %s16, 0
    %p115 = por %p113, %p114
    %p116 = scmp.ne.s32.totalorder %s102, %s103
    %p117 = scmp.eq.s32.totalorder %s17, 1
    %p118 = por %p116, %p117
    %p120 = scmp.ne.s32.totalorder %s103, %s119
    %p121 = scmp.eq.s32.totalorder %s17, 0
    %p122 = por %p120, %p121
    %s123 = ssub.s32 %s11, %s18
    %p124 = scmp.eq.s32.totalorder %s123, 0
    %s126 = sadd.s32 %s125, 1
    %s127 = scalar_select %p124, %s125, %s126
    %p130 = pneg %p124
    %p131 = scmp.eq.s32.totalorder %s11, 1
    %p132 = por %p130, %p131
    %p133 = scmp.ne.s32.totalorder %s125, %s128
    %p134 = scmp.eq.s32.totalorder %s11, 0
    %p135 = por %p133, %p134
    %p136 = scmp.ne.s32.totalorder %s125, %s128
    %p137 = scmp.eq.s32.totalorder %s16, 1
    %p138 = por %p136, %p137
    %p139 = scmp.ne.s32.totalorder %s128, %s129
    %p140 = scmp.eq.s32.totalorder %s16, 0
    %p141 = por %p139, %p140
    %p142 = scmp.ne.s32.totalorder %s128, %s129
    %p143 = scmp.eq.s32.totalorder %s17, 1
    %p144 = por %p142, %p143
    %p146 = scmp.ne.s32.totalorder %s129, %s145
    %p147 = scmp.eq.s32.totalorder %s17, 0
    %p148 = por %p146, %p147
    %s149 = ssub.s32 %s11, %s18
    %p150 = scmp.eq.s32.totalorder %s149, 0
    %s152 = sadd.s32 %s151, 1
    %s153 = scalar_select %p150, %s151, %s152
    %p156 = pneg %p150
    %p157 = scmp.eq.s32.totalorder %s11, 1
    %p158 = por %p156, %p157
    %p159 = scmp.ne.s32.totalorder %s151, %s154
    %p160 = scmp.eq.s32.totalorder %s11, 0
    %p161 = por %p159, %p160
    %p162 = scmp.ne.s32.totalorder %s151, %s154
    %p163 = scmp.eq.s32.totalorder %s16, 1
    %p164 = por %p162, %p163
    %p165 = scmp.ne.s32.totalorder %s154, %s155
    %p166 = scmp.eq.s32.totalorder %s16, 0
    %p167 = por %p165, %p166
    %p168 = scmp.ne.s32.totalorder %s154, %s155
    %p169 = scmp.eq.s32.totalorder %s17, 1
    %p170 = por %p168, %p169
    %p172 = scmp.ne.s32.totalorder %s155, %s171
    %p173 = scmp.eq.s32.totalorder %s17, 0
    %p174 = por %p172, %p173
    %p175 = scmp.le.s32.totalorder 1, %s11
    %p176 = scmp.lt.s32.totalorder %s11, 3
    %p177 = pnand %p175, %p176
    %p178 = pneg %p177
    // Predicated region
    $region9: #{concept_property_forward.1} parent=5 // pred_check
      _
    $region10: #{concept_property_forward.1} parent=5 // pred_check_branch
      %180 = sbr.rel (%p177) target = $region12
    $region11: #{concept_property_forward.1} parent=5 // pred_region
      %s181 = ssub.s32 %s11, 1
    $region12: #{concept_property_forward.1} parent=5 // pred_fallthru
      _
    %p182 = scmp.lt.s32.totalorder %s11, 2
    // Predicated region
    $region13: #{concept_property_forward.1} parent=5 // pred_check
      %p183 = pneg %p182
    $region14: #{concept_property_forward.1} parent=5 // pred_check_branch
      %185 = sbr.rel (%p183) target = $region16
    $region15: #{concept_property_forward.1} parent=5 // pred_region
      // Predicated region
      $region17: #{concept_property_forward.1} parent=15 // pred_check
        %p186 = pneg %p31
      $region18: #{concept_property_forward.1} parent=15 // pred_check_branch
        %188 = sbr.rel (%p186) target = $region20
      $region19: #{concept_property_forward.1} parent=15 // pred_region
        %p189 = scmp.lt.s32.totalorder %s11, 1
        %s190 = scalar_select %p189, %s11, 1
        %s191 = smul.addr %s190, 2
        %s192 = smul.addr %s191, 8
        %s193 = scalar_lea.vmem %s0, %s192
      $region20: #{concept_property_forward.1} parent=15 // pred_fallthru
        _
      // Predicated region
      $region21: #{concept_property_forward.1} parent=15 // pred_check
        %p194 = pneg %p57
      $region22: #{concept_property_forward.1} parent=15 // pred_check_branch
        %196 = sbr.rel (%p194) target = $region24
      $region23: #{concept_property_forward.1} parent=15 // pred_region
        %p197 = scmp.lt.s32.totalorder %s11, 1
        %s198 = scalar_select %p197, %s11, 1
        %s199 = smul.addr %s198, 2
        %s200 = scalar_lea.vmem %s1, %s199
      $region24: #{concept_property_forward.1} parent=15 // pred_fallthru
        _
      // Predicated region
      $region25: #{concept_property_forward.1} parent=15 // pred_check
        %p201 = pneg %p83
      $region26: #{concept_property_forward.1} parent=15 // pred_check_branch
        %203 = sbr.rel (%p201) target = $region28
      $region27: #{concept_property_forward.1} parent=15 // pred_region
        %p204 = scmp.lt.s32.totalorder %s11, 1
        %s205 = scalar_select %p204, %s11, 1
        %s206 = smul.addr %s205, 16
        %s207 = smul.addr %s206, 8
        %s208 = scalar_lea.vmem %s2, %s207
      $region28: #{concept_property_forward.1} parent=15 // pred_fallthru
        _
      // Predicated region
      $region29: #{concept_property_forward.1} parent=15 // pred_check
        %p209 = pneg %p109
      $region30: #{concept_property_forward.1} parent=15 // pred_check_branch
        %211 = sbr.rel (%p209) target = $region32
      $region31: #{concept_property_forward.1} parent=15 // pred_region
        %p212 = scmp.lt.s32.totalorder %s11, 1
        %s213 = scalar_select %p212, %s11, 1
        %s214 = smul.addr %s213, 16
        %s215 = smul.addr %s214, 8
        %s216 = scalar_lea.vmem %s3, %s215
      $region32: #{concept_property_forward.1} parent=15 // pred_fallthru
        _
      // Predicated region
      $region33: #{concept_property_forward.1} parent=15 // pred_check
        %p217 = pneg %p135
      $region34: #{concept_property_forward.1} parent=15 // pred_check_branch
        %219 = sbr.rel (%p217) target = $region36
      $region35: #{concept_property_forward.1} parent=15 // pred_region
        %p220 = scmp.lt.s32.totalorder %s11, 1
        %s221 = scalar_select %p220, %s11, 1
        %s222 = smul.addr %s221, 3
        %s223 = smul.addr %s222, 8
        %s224 = scalar_lea.vmem %s4, %s223
      $region36: #{concept_property_forward.1} parent=15 // pred_fallthru
        _
    $region16: #{concept_property_forward.1} parent=5 // pred_fallthru
      _
    %p225 = scmp.le.s32.totalorder 1, %s11
    %p226 = scmp.lt.s32.totalorder %s11, 3
    %p227 = pnand %p225, %p226
    %p228 = pneg %p227
    // Predicated region
    $region37: #{concept_property_forward.1} parent=5 // pred_check
      _
    $region38: #{concept_property_forward.1} parent=5 // pred_check_branch
      %230 = sbr.rel (%p227) target = $region40
    $region39: #{concept_property_forward.1} parent=5 // pred_region
      %s231 = ssub.s32 %s11, 1
      %p232 = scmp.lt.s32.totalorder %s16, 1
      %s233 = scalar_select %p232, %s16, 1
      %s234 = smul.addr %s233, 2
      %s235 = smul.addr %s234, 8
      %s236 = scalar_lea.vmem %s0, %s235
      %p237 = pneg %p37
      %p238 = pneg %p34
      %p239 = scmp.lt.s32.totalorder %s16, 1
      %s240 = scalar_select %p239, %s16, 1
      %s241 = smul.addr %s240, 2
      %s242 = scalar_lea.vmem %s1, %s241
      %p243 = pneg %p63
      %p244 = pneg %p60
      %p245 = scmp.lt.s32.totalorder %s16, 1
      %s246 = scalar_select %p245, %s16, 1
      %s247 = smul.addr %s246, 16
      %s248 = smul.addr %s247, 8
      %s249 = scalar_lea.vmem %s2, %s248
      %p250 = pneg %p89
      %p251 = pneg %p86
      %p252 = scmp.lt.s32.totalorder %s16, 1
      %s253 = scalar_select %p252, %s16, 1
      %s254 = smul.addr %s253, 16
      %s255 = smul.addr %s254, 8
      %s256 = scalar_lea.vmem %s3, %s255
      %p257 = pneg %p115
      %p258 = pneg %p112
      %p259 = scmp.lt.s32.totalorder %s16, 1
      %s260 = scalar_select %p259, %s16, 1
      %s261 = smul.addr %s260, 3
      %s262 = smul.addr %s261, 8
      %s263 = scalar_lea.vmem %s4, %s262
      %p264 = pneg %p141
      %p265 = pneg %p138
      %p266 = pneg %p167
      %p267 = pneg %p164
      %p268 = scmp.lt.s32.totalorder %s16, 1
      %s269 = scalar_select %p268, %s16, 1
      %s270 = smul.addr %s269, 2
      %s271 = scalar_lea.vmem %s5, %s270
      %p272 = scmp.lt.s32.totalorder %s16, 1
      %s273 = scalar_select %p272, %s16, 1
      %s274 = smul.addr %s273, 2
      %s275 = smul.addr %s274, 8
      %s276 = scalar_lea.vmem %s0, %s275
      %p277 = scmp.lt.s32.totalorder %s16, 1
      %s278 = scalar_select %p277, %s16, 1
      %s279 = smul.addr %s278, 2
      %s280 = scalar_lea.vmem %s1, %s279
      %p281 = scmp.lt.s32.totalorder %s16, 1
      %s282 = scalar_select %p281, %s16, 1
      %s283 = smul.addr %s282, 16
      %s284 = smul.addr %s283, 8
      %s285 = scalar_lea.vmem %s2, %s284
      %p286 = scmp.lt.s32.totalorder %s16, 1
      %s287 = scalar_select %p286, %s16, 1
      %s288 = smul.addr %s287, 16
      %s289 = smul.addr %s288, 8
      %s290 = scalar_lea.vmem %s3, %s289
      %p291 = scmp.lt.s32.totalorder %s16, 1
      %s292 = scalar_select %p291, %s16, 1
      %s293 = smul.addr %s292, 3
      %s294 = smul.addr %s293, 8
      %s295 = scalar_lea.vmem %s4, %s294
      %p296 = scmp.lt.s32.totalorder %s16, 1
      %s297 = scalar_select %p296, %s16, 1
      %s298 = smul.addr %s297, 2
      %s299 = scalar_lea.vmem %s5, %s298
      %v300 = vld [vmem:[%s280] sm:$0x3]
      %v301 = vld [vmem:[%s295] sm:$0xff]
      %v302 = vld [vmem:[%s295 + $0x8] sm:$0xff]
      %v303 = vld [vmem:[%s295 + $0x10] sm:$0x3]
      %v304 = vld [vmem:[%s276] sm:$0xff]
      %v305 = vld [vmem:[%s276 + $0x8] sm:$0xff]
      %vm306 = vcmask 261120
      %v307 = vsel %vm306, %v304, 0.0
      %308 = vadd.xlane.f32.xlu0 %v307
      %v309 = vpop.xlane.xlu0 %308
      %v310 = vsel %vm306, %v305, 0.0
      %311 = vadd.xlane.f32.xlu0 %v310
      %v312 = vpop.xlane.xlu0 %311
      %v313 = vrcp.pop 32.0
      %v314 = vmul.f32 %v309, %v313
      %v315 = vmul.f32 %v312, %v313
      %v316 = vsub.f32 %v304, %v314
      %v317 = vsub.f32 %v305, %v315
      %v318 = vmul.f32 %v316, %v316
      %v319 = vmul.f32 %v317, %v317
      %v320 = vsel %vm306, %v318, 0.0
      %321 = vadd.xlane.f32.xlu0 %v320
      %v322 = vpop.xlane.xlu0 %321
      %v323 = vsel %vm306, %v319, 0.0
      %324 = vadd.xlane.f32.xlu0 %v323
      %v325 = vpop.xlane.xlu0 %324
      %v326 = vmul.f32 %v322, %v313
      %v327 = vmul.f32 %v325, %v313
      %v328 = vadd.f32 %v326, 1e-12
      %v329 = vadd.f32 %v327, 1e-12
      %v330 = vrsqrt.pop %v328
      %v331 = vrsqrt.pop %v329
      %v332 = vmul.f32 %v316, %v330
      %v333 = vmul.f32 %v317, %v331
      %v334 = vlaneseq
      %v335 = vshrl.u32 %v334, 7
      %v336 = vsub.s32 0, %v335
      %v337 = vrot.slane %v301, %v336
      %v338 = vmul.f32 %v332, %v337
      %v339 = vmul.f32 %v333, %v337
      %v340 = vlaneseq
      %v341 = vshrl.u32 %v340, 7
      %v342 = vsub.s32 1, %v341
      %v343 = vrot.slane %v301, %v342
      %v344 = vadd.f32 %v338, %v343
      %v345 = vadd.f32 %v339, %v343
      %v346 = vsub.f32 1.0, %v300
      %v347 = vmul.f32 %v346, -10000.0
      %v350 = vunpack.c.l.s4 1966171168
      %v351 = vunpack.c.0.s8 %v350
      %v352 = vlaneseq
      %v353 = vshrl.u32 %v352, 7
      %v354 = vsub.s32 %v351, %v353
      %v355 = vrot.slane %v347, %v354
      %v356 = vcombine.high %v355, %v355
      %v358 = vunpack.c.l.s4 1966171168
      %v359 = vunpack.c.0.s8 %v358
      %v360 = vlaneseq
      %v361 = vshrl.u32 %v360, 7
      %v362 = vsub.s32 %v359, %v361
      %v363 = vrot.slane %v355, %v362
      %v365 = vunpack.c.l.s4 1966171168
      %v366 = vunpack.c.0.s8 %v365
      %v367 = vlaneseq
      %v368 = vshrl.u32 %v367, 7
      %v369 = vsub.s32 %v366, %v368
      %v370 = vrot.slane %v356, %v369
      %v371 = vld [vmem:[%s285] sm:$0xff]
      %v372 = vld [vmem:[%s285 + $0x8] sm:$0xff]
      %v373 = vld [vmem:[%s285 + $0x10] sm:$0xff]
      %v374 = vld [vmem:[%s285 + $0x18] sm:$0xff]
      %v375 = vld [vmem:[%s285 + $0x20] sm:$0xff]
      %v376 = vld [vmem:[%s285 + $0x28] sm:$0xff]
      %v377 = vld [vmem:[%s285 + $0x30] sm:$0xff]
      %v378 = vld [vmem:[%s285 + $0x38] sm:$0xff]
      %v379 = vld [vmem:[%s290] sm:$0xff]
      %v380 = vld [vmem:[%s290 + $0x8] sm:$0xff]
      %v381 = vld [vmem:[%s290 + $0x10] sm:$0xff]
      %v382 = vld [vmem:[%s290 + $0x18] sm:$0xff]
      %v383 = vld [vmem:[%s290 + $0x20] sm:$0xff]
      %v384 = vld [vmem:[%s290 + $0x28] sm:$0xff]
      %v385 = vld [vmem:[%s290 + $0x30] sm:$0xff]
      %v386 = vld [vmem:[%s290 + $0x38] sm:$0xff]
      %v387 = vlaneseq
      %v388 = vshrl.u32 %v387, 7
      %v389 = vsub.s32 2, %v388
      %v390 = vrot.slane %v301, %v389
      %v392 = vsel %vm306, %v344, 0
      %v395 = vsel %vm306, %v345, 0
      %397 = vmatprep.subr.mxu0 0.0
      %398 = vmatpush1.msra.mxu0 %v371
      %399 = vmatprep.subr.mxu0 0.0
      %400 = vmatpush1.msra.mxu0 %v373
      %401 = vmatprep.subr.mxu0 0.0
      %402 = vmatpush1.msra.mxu0 %v375
      %403 = vmatprep.subr.mxu0 0.0
      %404 = vmatpush1.msra.mxu0 %v377
      %405 = vmatprep.subr.mxu0 0.0
      %406 = vmatpush1.msra.mxu0 0.0
      %407 = vmatprep.subr.mxu0 0.0
      %408 = vmatpush1.msra.mxu0 0.0
      %409 = vmatprep.subr.mxu0 0.0
      %410 = vmatpush1.msra.mxu0 0.0
      %411 = vmatprep.subr.mxu0 0.0
      %412 = vmatpush1.msra.mxu0 0.0
      %413 = vmatprep.subr.mxu0 0.0
      %414 = vmatpush1.msra.mxu0 0.0
      %415 = vmatprep.subr.mxu0 0.0
      %416 = vmatpush1.msra.mxu0 0.0
      %417 = vmatprep.subr.mxu0 0.0
      %418 = vmatpush1.msra.mxu0 0.0
      %419 = vmatprep.subr.mxu0 0.0
      %420 = vmatpush1.msra.mxu0 0.0
      %421 = vmatprep.subr.mxu0 0.0
      %422 = vmatpush1.msra.mxu0 0.0
      %423 = vmatprep.subr.mxu0 0.0
      %424 = vmatpush1.msra.mxu0 0.0
      %425 = vmatprep.subr.mxu0 0.0
      %426 = vmatpush1.msra.mxu0 0.0
      %427 = vmatprep.subr.mxu0 0.0
      %428 = vmatpush1.msra.mxu0 0.0
      %429 = vmatprep.subr.mxu0 0.0
      %430 = vmatpush1.msra.mxu0 0.0
      %431 = vmatprep.subr.mxu0 0.0
      %432 = vmatpush1.msra.mxu0 0.0
      %433 = vmatprep.subr.mxu0 0.0
      %434 = vmatpush1.msra.mxu0 0.0
      %435 = vmatprep.subr.mxu0 0.0
      %436 = vmatpush1.msra.mxu0 0.0
      %437 = vmatprep.subr.mxu0 0.0
      %438 = vmatpush1.msra.mxu0 0.0
      %439 = vmatprep.subr.mxu0 0.0
      %440 = vmatpush1.msra.mxu0 0.0
      %441 = vmatprep.subr.mxu0 0.0
      %442 = vmatpush1.msra.mxu0 0.0
      %443 = vmatprep.subr.mxu0 0.0
      %444 = vmatpush1.msra.mxu0 0.0
      %445 = vmatprep.subr.mxu0 0.0
      %446 = vmatpush1.msra.mxu0 0.0
      %447 = vmatprep.subr.mxu0 0.0
      %448 = vmatpush1.msra.mxu0 0.0
      %449 = vmatprep.subr.mxu0 0.0
      %450 = vmatpush1.msra.mxu0 0.0
      %451 = vmatprep.subr.mxu0 0.0
      %452 = vmatpush1.msra.mxu0 0.0
      %453 = vmatprep.subr.mxu0 0.0
      %454 = vmatpush1.msra.mxu0 0.0
      %455 = vmatprep.subr.mxu0 0.0
      %456 = vmatpush1.msra.mxu0 0.0
      %457 = vmatprep.subr.mxu0 0.0
      %458 = vmatpush1.msra.mxu0 0.0
      %459 = vmatprep.subr.mxu0 0.0
      %460 = vmatpush1.msra.mxu0 0.0
      %461 = vmatprep.mubr.f32.mxu0 0.0
      %462 = vmatmul.mubr.f32.gmra.mrb[0].mxu0 %v392
      %v463 = vpop.f32.mrb[0].mxu0
      %v464 = vadd.f32 %v390, %v463
      %v465 = vpop.f32.mrb[0].mxu0
      %466 = vmatprep.mubr.f32.mxu0 0.0
      %467 = vmatmul.mubr.f32.gmra.mrb[0].mxu0 %v395
      %v468 = vpop.f32.mrb[0].mxu0
      %v469 = vadd.f32 %v390, %v468
      %v470 = vpop.f32.mrb[0].mxu0
      %471 = vdwg.mxu0
      %474 = vrot.lane.b32.xlu0 %v464, 112
      %v475 = vpop.permute.xlu0 %474
      %476 = vrot.lane.b32.xlu0 %v469, 112
      %v477 = vpop.permute.xlu0 %476
      %v478 = vlaneseq
      %v479 = vshrl.u32 %v478, 7
      %v480 = vsub.s32 0, %v479
      %v481 = vrot.slane %v363, %v480
      %v482 = vlaneseq
      %v483 = vshrl.u32 %v482, 7
      %v484 = vsub.s32 0, %v483
      %v485 = vrot.slane %v370, %v484
      %488 = vrot.lane.b32.xlu0 %v464, 96
      %v489 = vpop.permute.xlu0 %488
      %vm490 = vcmask 130048
      %v491 = vsel %vm490, %v464, 0
      %v493 = vsel %vm490, %v489, 0
      %495 = vmatprep.subr.mxu0 0.0
      %496 = vmatpush1.xpose.msra.mxu0 %v493
      %497 = vmatprep.subr.mxu0 0.0
      %498 = vmatpush1.xpose.msra.mxu0 0.0
      %499 = vmatprep.subr.mxu0 0.0
      %500 = vmatpush1.xpose.msra.mxu0 0.0
      %501 = vmatprep.subr.mxu0 0.0
      %502 = vmatpush1.xpose.msra.mxu0 0.0
      %503 = vmatprep.subr.mxu0 0.0
      %504 = vmatpush1.xpose.msra.mxu0 0.0
      %505 = vmatprep.subr.mxu0 0.0
      %506 = vmatpush1.xpose.msra.mxu0 0.0
      %507 = vmatprep.subr.mxu0 0.0
      %508 = vmatpush1.xpose.msra.mxu0 0.0
      %509 = vmatprep.subr.mxu0 0.0
      %510 = vmatpush1.xpose.msra.mxu0 0.0
      %511 = vmatprep.subr.mxu0 0.0
      %512 = vmatpush1.xpose.msra.mxu0 0.0
      %513 = vmatprep.subr.mxu0 0.0
      %514 = vmatpush1.xpose.msra.mxu0 0.0
      %515 = vmatprep.subr.mxu0 0.0
      %516 = vmatpush1.xpose.msra.mxu0 0.0
      %517 = vmatprep.subr.mxu0 0.0
      %518 = vmatpush1.xpose.msra.mxu0 0.0
      %519 = vmatprep.subr.mxu0 0.0
      %520 = vmatpush1.xpose.msra.mxu0 0.0
      %521 = vmatprep.subr.mxu0 0.0
      %522 = vmatpush1.xpose.msra.mxu0 0.0
      %523 = vmatprep.subr.mxu0 0.0
      %524 = vmatpush1.xpose.msra.mxu0 0.0
      %525 = vmatprep.subr.mxu0 0.0
      %526 = vmatpush1.xpose.msra.mxu0 0.0
      %527 = vmatprep.subr.mxu0 0.0
      %528 = vmatpush1.xpose.msra.mxu0 0.0
      %529 = vmatprep.subr.mxu0 0.0
      %530 = vmatpush1.xpose.msra.mxu0 0.0
      %531 = vmatprep.subr.mxu0 0.0
      %532 = vmatpush1.xpose.msra.mxu0 0.0
      %533 = vmatprep.subr.mxu0 0.0
      %534 = vmatpush1.xpose.msra.mxu0 0.0
      %535 = vmatprep.subr.mxu0 0.0
      %536 = vmatpush1.xpose.msra.mxu0 0.0
      %537 = vmatprep.subr.mxu0 0.0
      %538 = vmatpush1.xpose.msra.mxu0 0.0
      %539 = vmatprep.subr.mxu0 0.0
      %540 = vmatpush1.xpose.msra.mxu0 0.0
      %541 = vmatprep.subr.mxu0 0.0
      %542 = vmatpush1.xpose.msra.mxu0 0.0
      %543 = vmatprep.subr.mxu0 0.0
      %544 = vmatpush1.xpose.msra.mxu0 0.0
      %545 = vmatprep.subr.mxu0 0.0
      %546 = vmatpush1.xpose.msra.mxu0 0.0
      %547 = vmatprep.subr.mxu0 0.0
      %548 = vmatpush1.xpose.msra.mxu0 0.0
      %549 = vmatprep.subr.mxu0 0.0
      %550 = vmatpush1.xpose.msra.mxu0 0.0
      %551 = vmatprep.subr.mxu0 0.0
      %552 = vmatpush1.xpose.msra.mxu0 0.0
      %553 = vmatprep.subr.mxu0 0.0
      %554 = vmatpush1.xpose.msra.mxu0 0.0
      %555 = vmatprep.subr.mxu0 0.0
      %556 = vmatpush1.xpose.msra.mxu0 0.0
      %557 = vmatprep.subr.mxu0 0.0
      %558 = vmatpush1.xpose.msra.mxu0 0.0
      %559 = vmatprep.mubr.f32.mxu0 0.0
      %560 = vmatmul.mubr.f32.gmra.mrb[0].mxu0 %v491
      %v561 = vpop.f32.mrb[0].mxu0
      %v562 = vadd.f32 %v481, %v561
      %v563 = vpop.f32.mrb[0].mxu0
      %564 = vdwg.mxu0
      %565 = vrot.lane.b32.xlu0 %v469, 96
      %v566 = vpop.permute.xlu0 %565
      %v567 = vsel %vm490, %v469, 0
      %v569 = vsel %vm490, %v566, 0
      %571 = vmatprep.subr.mxu0 0.0
      %572 = vmatpush1.xpose.msra.mxu0 %v569
      %573 = vmatprep.subr.mxu0 0.0
      %574 = vmatpush1.xpose.msra.mxu0 0.0
      %575 = vmatprep.subr.mxu0 0.0
      %576 = vmatpush1.xpose.msra.mxu0 0.0
      %577 = vmatprep.subr.mxu0 0.0
      %578 = vmatpush1.xpose.msra.mxu0 0.0
      %579 = vmatprep.subr.mxu0 0.0
      %580 = vmatpush1.xpose.msra.mxu0 0.0
      %581 = vmatprep.subr.mxu0 0.0
      %582 = vmatpush1.xpose.msra.mxu0 0.0
      %583 = vmatprep.subr.mxu0 0.0
      %584 = vmatpush1.xpose.msra.mxu0 0.0
      %585 = vmatprep.subr.mxu0 0.0
      %586 = vmatpush1.xpose.msra.mxu0 0.0
      %587 = vmatprep.subr.mxu0 0.0
      %588 = vmatpush1.xpose.msra.mxu0 0.0
      %589 = vmatprep.subr.mxu0 0.0
      %590 = vmatpush1.xpose.msra.mxu0 0.0
      %591 = vmatprep.subr.mxu0 0.0
      %592 = vmatpush1.xpose.msra.mxu0 0.0
      %593 = vmatprep.subr.mxu0 0.0
      %594 = vmatpush1.xpose.msra.mxu0 0.0
      %595 = vmatprep.subr.mxu0 0.0
      %596 = vmatpush1.xpose.msra.mxu0 0.0
      %597 = vmatprep.subr.mxu0 0.0
      %598 = vmatpush1.xpose.msra.mxu0 0.0
      %599 = vmatprep.subr.mxu0 0.0
      %600 = vmatpush1.xpose.msra.mxu0 0.0
      %601 = vmatprep.subr.mxu0 0.0
      %602 = vmatpush1.xpose.msra.mxu0 0.0
      %603 = vmatprep.subr.mxu0 0.0
      %604 = vmatpush1.xpose.msra.mxu0 0.0
      %605 = vmatprep.subr.mxu0 0.0
      %606 = vmatpush1.xpose.msra.mxu0 0.0
      %607 = vmatprep.subr.mxu0 0.0
      %608 = vmatpush1.xpose.msra.mxu0 0.0
      %609 = vmatprep.subr.mxu0 0.0
      %610 = vmatpush1.xpose.msra.mxu0 0.0
      %611 = vmatprep.subr.mxu0 0.0
      %612 = vmatpush1.xpose.msra.mxu0 0.0
      %613 = vmatprep.subr.mxu0 0.0
      %614 = vmatpush1.xpose.msra.mxu0 0.0
      %615 = vmatprep.subr.mxu0 0.0
      %616 = vmatpush1.xpose.msra.mxu0 0.0
      %617 = vmatprep.subr.mxu0 0.0
      %618 = vmatpush1.xpose.msra.mxu0 0.0
      %619 = vmatprep.subr.mxu0 0.0
      %620 = vmatpush1.xpose.msra.mxu0 0.0
      %621 = vmatprep.subr.mxu0 0.0
      %622 = vmatpush1.xpose.msra.mxu0 0.0
      %623 = vmatprep.subr.mxu0 0.0
      %624 = vmatpush1.xpose.msra.mxu0 0.0
      %625 = vmatprep.subr.mxu0 0.0
      %626 = vmatpush1.xpose.msra.mxu0 0.0
      %627 = vmatprep.subr.mxu0 0.0
      %628 = vmatpush1.xpose.msra.mxu0 0.0
      %629 = vmatprep.subr.mxu0 0.0
      %630 = vmatpush1.xpose.msra.mxu0 0.0
      %631 = vmatprep.subr.mxu0 0.0
      %632 = vmatpush1.xpose.msra.mxu0 0.0
      %633 = vmatprep.subr.mxu0 0.0
      %634 = vmatpush1.xpose.msra.mxu0 0.0
      %635 = vmatprep.mubr.f32.mxu0 0.0
      %636 = vmatmul.mubr.f32.gmra.mrb[0].mxu0 %v567
      %v637 = vpop.f32.mrb[0].mxu0
      %v638 = vadd.f32 %v485, %v637
      %v639 = vpop.f32.mrb[0].mxu0
      %640 = vdwg.mxu0
      %641 = vrot.lane.b32.xlu0 %v475, 96
      %v642 = vpop.permute.xlu0 %641
      %v643 = vsel %vm490, %v475, 0
      %v645 = vsel %vm490, %v642, 0
      %647 = vmatprep.subr.mxu0 0.0
      %648 = vmatpush1.xpose.msra.mxu0 %v645
      %649 = vmatprep.subr.mxu0 0.0
      %650 = vmatpush1.xpose.msra.mxu0 0.0
      %651 = vmatprep.subr.mxu0 0.0
      %652 = vmatpush1.xpose.msra.mxu0 0.0
      %653 = vmatprep.subr.mxu0 0.0
      %654 = vmatpush1.xpose.msra.mxu0 0.0
      %655 = vmatprep.subr.mxu0 0.0
      %656 = vmatpush1.xpose.msra.mxu0 0.0
      %657 = vmatprep.subr.mxu0 0.0
      %658 = vmatpush1.xpose.msra.mxu0 0.0
      %659 = vmatprep.subr.mxu0 0.0
      %660 = vmatpush1.xpose.msra.mxu0 0.0
      %661 = vmatprep.subr.mxu0 0.0
      %662 = vmatpush1.xpose.msra.mxu0 0.0
      %663 = vmatprep.subr.mxu0 0.0
      %664 = vmatpush1.xpose.msra.mxu0 0.0
      %665 = vmatprep.subr.mxu0 0.0
      %666 = vmatpush1.xpose.msra.mxu0 0.0
      %667 = vmatprep.subr.mxu0 0.0
      %668 = vmatpush1.xpose.msra.mxu0 0.0
      %669 = vmatprep.subr.mxu0 0.0
      %670 = vmatpush1.xpose.msra.mxu0 0.0
      %671 = vmatprep.subr.mxu0 0.0
      %672 = vmatpush1.xpose.msra.mxu0 0.0
      %673 = vmatprep.subr.mxu0 0.0
      %674 = vmatpush1.xpose.msra.mxu0 0.0
      %675 = vmatprep.subr.mxu0 0.0
      %676 = vmatpush1.xpose.msra.mxu0 0.0
      %677 = vmatprep.subr.mxu0 0.0
      %678 = vmatpush1.xpose.msra.mxu0 0.0
      %679 = vmatprep.subr.mxu0 0.0
      %680 = vmatpush1.xpose.msra.mxu0 0.0
      %681 = vmatprep.subr.mxu0 0.0
      %682 = vmatpush1.xpose.msra.mxu0 0.0
      %683 = vmatprep.subr.mxu0 0.0
      %684 = vmatpush1.xpose.msra.mxu0 0.0
      %685 = vmatprep.subr.mxu0 0.0
      %686 = vmatpush1.xpose.msra.mxu0 0.0
      %687 = vmatprep.subr.mxu0 0.0
      %688 = vmatpush1.xpose.msra.mxu0 0.0
      %689 = vmatprep.subr.mxu0 0.0
      %690 = vmatpush1.xpose.msra.mxu0 0.0
      %691 = vmatprep.subr.mxu0 0.0
      %692 = vmatpush1.xpose.msra.mxu0 0.0
      %693 = vmatprep.subr.mxu0 0.0
      %694 = vmatpush1.xpose.msra.mxu0 0.0
      %695 = vmatprep.subr.mxu0 0.0
      %696 = vmatpush1.xpose.msra.mxu0 0.0
      %697 = vmatprep.subr.mxu0 0.0
      %698 = vmatpush1.xpose.msra.mxu0 0.0
      %699 = vmatprep.subr.mxu0 0.0
      %700 = vmatpush1.xpose.msra.mxu0 0.0
      %701 = vmatprep.subr.mxu0 0.0
      %702 = vmatpush1.xpose.msra.mxu0 0.0
      %703 = vmatprep.subr.mxu0 0.0
      %704 = vmatpush1.xpose.msra.mxu0 0.0
      %705 = vmatprep.subr.mxu0 0.0
      %706 = vmatpush1.xpose.msra.mxu0 0.0
      %707 = vmatprep.subr.mxu0 0.0
      %708 = vmatpush1.xpose.msra.mxu0 0.0
      %709 = vmatprep.subr.mxu0 0.0
      %710 = vmatpush1.xpose.msra.mxu0 0.0
      %711 = vmatprep.mubr.f32.mxu0 0.0
      %712 = vmatmul.mubr.f32.gmra.mrb[0].mxu0 %v643
      %v713 = vpop.f32.mrb[0].mxu0
      %v714 = vadd.f32 %v481, %v713
      %v715 = vpop.f32.mrb[0].mxu0
      %716 = vdwg.mxu0
      %717 = vrot.lane.b32.xlu0 %v477, 96
      %v718 = vpop.permute.xlu0 %717
      %v719 = vsel %vm490, %v477, 0
      %v721 = vsel %vm490, %v718, 0
      %723 = vmatprep.subr.mxu0 0.0
      %724 = vmatpush1.xpose.msra.mxu0 %v721
      %725 = vmatprep.subr.mxu0 0.0
      %726 = vmatpush1.xpose.msra.mxu0 0.0
      %727 = vmatprep.subr.mxu0 0.0
      %728 = vmatpush1.xpose.msra.mxu0 0.0
      %729 = vmatprep.subr.mxu0 0.0
      %730 = vmatpush1.xpose.msra.mxu0 0.0
      %731 = vmatprep.subr.mxu0 0.0
      %732 = vmatpush1.xpose.msra.mxu0 0.0
      %733 = vmatprep.subr.mxu0 0.0
      %734 = vmatpush1.xpose.msra.mxu0 0.0
      %735 = vmatprep.subr.mxu0 0.0
      %736 = vmatpush1.xpose.msra.mxu0 0.0
      %737 = vmatprep.subr.mxu0 0.0
      %738 = vmatpush1.xpose.msra.mxu0 0.0
      %739 = vmatprep.subr.mxu0 0.0
      %740 = vmatpush1.xpose.msra.mxu0 0.0
      %741 = vmatprep.subr.mxu0 0.0
      %742 = vmatpush1.xpose.msra.mxu0 0.0
      %743 = vmatprep.subr.mxu0 0.0
      %744 = vmatpush1.xpose.msra.mxu0 0.0
      %745 = vmatprep.subr.mxu0 0.0
      %746 = vmatpush1.xpose.msra.mxu0 0.0
      %747 = vmatprep.subr.mxu0 0.0
      %748 = vmatpush1.xpose.msra.mxu0 0.0
      %749 = vmatprep.subr.mxu0 0.0
      %750 = vmatpush1.xpose.msra.mxu0 0.0
      %751 = vmatprep.subr.mxu0 0.0
      %752 = vmatpush1.xpose.msra.mxu0 0.0
      %753 = vmatprep.subr.mxu0 0.0
      %754 = vmatpush1.xpose.msra.mxu0 0.0
      %755 = vmatprep.subr.mxu0 0.0
      %756 = vmatpush1.xpose.msra.mxu0 0.0
      %757 = vmatprep.subr.mxu0 0.0
      %758 = vmatpush1.xpose.msra.mxu0 0.0
      %759 = vmatprep.subr.mxu0 0.0
      %760 = vmatpush1.xpose.msra.mxu0 0.0
      %761 = vmatprep.subr.mxu0 0.0
      %762 = vmatpush1.xpose.msra.mxu0 0.0
      %763 = vmatprep.subr.mxu0 0.0
      %764 = vmatpush1.xpose.msra.mxu0 0.0
      %765 = vmatprep.subr.mxu0 0.0
      %766 = vmatpush1.xpose.msra.mxu0 0.0
      %767 = vmatprep.subr.mxu0 0.0
      %768 = vmatpush1.xpose.msra.mxu0 0.0
      %769 = vmatprep.subr.mxu0 0.0
      %770 = vmatpush1.xpose.msra.mxu0 0.0
      %771 = vmatprep.subr.mxu0 0.0
      %772 = vmatpush1.xpose.msra.mxu0 0.0
      %773 = vmatprep.subr.mxu0 0.0
      %774 = vmatpush1.xpose.msra.mxu0 0.0
      %775 = vmatprep.subr.mxu0 0.0
      %776 = vmatpush1.xpose.msra.mxu0 0.0
      %777 = vmatprep.subr.mxu0 0.0
      %778 = vmatpush1.xpose.msra.mxu0 0.0
      %779 = vmatprep.subr.mxu0 0.0
      %780 = vmatpush1.xpose.msra.mxu0 0.0
      %781 = vmatprep.subr.mxu0 0.0
      %782 = vmatpush1.xpose.msra.mxu0 0.0
      %783 = vmatprep.subr.mxu0 0.0
      %784 = vmatpush1.xpose.msra.mxu0 0.0
      %785 = vmatprep.subr.mxu0 0.0
      %786 = vmatpush1.xpose.msra.mxu0 0.0
      %787 = vmatprep.mubr.f32.mxu0 0.0
      %788 = vmatmul.mubr.f32.gmra.mrb[0].mxu0 %v719
      %v789 = vpop.f32.mrb[0].mxu0
      %v790 = vadd.f32 %v485, %v789
      %v791 = vpop.f32.mrb[0].mxu0
      %792 = vdwg.mxu0
      %vm793 = vcmask 64512
      %v794 = vsel %vm793, %v562, -inf
      %795 = vmax.xlane.f32.xlu0 %v794
      %v796 = vpop.xlane.xlu0 %795
      %v797 = vsel %vm793, %v638, -inf
      %798 = vmax.xlane.f32.xlu0 %v797
      %v799 = vpop.xlane.xlu0 %798
      %v800 = vsel %vm793, %v714, -inf
      %801 = vmax.xlane.f32.xlu0 %v800
      %v802 = vpop.xlane.xlu0 %801
      %v803 = vsel %vm793, %v790, -inf
      %804 = vmax.xlane.f32.xlu0 %v803
      %v805 = vpop.xlane.xlu0 %804
      %v806 = vsub.f32 %v562, %v796
      %v807 = vsub.f32 %v638, %v799
      %v808 = vsub.f32 %v714, %v802
      %v809 = vsub.f32 %v790, %v805
      %v810 = vmul.f32 %v806, 1.442695
      %v811 = vpow.pop %v810
      %v812 = vmul.f32 %v807, 1.442695
      %v813 = vpow.pop %v812
      %v814 = vmul.f32 %v808, 1.442695
      %v815 = vpow.pop %v814
      %v816 = vmul.f32 %v809, 1.442695
      %v817 = vpow.pop %v816
      %v818 = vsel %vm793, %v811, 0.0
      %819 = vadd.xlane.f32.xlu0 %v818
      %v820 = vpop.xlane.xlu0 %819
      %v821 = vsel %vm793, %v813, 0.0
      %822 = vadd.xlane.f32.xlu0 %v821
      %v823 = vpop.xlane.xlu0 %822
      %v824 = vsel %vm793, %v815, 0.0
      %825 = vadd.xlane.f32.xlu0 %v824
      %v826 = vpop.xlane.xlu0 %825
      %v827 = vsel %vm793, %v817, 0.0
      %828 = vadd.xlane.f32.xlu0 %v827
      %v829 = vpop.xlane.xlu0 %828
      %v830 = vrcp.pop %v820
      %v831 = vmul.f32 %v811, %v830
      %v832 = vrcp.pop %v823
      %v833 = vmul.f32 %v813, %v832
      %v834 = vrcp.pop %v826
      %v835 = vmul.f32 %v815, %v834
      %v836 = vrcp.pop %v829
      %v837 = vmul.f32 %v817, %v836
      %838 = vrot.lane.b32.xlu0 %v464, 64
      %v839 = vpop.permute.xlu0 %838
      %v842 = vsel %vm793, %v831, 0
      %844 = vmatprep.subr.mxu0 0.0
      %845 = vmatpush1.msra.mxu0 %v839
      %846 = vmatprep.subr.mxu0 0.0
      %847 = vmatpush1.msra.mxu0 0.0
      %848 = vmatprep.subr.mxu0 0.0
      %849 = vmatpush1.msra.mxu0 0.0
      %850 = vmatprep.subr.mxu0 0.0
      %851 = vmatpush1.msra.mxu0 0.0
      %852 = vmatprep.subr.mxu0 0.0
      %853 = vmatpush1.msra.mxu0 0.0
      %854 = vmatprep.subr.mxu0 0.0
      %855 = vmatpush1.msra.mxu0 0.0
      %856 = vmatprep.subr.mxu0 0.0
      %857 = vmatpush1.msra.mxu0 0.0
      %858 = vmatprep.subr.mxu0 0.0
      %859 = vmatpush1.msra.mxu0 0.0
      %860 = vmatprep.subr.mxu0 0.0
      %861 = vmatpush1.msra.mxu0 0.0
      %862 = vmatprep.subr.mxu0 0.0
      %863 = vmatpush1.msra.mxu0 0.0
      %864 = vmatprep.subr.mxu0 0.0
      %865 = vmatpush1.msra.mxu0 0.0
      %866 = vmatprep.subr.mxu0 0.0
      %867 = vmatpush1.msra.mxu0 0.0
      %868 = vmatprep.subr.mxu0 0.0
      %869 = vmatpush1.msra.mxu0 0.0
      %870 = vmatprep.subr.mxu0 0.0
      %871 = vmatpush1.msra.mxu0 0.0
      %872 = vmatprep.subr.mxu0 0.0
      %873 = vmatpush1.msra.mxu0 0.0
      %874 = vmatprep.subr.mxu0 0.0
      %875 = vmatpush1.msra.mxu0 0.0
      %876 = vmatprep.subr.mxu0 0.0
      %877 = vmatpush1.msra.mxu0 0.0
      %878 = vmatprep.subr.mxu0 0.0
      %879 = vmatpush1.msra.mxu0 0.0
      %880 = vmatprep.subr.mxu0 0.0
      %881 = vmatpush1.msra.mxu0 0.0
      %882 = vmatprep.subr.mxu0 0.0
      %883 = vmatpush1.msra.mxu0 0.0
      %884 = vmatprep.subr.mxu0 0.0
      %885 = vmatpush1.msra.mxu0 0.0
      %886 = vmatprep.subr.mxu0 0.0
      %887 = vmatpush1.msra.mxu0 0.0
      %888 = vmatprep.subr.mxu0 0.0
      %889 = vmatpush1.msra.mxu0 0.0
      %890 = vmatprep.subr.mxu0 0.0
      %891 = vmatpush1.msra.mxu0 0.0
      %892 = vmatprep.subr.mxu0 0.0
      %893 = vmatpush1.msra.mxu0 0.0
      %894 = vmatprep.subr.mxu0 0.0
      %895 = vmatpush1.msra.mxu0 0.0
      %896 = vmatprep.subr.mxu0 0.0
      %897 = vmatpush1.msra.mxu0 0.0
      %898 = vmatprep.subr.mxu0 0.0
      %899 = vmatpush1.msra.mxu0 0.0
      %900 = vmatprep.subr.mxu0 0.0
      %901 = vmatpush1.msra.mxu0 0.0
      %902 = vmatprep.subr.mxu0 0.0
      %903 = vmatpush1.msra.mxu0 0.0
      %904 = vmatprep.subr.mxu0 0.0
      %905 = vmatpush1.msra.mxu0 0.0
      %906 = vmatprep.subr.mxu0 0.0
      %907 = vmatpush1.msra.mxu0 0.0
      %908 = vmatprep.mubr.f32.mxu0 0.0
      %909 = vmatmul.mubr.f32.gmra.mrb[0].mxu0 %v842
      %v910 = vpop.f32.mrb[0].mxu0
      %v911 = vadd.f32 0.0, %v910
      %v912 = vpop.f32.mrb[0].mxu0
      %913 = vdwg.mxu0
      %914 = vrot.lane.b32.xlu0 %v469, 64
      %v915 = vpop.permute.xlu0 %914
      %v918 = vsel %vm793, %v833, 0
      %920 = vmatprep.subr.mxu0 0.0
      %921 = vmatpush1.msra.mxu0 %v915
      %922 = vmatprep.subr.mxu0 0.0
      %923 = vmatpush1.msra.mxu0 0.0
      %924 = vmatprep.subr.mxu0 0.0
      %925 = vmatpush1.msra.mxu0 0.0
      %926 = vmatprep.subr.mxu0 0.0
      %927 = vmatpush1.msra.mxu0 0.0
      %928 = vmatprep.subr.mxu0 0.0
      %929 = vmatpush1.msra.mxu0 0.0
      %930 = vmatprep.subr.mxu0 0.0
      %931 = vmatpush1.msra.mxu0 0.0
      %932 = vmatprep.subr.mxu0 0.0
      %933 = vmatpush1.msra.mxu0 0.0
      %934 = vmatprep.subr.mxu0 0.0
      %935 = vmatpush1.msra.mxu0 0.0
      %936 = vmatprep.subr.mxu0 0.0
      %937 = vmatpush1.msra.mxu0 0.0
      %938 = vmatprep.subr.mxu0 0.0
      %939 = vmatpush1.msra.mxu0 0.0
      %940 = vmatprep.subr.mxu0 0.0
      %941 = vmatpush1.msra.mxu0 0.0
      %942 = vmatprep.subr.mxu0 0.0
      %943 = vmatpush1.msra.mxu0 0.0
      %944 = vmatprep.subr.mxu0 0.0
      %945 = vmatpush1.msra.mxu0 0.0
      %946 = vmatprep.subr.mxu0 0.0
      %947 = vmatpush1.msra.mxu0 0.0
      %948 = vmatprep.subr.mxu0 0.0
      %949 = vmatpush1.msra.mxu0 0.0
      %950 = vmatprep.subr.mxu0 0.0
      %951 = vmatpush1.msra.mxu0 0.0
      %952 = vmatprep.subr.mxu0 0.0
      %953 = vmatpush1.msra.mxu0 0.0
      %954 = vmatprep.subr.mxu0 0.0
      %955 = vmatpush1.msra.mxu0 0.0
      %956 = vmatprep.subr.mxu0 0.0
      %957 = vmatpush1.msra.mxu0 0.0
      %958 = vmatprep.subr.mxu0 0.0
      %959 = vmatpush1.msra.mxu0 0.0
      %960 = vmatprep.subr.mxu0 0.0
      %961 = vmatpush1.msra.mxu0 0.0
      %962 = vmatprep.subr.mxu0 0.0
      %963 = vmatpush1.msra.mxu0 0.0
      %964 = vmatprep.subr.mxu0 0.0
      %965 = vmatpush1.msra.mxu0 0.0
      %966 = vmatprep.subr.mxu0 0.0
      %967 = vmatpush1.msra.mxu0 0.0
      %968 = vmatprep.subr.mxu0 0.0
      %969 = vmatpush1.msra.mxu0 0.0
      %970 = vmatprep.subr.mxu0 0.0
      %971 = vmatpush1.msra.mxu0 0.0
      %972 = vmatprep.subr.mxu0 0.0
      %973 = vmatpush1.msra.mxu0 0.0
      %974 = vmatprep.subr.mxu0 0.0
      %975 = vmatpush1.msra.mxu0 0.0
      %976 = vmatprep.subr.mxu0 0.0
      %977 = vmatpush1.msra.mxu0 0.0
      %978 = vmatprep.subr.mxu0 0.0
      %979 = vmatpush1.msra.mxu0 0.0
      %980 = vmatprep.subr.mxu0 0.0
      %981 = vmatpush1.msra.mxu0 0.0
      %982 = vmatprep.subr.mxu0 0.0
      %983 = vmatpush1.msra.mxu0 0.0
      %984 = vmatprep.mubr.f32.mxu0 0.0
      %985 = vmatmul.mubr.f32.gmra.mrb[0].mxu0 %v918
      %v986 = vpop.f32.mrb[0].mxu0
      %v987 = vadd.f32 0.0, %v986
      %v988 = vpop.f32.mrb[0].mxu0
      %989 = vdwg.mxu0
      %990 = vrot.lane.b32.xlu0 %v475, 64
      %v991 = vpop.permute.xlu0 %990
      %v994 = vsel %vm793, %v835, 0
      %996 = vmatprep.subr.mxu0 0.0
      %997 = vmatpush1.msra.mxu0 %v991
      %998 = vmatprep.subr.mxu0 0.0
      %999 = vmatpush1.msra.mxu0 0.0
      %1000 = vmatprep.subr.mxu0 0.0
      %1001 = vmatpush1.msra.mxu0 0.0
      %1002 = vmatprep.subr.mxu0 0.0
      %1003 = vmatpush1.msra.mxu0 0.0
      %1004 = vmatprep.subr.mxu0 0.0
      %1005 = vmatpush1.msra.mxu0 0.0
      %1006 = vmatprep.subr.mxu0 0.0
      %1007 = vmatpush1.msra.mxu0 0.0
      %1008 = vmatprep.subr.mxu0 0.0
      %1009 = vmatpush1.msra.mxu0 0.0
      %1010 = vmatprep.subr.mxu0 0.0
      %1011 = vmatpush1.msra.mxu0 0.0
      %1012 = vmatprep.subr.mxu0 0.0
      %1013 = vmatpush1.msra.mxu0 0.0
      %1014 = vmatprep.subr.mxu0 0.0
      %1015 = vmatpush1.msra.mxu0 0.0
      %1016 = vmatprep.subr.mxu0 0.0
      %1017 = vmatpush1.msra.mxu0 0.0
      %1018 = vmatprep.subr.mxu0 0.0
      %1019 = vmatpush1.msra.mxu0 0.0
      %1020 = vmatprep.subr.mxu0 0.0
      %1021 = vmatpush1.msra.mxu0 0.0
      %1022 = vmatprep.subr.mxu0 0.0
      %1023 = vmatpush1.msra.mxu0 0.0
      %1024 = vmatprep.subr.mxu0 0.0
      %1025 = vmatpush1.msra.mxu0 0.0
      %1026 = vmatprep.subr.mxu0 0.0
      %1027 = vmatpush1.msra.mxu0 0.0
      %1028 = vmatprep.subr.mxu0 0.0
      %1029 = vmatpush1.msra.mxu0 0.0
      %1030 = vmatprep.subr.mxu0 0.0
      %1031 = vmatpush1.msra.mxu0 0.0
      %1032 = vmatprep.subr.mxu0 0.0
      %1033 = vmatpush1.msra.mxu0 0.0
      %1034 = vmatprep.subr.mxu0 0.0
      %1035 = vmatpush1.msra.mxu0 0.0
      %1036 = vmatprep.subr.mxu0 0.0
      %1037 = vmatpush1.msra.mxu0 0.0
      %1038 = vmatprep.subr.mxu0 0.0
      %1039 = vmatpush1.msra.mxu0 0.0
      %1040 = vmatprep.subr.mxu0 0.0
      %1041 = vmatpush1.msra.mxu0 0.0
      %1042 = vmatprep.subr.mxu0 0.0
      %1043 = vmatpush1.msra.mxu0 0.0
      %1044 = vmatprep.subr.mxu0 0.0
      %1045 = vmatpush1.msra.mxu0 0.0
      %1046 = vmatprep.subr.mxu0 0.0
      %1047 = vmatpush1.msra.mxu0 0.0
      %1048 = vmatprep.subr.mxu0 0.0
      %1049 = vmatpush1.msra.mxu0 0.0
      %1050 = vmatprep.subr.mxu0 0.0
      %1051 = vmatpush1.msra.mxu0 0.0
      %1052 = vmatprep.subr.mxu0 0.0
      %1053 = vmatpush1.msra.mxu0 0.0
      %1054 = vmatprep.subr.mxu0 0.0
      %1055 = vmatpush1.msra.mxu0 0.0
      %1056 = vmatprep.subr.mxu0 0.0
      %1057 = vmatpush1.msra.mxu0 0.0
      %1058 = vmatprep.subr.mxu0 0.0
      %1059 = vmatpush1.msra.mxu0 0.0
      %1060 = vmatprep.mubr.f32.mxu0 0.0
      %1061 = vmatmul.mubr.f32.gmra.mrb[0].mxu0 %v994
      %v1062 = vpop.f32.mrb[0].mxu0
      %v1063 = vadd.f32 0.0, %v1062
      %v1064 = vpop.f32.mrb[0].mxu0
      %1065 = vdwg.mxu0
      %1066 = vrot.lane.b32.xlu0 %v477, 64
      %v1067 = vpop.permute.xlu0 %1066
      %v1070 = vsel %vm793, %v837, 0
      %1072 = vmatprep.subr.mxu0 0.0
      %1073 = vmatpush1.msra.mxu0 %v1067
      %1074 = vmatprep.subr.mxu0 0.0
      %1075 = vmatpush1.msra.mxu0 0.0
      %1076 = vmatprep.subr.mxu0 0.0
      %1077 = vmatpush1.msra.mxu0 0.0
      %1078 = vmatprep.subr.mxu0 0.0
      %1079 = vmatpush1.msra.mxu0 0.0
      %1080 = vmatprep.subr.mxu0 0.0
      %1081 = vmatpush1.msra.mxu0 0.0
      %1082 = vmatprep.subr.mxu0 0.0
      %1083 = vmatpush1.msra.mxu0 0.0
      %1084 = vmatprep.subr.mxu0 0.0
      %1085 = vmatpush1.msra.mxu0 0.0
      %1086 = vmatprep.subr.mxu0 0.0
      %1087 = vmatpush1.msra.mxu0 0.0
      %1088 = vmatprep.subr.mxu0 0.0
      %1089 = vmatpush1.msra.mxu0 0.0
      %1090 = vmatprep.subr.mxu0 0.0
      %1091 = vmatpush1.msra.mxu0 0.0
      %1092 = vmatprep.subr.mxu0 0.0
      %1093 = vmatpush1.msra.mxu0 0.0
      %1094 = vmatprep.subr.mxu0 0.0
      %1095 = vmatpush1.msra.mxu0 0.0
      %1096 = vmatprep.subr.mxu0 0.0
      %1097 = vmatpush1.msra.mxu0 0.0
      %1098 = vmatprep.subr.mxu0 0.0
      %1099 = vmatpush1.msra.mxu0 0.0
      %1100 = vmatprep.subr.mxu0 0.0
      %1101 = vmatpush1.msra.mxu0 0.0
      %1102 = vmatprep.subr.mxu0 0.0
      %1103 = vmatpush1.msra.mxu0 0.0
      %1104 = vmatprep.subr.mxu0 0.0
      %1105 = vmatpush1.msra.mxu0 0.0
      %1106 = vmatprep.subr.mxu0 0.0
      %1107 = vmatpush1.msra.mxu0 0.0
      %1108 = vmatprep.subr.mxu0 0.0
      %1109 = vmatpush1.msra.mxu0 0.0
      %1110 = vmatprep.subr.mxu0 0.0
      %1111 = vmatpush1.msra.mxu0 0.0
      %1112 = vmatprep.subr.mxu0 0.0
      %1113 = vmatpush1.msra.mxu0 0.0
      %1114 = vmatprep.subr.mxu0 0.0
      %1115 = vmatpush1.msra.mxu0 0.0
      %1116 = vmatprep.subr.mxu0 0.0
      %1117 = vmatpush1.msra.mxu0 0.0
      %1118 = vmatprep.subr.mxu0 0.0
      %1119 = vmatpush1.msra.mxu0 0.0
      %1120 = vmatprep.subr.mxu0 0.0
      %1121 = vmatpush1.msra.mxu0 0.0
      %1122 = vmatprep.subr.mxu0 0.0
      %1123 = vmatpush1.msra.mxu0 0.0
      %1124 = vmatprep.subr.mxu0 0.0
      %1125 = vmatpush1.msra.mxu0 0.0
      %1126 = vmatprep.subr.mxu0 0.0
      %1127 = vmatpush1.msra.mxu0 0.0
      %1128 = vmatprep.subr.mxu0 0.0
      %1129 = vmatpush1.msra.mxu0 0.0
      %1130 = vmatprep.subr.mxu0 0.0
      %1131 = vmatpush1.msra.mxu0 0.0
      %1132 = vmatprep.subr.mxu0 0.0
      %1133 = vmatpush1.msra.mxu0 0.0
      %1134 = vmatprep.subr.mxu0 0.0
      %1135 = vmatpush1.msra.mxu0 0.0
      %1136 = vmatprep.mubr.f32.mxu0 0.0
      %1137 = vmatmul.mubr.f32.gmra.mrb[0].mxu0 %v1070
      %v1138 = vpop.f32.mrb[0].mxu0
      %v1139 = vadd.f32 0.0, %v1138
      %v1140 = vpop.f32.mrb[0].mxu0
      %1141 = vdwg.mxu0
      %1144 = vrot.lane.b32.xlu0 %v1063, 16
      %v1145 = vpop.permute.xlu0 %1144
      %1146 = vrot.lane.b32.xlu0 %v1139, 16
      %v1147 = vpop.permute.xlu0 %1146
      %v1150 = vsel %vm490, %v911, %v1145
      %v1151 = vsel %vm490, %v987, %v1147
      %v1152 = vlaneseq
      %v1153 = vshrl.u32 %v1152, 7
      %v1154 = vsub.s32 3, %v1153
      %v1155 = vrot.slane %v301, %v1154
      %1160 = vrot.lane.b32.xlu0 %v371, 32
      %v1161 = vpop.permute.xlu0 %1160
      %1162 = vrot.lane.b32.xlu0 %v373, 32
      %v1163 = vpop.permute.xlu0 %1162
      %1164 = vrot.lane.b32.xlu0 %v375, 32
      %v1165 = vpop.permute.xlu0 %1164
      %1166 = vrot.lane.b32.xlu0 %v377, 32
      %v1167 = vpop.permute.xlu0 %1166
      %v1173 = vsel %vm306, %v1150, 0
      %v1176 = vsel %vm306, %v1151, 0
      %1178 = vmatprep.subr.mxu0 0.0
      %1179 = vmatpush1.msra.mxu0 %v1161
      %1180 = vmatprep.subr.mxu0 0.0
      %1181 = vmatpush1.msra.mxu0 %v1163
      %1182 = vmatprep.subr.mxu0 0.0
      %1183 = vmatpush1.msra.mxu0 %v1165
      %1184 = vmatprep.subr.mxu0 0.0
      %1185 = vmatpush1.msra.mxu0 %v1167
      %1186 = vmatprep.subr.mxu0 0.0
      %1187 = vmatpush1.msra.mxu0 0.0
      %1188 = vmatprep.subr.mxu0 0.0
      %1189 = vmatpush1.msra.mxu0 0.0
      %1190 = vmatprep.subr.mxu0 0.0
      %1191 = vmatpush1.msra.mxu0 0.0
      %1192 = vmatprep.subr.mxu0 0.0
      %1193 = vmatpush1.msra.mxu0 0.0
      %1194 = vmatprep.subr.mxu0 0.0
      %1195 = vmatpush1.msra.mxu0 0.0
      %1196 = vmatprep.subr.mxu0 0.0
      %1197 = vmatpush1.msra.mxu0 0.0
      %1198 = vmatprep.subr.mxu0 0.0
      %1199 = vmatpush1.msra.mxu0 0.0
      %1200 = vmatprep.subr.mxu0 0.0
      %1201 = vmatpush1.msra.mxu0 0.0
      %1202 = vmatprep.subr.mxu0 0.0
      %1203 = vmatpush1.msra.mxu0 0.0
      %1204 = vmatprep.subr.mxu0 0.0
      %1205 = vmatpush1.msra.mxu0 0.0
      %1206 = vmatprep.subr.mxu0 0.0
      %1207 = vmatpush1.msra.mxu0 0.0
      %1208 = vmatprep.subr.mxu0 0.0
      %1209 = vmatpush1.msra.mxu0 0.0
      %1210 = vmatprep.subr.mxu0 0.0
      %1211 = vmatpush1.msra.mxu0 0.0
      %1212 = vmatprep.subr.mxu0 0.0
      %1213 = vmatpush1.msra.mxu0 0.0
      %1214 = vmatprep.subr.mxu0 0.0
      %1215 = vmatpush1.msra.mxu0 0.0
      %1216 = vmatprep.subr.mxu0 0.0
      %1217 = vmatpush1.msra.mxu0 0.0
      %1218 = vmatprep.subr.mxu0 0.0
      %1219 = vmatpush1.msra.mxu0 0.0
      %1220 = vmatprep.subr.mxu0 0.0
      %1221 = vmatpush1.msra.mxu0 0.0
      %1222 = vmatprep.subr.mxu0 0.0
      %1223 = vmatpush1.msra.mxu0 0.0
      %1224 = vmatprep.subr.mxu0 0.0
      %1225 = vmatpush1.msra.mxu0 0.0
      %1226 = vmatprep.subr.mxu0 0.0
      %1227 = vmatpush1.msra.mxu0 0.0
      %1228 = vmatprep.subr.mxu0 0.0
      %1229 = vmatpush1.msra.mxu0 0.0
      %1230 = vmatprep.subr.mxu0 0.0
      %1231 = vmatpush1.msra.mxu0 0.0
      %1232 = vmatprep.subr.mxu0 0.0
      %1233 = vmatpush1.msra.mxu0 0.0
      %1234 = vmatprep.subr.mxu0 0.0
      %1235 = vmatpush1.msra.mxu0 0.0
      %1236 = vmatprep.subr.mxu0 0.0
      %1237 = vmatpush1.msra.mxu0 0.0
      %1238 = vmatprep.subr.mxu0 0.0
      %1239 = vmatpush1.msra.mxu0 0.0
      %1240 = vmatprep.subr.mxu0 0.0
      %1241 = vmatpush1.msra.mxu0 0.0
      %1242 = vmatprep.mubr.f32.mxu0 0.0
      %1243 = vmatmul.mubr.f32.gmra.mrb[0].mxu0 %v1173
      %v1244 = vpop.f32.mrb[0].mxu0
      %v1245 = vadd.f32 %v1155, %v1244
      %v1246 = vpop.f32.mrb[0].mxu0
      %1247 = vmatprep.mubr.f32.mxu0 0.0
      %1248 = vmatmul.mubr.f32.gmra.mrb[0].mxu0 %v1176
      %v1249 = vpop.f32.mrb[0].mxu0
      %v1250 = vadd.f32 %v1155, %v1249
      %v1251 = vpop.f32.mrb[0].mxu0
      %1252 = vdwg.mxu0
      %v1253 = vadd.f32 %v1245, %v344
      %v1254 = vadd.f32 %v1250, %v345
      %v1255 = vsel %vm306, %v1253, 0.0
      %1256 = vadd.xlane.f32.xlu0 %v1255
      %v1257 = vpop.xlane.xlu0 %1256
      %v1258 = vsel %vm306, %v1254, 0.0
      %1259 = vadd.xlane.f32.xlu0 %v1258
      %v1260 = vpop.xlane.xlu0 %1259
      %v1261 = vmul.f32 %v1257, %v313
      %v1262 = vmul.f32 %v1260, %v313
      %v1263 = vsub.f32 %v1253, %v1261
      %v1264 = vsub.f32 %v1254, %v1262
      %v1265 = vmul.f32 %v1263, %v1263
      %v1266 = vmul.f32 %v1264, %v1264
      %v1267 = vsel %vm306, %v1265, 0.0
      %1268 = vadd.xlane.f32.xlu0 %v1267
      %v1269 = vpop.xlane.xlu0 %1268
      %v1270 = vsel %vm306, %v1266, 0.0
      %1271 = vadd.xlane.f32.xlu0 %v1270
      %v1272 = vpop.xlane.xlu0 %1271
      %v1273 = vmul.f32 %v1269, %v313
      %v1274 = vmul.f32 %v1272, %v313
      %v1275 = vadd.f32 %v1273, 1e-12
      %v1276 = vadd.f32 %v1274, 1e-12
      %v1277 = vrsqrt.pop %v1275
      %v1278 = vrsqrt.pop %v1276
      %v1279 = vmul.f32 %v1263, %v1277
      %v1280 = vmul.f32 %v1264, %v1278
      %v1281 = vlaneseq
      %v1282 = vshrl.u32 %v1281, 7
      %v1283 = vsub.s32 4, %v1282
      %v1284 = vrot.slane %v301, %v1283
      %v1285 = vmul.f32 %v1279, %v1284
      %v1286 = vmul.f32 %v1280, %v1284
      %v1287 = vlaneseq
      %v1288 = vshrl.u32 %v1287, 7
      %v1289 = vsub.s32 5, %v1288
      %v1290 = vrot.slane %v301, %v1289
      %v1291 = vadd.f32 %v1285, %v1290
      %v1292 = vadd.f32 %v1286, %v1290
      %v1293 = vlaneseq
      %v1294 = vshrl.u32 %v1293, 7
      %v1295 = vsub.s32 6, %v1294
      %v1296 = vrot.slane %v301, %v1295
      %v1298 = vsel %vm306, %v1291, 0
      %v1301 = vsel %vm306, %v1292, 0
      %1303 = vmatprep.subr.mxu0 0.0
      %1304 = vmatpush1.msra.mxu0 %v372
      %1305 = vmatprep.subr.mxu0 0.0
      %1306 = vmatpush1.msra.mxu0 %v374
      %1307 = vmatprep.subr.mxu0 0.0
      %1308 = vmatpush1.msra.mxu0 %v376
      %1309 = vmatprep.subr.mxu0 0.0
      %1310 = vmatpush1.msra.mxu0 %v378
      %1311 = vmatprep.subr.mxu0 0.0
      %1312 = vmatpush1.msra.mxu0 0.0
      %1313 = vmatprep.subr.mxu0 0.0
      %1314 = vmatpush1.msra.mxu0 0.0
      %1315 = vmatprep.subr.mxu0 0.0
      %1316 = vmatpush1.msra.mxu0 0.0
      %1317 = vmatprep.subr.mxu0 0.0
      %1318 = vmatpush1.msra.mxu0 0.0
      %1319 = vmatprep.subr.mxu0 0.0
      %1320 = vmatpush1.msra.mxu0 0.0
      %1321 = vmatprep.subr.mxu0 0.0
      %1322 = vmatpush1.msra.mxu0 0.0
      %1323 = vmatprep.subr.mxu0 0.0
      %1324 = vmatpush1.msra.mxu0 0.0
      %1325 = vmatprep.subr.mxu0 0.0
      %1326 = vmatpush1.msra.mxu0 0.0
      %1327 = vmatprep.subr.mxu0 0.0
      %1328 = vmatpush1.msra.mxu0 0.0
      %1329 = vmatprep.subr.mxu0 0.0
      %1330 = vmatpush1.msra.mxu0 0.0
      %1331 = vmatprep.subr.mxu0 0.0
      %1332 = vmatpush1.msra.mxu0 0.0
      %1333 = vmatprep.subr.mxu0 0.0
      %1334 = vmatpush1.msra.mxu0 0.0
      %1335 = vmatprep.subr.mxu0 0.0
      %1336 = vmatpush1.msra.mxu0 0.0
      %1337 = vmatprep.subr.mxu0 0.0
      %1338 = vmatpush1.msra.mxu0 0.0
      %1339 = vmatprep.subr.mxu0 0.0
      %1340 = vmatpush1.msra.mxu0 0.0
      %1341 = vmatprep.subr.mxu0 0.0
      %1342 = vmatpush1.msra.mxu0 0.0
      %1343 = vmatprep.subr.mxu0 0.0
      %1344 = vmatpush1.msra.mxu0 0.0
      %1345 = vmatprep.subr.mxu0 0.0
      %1346 = vmatpush1.msra.mxu0 0.0
      %1347 = vmatprep.subr.mxu0 0.0
      %1348 = vmatpush1.msra.mxu0 0.0
      %1349 = vmatprep.subr.mxu0 0.0
      %1350 = vmatpush1.msra.mxu0 0.0
      %1351 = vmatprep.subr.mxu0 0.0
      %1352 = vmatpush1.msra.mxu0 0.0
      %1353 = vmatprep.subr.mxu0 0.0
      %1354 = vmatpush1.msra.mxu0 0.0
      %1355 = vmatprep.subr.mxu0 0.0
      %1356 = vmatpush1.msra.mxu0 0.0
      %1357 = vmatprep.subr.mxu0 0.0
      %1358 = vmatpush1.msra.mxu0 0.0
      %1359 = vmatprep.subr.mxu0 0.0
      %1360 = vmatpush1.msra.mxu0 0.0
      %1361 = vmatprep.subr.mxu0 0.0
      %1362 = vmatpush1.msra.mxu0 0.0
      %1363 = vmatprep.subr.mxu0 0.0
      %1364 = vmatpush1.msra.mxu0 0.0
      %1365 = vmatprep.subr.mxu0 0.0
      %1366 = vmatpush1.msra.mxu0 0.0
      %1367 = vmatprep.mubr.f32.mxu0 0.0
      %1368 = vmatmul.mubr.f32.gmra.mrb[0].mxu0 %v1298
      %v1369 = vpop.f32.mrb[0].mxu0
      %v1370 = vadd.f32 %v1296, %v1369
      %v1371 = vpop.f32.mrb[0].mxu0
      %1372 = vmatprep.mubr.f32.mxu0 0.0
      %1373 = vmatmul.mubr.f32.gmra.mrb[0].mxu0 %v1301
      %v1374 = vpop.f32.mrb[0].mxu0
      %v1375 = vadd.f32 %v1296, %v1374
      %v1376 = vpop.f32.mrb[0].mxu0
      %1377 = vdwg.mxu0
      %v1378 = vmul.f32 %v1370, 0.5
      %v1379 = vmul.f32 %v1375, 0.5
      %v1380 = vmul.f32 %v1370, 0.70710677
      %v1381 = vmul.f32 %v1375, 0.70710677
      %v1382 = vand.u32 2147483647, %v1380
      %v1383 = vand.u32 2147483647, %v1381
      %v1384 = vmul.f32 %v1382, 0.3275911
      %v1385 = vmul.f32 %v1383, 0.3275911
      %v1386 = vadd.f32 %v1384, 1.0
      %v1387 = vadd.f32 %v1385, 1.0
      %v1388 = vrcp.pop %v1386
      %v1389 = vmul.f32 1.0, %v1388
      %v1390 = vrcp.pop %v1387
      %v1391 = vmul.f32 1.0, %v1390
      %v1392 = vmul.f32 %v1389, 1.0614054
      %v1393 = vmul.f32 %v1391, 1.0614054
      %v1394 = vadd.f32 %v1392, -1.4531521
      %v1395 = vadd.f32 %v1393, -1.4531521
      %v1396 = vmul.f32 %v1394, %v1389
      %v1397 = vmul.f32 %v1395, %v1391
      %v1398 = vadd.f32 %v1396, 1.4214138
      %v1399 = vadd.f32 %v1397, 1.4214138
      %v1400 = vmul.f32 %v1398, %v1389
      %v1401 = vmul.f32 %v1399, %v1391
      %v1402 = vadd.f32 %v1400, -0.28449672
      %v1403 = vadd.f32 %v1401, -0.28449672
      %v1404 = vmul.f32 %v1402, %v1389
      %v1405 = vmul.f32 %v1403, %v1391
      %v1406 = vadd.f32 %v1404, 0.2548296
      %v1407 = vadd.f32 %v1405, 0.2548296
      %v1408 = vmul.f32 %v1406, %v1389
      %v1409 = vmul.f32 %v1407, %v1391
      %v1410 = vsub.f32 0.0, %v1382
      %v1411 = vsub.f32 0.0, %v1383
      %v1412 = vmul.f32 %v1410, %v1382
      %v1413 = vmul.f32 %v1411, %v1383
      %v1414 = vmul.f32 %v1412, 1.442695
      %v1415 = vpow.pop %v1414
      %v1416 = vmul.f32 %v1413, 1.442695
      %v1417 = vpow.pop %v1416
      %v1418 = vmul.f32 %v1408, %v1415
      %v1419 = vmul.f32 %v1409, %v1417
      %v1420 = vsub.f32 1.0, %v1418
      %v1421 = vsub.f32 1.0, %v1419
      %vm1422 = vcmp.ge.f32.partialorder %v1380, 0.0
      %vm1423 = vcmp.ge.f32.partialorder %v1381, 0.0
      %v1424 = vsub.f32 0.0, %v1420
      %v1425 = vsub.f32 0.0, %v1421
      %v1426 = vsel %vm1422, %v1420, %v1424
      %v1427 = vsel %vm1423, %v1421, %v1425
      %v1428 = vadd.f32 %v1426, 1.0
      %v1429 = vadd.f32 %v1427, 1.0
      %v1430 = vmul.f32 %v1378, %v1428
      %v1431 = vmul.f32 %v1379, %v1429
      %v1432 = vlaneseq
      %v1433 = vshrl.u32 %v1432, 7
      %v1434 = vsub.s32 7, %v1433
      %v1435 = vrot.slane %v301, %v1434
      %vm1436 = vcmask 523264
      %v1438 = vsel %vm1436, %v1430, 0
      %v1441 = vsel %vm1436, %v1431, 0
      %1443 = vmatprep.subr.mxu0 0.0
      %1444 = vmatpush1.msra.mxu0 %v379
      %1445 = vmatprep.subr.mxu0 0.0
      %1446 = vmatpush1.msra.mxu0 %v380
      %1447 = vmatprep.subr.mxu0 0.0
      %1448 = vmatpush1.msra.mxu0 %v381
      %1449 = vmatprep.subr.mxu0 0.0
      %1450 = vmatpush1.msra.mxu0 %v382
      %1451 = vmatprep.subr.mxu0 0.0
      %1452 = vmatpush1.msra.mxu0 %v383
      %1453 = vmatprep.subr.mxu0 0.0
      %1454 = vmatpush1.msra.mxu0 %v384
      %1455 = vmatprep.subr.mxu0 0.0
      %1456 = vmatpush1.msra.mxu0 %v385
      %1457 = vmatprep.subr.mxu0 0.0
      %1458 = vmatpush1.msra.mxu0 %v386
      %1459 = vmatprep.subr.mxu0 0.0
      %1460 = vmatpush1.msra.mxu0 0.0
      %1461 = vmatprep.subr.mxu0 0.0
      %1462 = vmatpush1.msra.mxu0 0.0
      %1463 = vmatprep.subr.mxu0 0.0
      %1464 = vmatpush1.msra.mxu0 0.0
      %1465 = vmatprep.subr.mxu0 0.0
      %1466 = vmatpush1.msra.mxu0 0.0
      %1467 = vmatprep.subr.mxu0 0.0
      %1468 = vmatpush1.msra.mxu0 0.0
      %1469 = vmatprep.subr.mxu0 0.0
      %1470 = vmatpush1.msra.mxu0 0.0
      %1471 = vmatprep.subr.mxu0 0.0
      %1472 = vmatpush1.msra.mxu0 0.0
      %1473 = vmatprep.subr.mxu0 0.0
      %1474 = vmatpush1.msra.mxu0 0.0
      %1475 = vmatprep.subr.mxu0 0.0
      %1476 = vmatpush1.msra.mxu0 0.0
      %1477 = vmatprep.subr.mxu0 0.0
      %1478 = vmatpush1.msra.mxu0 0.0
      %1479 = vmatprep.subr.mxu0 0.0
      %1480 = vmatpush1.msra.mxu0 0.0
      %1481 = vmatprep.subr.mxu0 0.0
      %1482 = vmatpush1.msra.mxu0 0.0
      %1483 = vmatprep.subr.mxu0 0.0
      %1484 = vmatpush1.msra.mxu0 0.0
      %1485 = vmatprep.subr.mxu0 0.0
      %1486 = vmatpush1.msra.mxu0 0.0
      %1487 = vmatprep.subr.mxu0 0.0
      %1488 = vmatpush1.msra.mxu0 0.0
      %1489 = vmatprep.subr.mxu0 0.0
      %1490 = vmatpush1.msra.mxu0 0.0
      %1491 = vmatprep.subr.mxu0 0.0
      %1492 = vmatpush1.msra.mxu0 0.0
      %1493 = vmatprep.subr.mxu0 0.0
      %1494 = vmatpush1.msra.mxu0 0.0
      %1495 = vmatprep.subr.mxu0 0.0
      %1496 = vmatpush1.msra.mxu0 0.0
      %1497 = vmatprep.subr.mxu0 0.0
      %1498 = vmatpush1.msra.mxu0 0.0
      %1499 = vmatprep.subr.mxu0 0.0
      %1500 = vmatpush1.msra.mxu0 0.0
      %1501 = vmatprep.subr.mxu0 0.0
      %1502 = vmatpush1.msra.mxu0 0.0
      %1503 = vmatprep.subr.mxu0 0.0
      %1504 = vmatpush1.msra.mxu0 0.0
      %1505 = vmatprep.subr.mxu0 0.0
      %1506 = vmatpush1.msra.mxu0 0.0
      %1507 = vmatprep.mubr.f32.mxu0 0.0
      %1508 = vmatmul.mubr.f32.gmra.mrb[0].mxu0 %v1438
      %v1509 = vpop.f32.mrb[0].mxu0
      %v1510 = vadd.f32 %v1435, %v1509
      %v1511 = vpop.f32.mrb[0].mxu0
      %1512 = vmatprep.mubr.f32.mxu0 0.0
      %1513 = vmatmul.mubr.f32.gmra.mrb[0].mxu0 %v1441
      %v1514 = vpop.f32.mrb[0].mxu0
      %v1515 = vadd.f32 %v1435, %v1514
      %v1516 = vpop.f32.mrb[0].mxu0
      %1517 = vdwg.mxu0
      %v1518 = vadd.f32 %v1510, %v1291
      %v1519 = vadd.f32 %v1515, %v1292
      %v1520 = vsel %vm306, %v1518, 0.0
      %1521 = vadd.xlane.f32.xlu0 %v1520
      %v1522 = vpop.xlane.xlu0 %1521
      %v1523 = vsel %vm306, %v1519, 0.0
      %1524 = vadd.xlane.f32.xlu0 %v1523
      %v1525 = vpop.xlane.xlu0 %1524
      %v1526 = vmul.f32 %v1522, %v313
      %v1527 = vmul.f32 %v1525, %v313
      %v1528 = vsub.f32 %v1518, %v1526
      %v1529 = vsub.f32 %v1519, %v1527
      %v1530 = vmul.f32 %v1528, %v1528
      %v1531 = vmul.f32 %v1529, %v1529
      %v1532 = vsel %vm306, %v1530, 0.0
      %1533 = vadd.xlane.f32.xlu0 %v1532
      %v1534 = vpop.xlane.xlu0 %1533
      %v1535 = vsel %vm306, %v1531, 0.0
      %1536 = vadd.xlane.f32.xlu0 %v1535
      %v1537 = vpop.xlane.xlu0 %1536
      %v1538 = vmul.f32 %v1534, %v313
      %v1539 = vmul.f32 %v1537, %v313
      %v1540 = vadd.f32 %v1538, 1e-12
      %v1541 = vadd.f32 %v1539, 1e-12
      %v1542 = vrsqrt.pop %v1540
      %v1543 = vrsqrt.pop %v1541
      %v1544 = vmul.f32 %v1528, %v1542
      %v1545 = vmul.f32 %v1529, %v1543
      %v1546 = vlaneseq
      %v1547 = vshrl.u32 %v1546, 7
      %v1548 = vsub.s32 0, %v1547
      %v1549 = vrot.slane %v302, %v1548
      %v1550 = vmul.f32 %v1544, %v1549
      %v1551 = vmul.f32 %v1545, %v1549
      %v1552 = vlaneseq
      %v1553 = vshrl.u32 %v1552, 7
      %v1554 = vsub.s32 1, %v1553
      %v1555 = vrot.slane %v302, %v1554
      %v1556 = vadd.f32 %v1550, %v1555
      %v1557 = vadd.f32 %v1551, %v1555
      %s1558 = scalar_lea.vmem %s285, 64
      %v1559 = vld [vmem:[%s1558] sm:$0xff]
      %v1560 = vld [vmem:[%s1558 + $0x8] sm:$0xff]
      %v1561 = vld [vmem:[%s1558 + $0x10] sm:$0xff]
      %v1562 = vld [vmem:[%s1558 + $0x18] sm:$0xff]
      %v1563 = vld [vmem:[%s1558 + $0x20] sm:$0xff]
      %v1564 = vld [vmem:[%s1558 + $0x28] sm:$0xff]
      %v1565 = vld [vmem:[%s1558 + $0x30] sm:$0xff]
      %v1566 = vld [vmem:[%s1558 + $0x38] sm:$0xff]
      %s1567 = scalar_lea.vmem %s290, 64
      %v1568 = vld [vmem:[%s1567] sm:$0xff]
      %v1569 = vld [vmem:[%s1567 + $0x8] sm:$0xff]
      %v1570 = vld [vmem:[%s1567 + $0x10] sm:$0xff]
      %v1571 = vld [vmem:[%s1567 + $0x18] sm:$0xff]
      %v1572 = vld [vmem:[%s1567 + $0x20] sm:$0xff]
      %v1573 = vld [vmem:[%s1567 + $0x28] sm:$0xff]
      %v1574 = vld [vmem:[%s1567 + $0x30] sm:$0xff]
      %v1575 = vld [vmem:[%s1567 + $0x38] sm:$0xff]
      %v1576 = vlaneseq
      %v1577 = vshrl.u32 %v1576, 7
      %v1578 = vsub.s32 2, %v1577
      %v1579 = vrot.slane %v302, %v1578
      %v1581 = vsel %vm306, %v1556, 0
      %v1584 = vsel %vm306, %v1557, 0
      %1586 = vmatprep.subr.mxu0 0.0
      %1587 = vmatpush1.msra.mxu0 %v1559
      %1588 = vmatprep.subr.mxu0 0.0
      %1589 = vmatpush1.msra.mxu0 %v1561
      %1590 = vmatprep.subr.mxu0 0.0
      %1591 = vmatpush1.msra.mxu0 %v1563
      %1592 = vmatprep.subr.mxu0 0.0
      %1593 = vmatpush1.msra.mxu0 %v1565
      %1594 = vmatprep.subr.mxu0 0.0
      %1595 = vmatpush1.msra.mxu0 0.0
      %1596 = vmatprep.subr.mxu0 0.0
      %1597 = vmatpush1.msra.mxu0 0.0
      %1598 = vmatprep.subr.mxu0 0.0
      %1599 = vmatpush1.msra.mxu0 0.0
      %1600 = vmatprep.subr.mxu0 0.0
      %1601 = vmatpush1.msra.mxu0 0.0
      %1602 = vmatprep.subr.mxu0 0.0
      %1603 = vmatpush1.msra.mxu0 0.0
      %1604 = vmatprep.subr.mxu0 0.0
      %1605 = vmatpush1.msra.mxu0 0.0
      %1606 = vmatprep.subr.mxu0 0.0
      %1607 = vmatpush1.msra.mxu0 0.0
      %1608 = vmatprep.subr.mxu0 0.0
      %1609 = vmatpush1.msra.mxu0 0.0
      %1610 = vmatprep.subr.mxu0 0.0
      %1611 = vmatpush1.msra.mxu0 0.0
      %1612 = vmatprep.subr.mxu0 0.0
      %1613 = vmatpush1.msra.mxu0 0.0
      %1614 = vmatprep.subr.mxu0 0.0
      %1615 = vmatpush1.msra.mxu0 0.0
      %1616 = vmatprep.subr.mxu0 0.0
      %1617 = vmatpush1.msra.mxu0 0.0
      %1618 = vmatprep.subr.mxu0 0.0
      %1619 = vmatpush1.msra.mxu0 0.0
      %1620 = vmatprep.subr.mxu0 0.0
      %1621 = vmatpush1.msra.mxu0 0.0
      %1622 = vmatprep.subr.mxu0 0.0
      %1623 = vmatpush1.msra.mxu0 0.0
      %1624 = vmatprep.subr.mxu0 0.0
      %1625 = vmatpush1.msra.mxu0 0.0
      %1626 = vmatprep.subr.mxu0 0.0
      %1627 = vmatpush1.msra.mxu0 0.0
      %1628 = vmatprep.subr.mxu0 0.0
      %1629 = vmatpush1.msra.mxu0 0.0
      %1630 = vmatprep.subr.mxu0 0.0
      %1631 = vmatpush1.msra.mxu0 0.0
      %1632 = vmatprep.subr.mxu0 0.0
      %1633 = vmatpush1.msra.mxu0 0.0
      %1634 = vmatprep.subr.mxu0 0.0
      %1635 = vmatpush1.msra.mxu0 0.0
      %1636 = vmatprep.subr.mxu0 0.0
      %1637 = vmatpush1.msra.mxu0 0.0
      %1638 = vmatprep.subr.mxu0 0.0
      %1639 = vmatpush1.msra.mxu0 0.0
      %1640 = vmatprep.subr.mxu0 0.0
      %1641 = vmatpush1.msra.mxu0 0.0
      %1642 = vmatprep.subr.mxu0 0.0
      %1643 = vmatpush1.msra.mxu0 0.0
      %1644 = vmatprep.subr.mxu0 0.0
      %1645 = vmatpush1.msra.mxu0 0.0
      %1646 = vmatprep.subr.mxu0 0.0
      %1647 = vmatpush1.msra.mxu0 0.0
      %1648 = vmatprep.subr.mxu0 0.0
      %1649 = vmatpush1.msra.mxu0 0.0
      %1650 = vmatprep.mubr.f32.mxu0 0.0
      %1651 = vmatmul.mubr.f32.gmra.mrb[0].mxu0 %v1581
      %v1652 = vpop.f32.mrb[0].mxu0
      %v1653 = vadd.f32 %v1579, %v1652
      %v1654 = vpop.f32.mrb[0].mxu0
      %1655 = vmatprep.mubr.f32.mxu0 0.0
      %1656 = vmatmul.mubr.f32.gmra.mrb[0].mxu0 %v1584
      %v1657 = vpop.f32.mrb[0].mxu0
      %v1658 = vadd.f32 %v1579, %v1657
      %v1659 = vpop.f32.mrb[0].mxu0
      %1660 = vdwg.mxu0
      %1663 = vrot.lane.b32.xlu0 %v1653, 112
      %v1664 = vpop.permute.xlu0 %1663
      %1665 = vrot.lane.b32.xlu0 %v1658, 112
      %v1666 = vpop.permute.xlu0 %1665
      %1667 = vrot.lane.b32.xlu0 %v1653, 96
      %v1668 = vpop.permute.xlu0 %1667
      %v1669 = vsel %vm490, %v1653, 0
      %v1671 = vsel %vm490, %v1668, 0
      %1673 = vmatprep.subr.mxu0 0.0
      %1674 = vmatpush1.xpose.msra.mxu0 %v1671
      %1675 = vmatprep.subr.mxu0 0.0
      %1676 = vmatpush1.xpose.msra.mxu0 0.0
      %1677 = vmatprep.subr.mxu0 0.0
      %1678 = vmatpush1.xpose.msra.mxu0 0.0
      %1679 = vmatprep.subr.mxu0 0.0
      %1680 = vmatpush1.xpose.msra.mxu0 0.0
      %1681 = vmatprep.subr.mxu0 0.0
      %1682 = vmatpush1.xpose.msra.mxu0 0.0
      %1683 = vmatprep.subr.mxu0 0.0
      %1684 = vmatpush1.xpose.msra.mxu0 0.0
      %1685 = vmatprep.subr.mxu0 0.0
      %1686 = vmatpush1.xpose.msra.mxu0 0.0
      %1687 = vmatprep.subr.mxu0 0.0
      %1688 = vmatpush1.xpose.msra.mxu0 0.0
      %1689 = vmatprep.subr.mxu0 0.0
      %1690 = vmatpush1.xpose.msra.mxu0 0.0
      %1691 = vmatprep.subr.mxu0 0.0
      %1692 = vmatpush1.xpose.msra.mxu0 0.0
      %1693 = vmatprep.subr.mxu0 0.0
      %1694 = vmatpush1.xpose.msra.mxu0 0.0
      %1695 = vmatprep.subr.mxu0 0.0
      %1696 = vmatpush1.xpose.msra.mxu0 0.0
      %1697 = vmatprep.subr.mxu0 0.0
      %1698 = vmatpush1.xpose.msra.mxu0 0.0
      %1699 = vmatprep.subr.mxu0 0.0
      %1700 = vmatpush1.xpose.msra.mxu0 0.0
      %1701 = vmatprep.subr.mxu0 0.0
      %1702 = vmatpush1.xpose.msra.mxu0 0.0
      %1703 = vmatprep.subr.mxu0 0.0
      %1704 = vmatpush1.xpose.msra.mxu0 0.0
      %1705 = vmatprep.subr.mxu0 0.0
      %1706 = vmatpush1.xpose.msra.mxu0 0.0
      %1707 = vmatprep.subr.mxu0 0.0
      %1708 = vmatpush1.xpose.msra.mxu0 0.0
      %1709 = vmatprep.subr.mxu0 0.0
      %1710 = vmatpush1.xpose.msra.mxu0 0.0
      %1711 = vmatprep.subr.mxu0 0.0
      %1712 = vmatpush1.xpose.msra.mxu0 0.0
      %1713 = vmatprep.subr.mxu0 0.0
      %1714 = vmatpush1.xpose.msra.mxu0 0.0
      %1715 = vmatprep.subr.mxu0 0.0
      %1716 = vmatpush1.xpose.msra.mxu0 0.0
      %1717 = vmatprep.subr.mxu0 0.0
      %1718 = vmatpush1.xpose.msra.mxu0 0.0
      %1719 = vmatprep.subr.mxu0 0.0
      %1720 = vmatpush1.xpose.msra.mxu0 0.0
      %1721 = vmatprep.subr.mxu0 0.0
      %1722 = vmatpush1.xpose.msra.mxu0 0.0
      %1723 = vmatprep.subr.mxu0 0.0
      %1724 = vmatpush1.xpose.msra.mxu0 0.0
      %1725 = vmatprep.subr.mxu0 0.0
      %1726 = vmatpush1.xpose.msra.mxu0 0.0
      %1727 = vmatprep.subr.mxu0 0.0
      %1728 = vmatpush1.xpose.msra.mxu0 0.0
      %1729 = vmatprep.subr.mxu0 0.0
      %1730 = vmatpush1.xpose.msra.mxu0 0.0
      %1731 = vmatprep.subr.mxu0 0.0
      %1732 = vmatpush1.xpose.msra.mxu0 0.0
      %1733 = vmatprep.subr.mxu0 0.0
      %1734 = vmatpush1.xpose.msra.mxu0 0.0
      %1735 = vmatprep.subr.mxu0 0.0
      %1736 = vmatpush1.xpose.msra.mxu0 0.0
      %1737 = vmatprep.mubr.f32.mxu0 0.0
      %1738 = vmatmul.mubr.f32.gmra.mrb[0].mxu0 %v1669
      %v1739 = vpop.f32.mrb[0].mxu0
      %v1740 = vadd.f32 %v481, %v1739
      %v1741 = vpop.f32.mrb[0].mxu0
      %1742 = vdwg.mxu0
      %1743 = vrot.lane.b32.xlu0 %v1658, 96
      %v1744 = vpop.permute.xlu0 %1743
      %v1745 = vsel %vm490, %v1658, 0
      %v1747 = vsel %vm490, %v1744, 0
      %1749 = vmatprep.subr.mxu0 0.0
      %1750 = vmatpush1.xpose.msra.mxu0 %v1747
      %1751 = vmatprep.subr.mxu0 0.0
      %1752 = vmatpush1.xpose.msra.mxu0 0.0
      %1753 = vmatprep.subr.mxu0 0.0
      %1754 = vmatpush1.xpose.msra.mxu0 0.0
      %1755 = vmatprep.subr.mxu0 0.0
      %1756 = vmatpush1.xpose.msra.mxu0 0.0
      %1757 = vmatprep.subr.mxu0 0.0
      %1758 = vmatpush1.xpose.msra.mxu0 0.0
      %1759 = vmatprep.subr.mxu0 0.0
      %1760 = vmatpush1.xpose.msra.mxu0 0.0
      %1761 = vmatprep.subr.mxu0 0.0
      %1762 = vmatpush1.xpose.msra.mxu0 0.0
      %1763 = vmatprep.subr.mxu0 0.0
      %1764 = vmatpush1.xpose.msra.mxu0 0.0
      %1765 = vmatprep.subr.mxu0 0.0
      %1766 = vmatpush1.xpose.msra.mxu0 0.0
      %1767 = vmatprep.subr.mxu0 0.0
      %1768 = vmatpush1.xpose.msra.mxu0 0.0
      %1769 = vmatprep.subr.mxu0 0.0
      %1770 = vmatpush1.xpose.msra.mxu0 0.0
      %1771 = vmatprep.subr.mxu0 0.0
      %1772 = vmatpush1.xpose.msra.mxu0 0.0
      %1773 = vmatprep.subr.mxu0 0.0
      %1774 = vmatpush1.xpose.msra.mxu0 0.0
      %1775 = vmatprep.subr.mxu0 0.0
      %1776 = vmatpush1.xpose.msra.mxu0 0.0
      %1777 = vmatprep.subr.mxu0 0.0
      %1778 = vmatpush1.xpose.msra.mxu0 0.0
      %1779 = vmatprep.subr.mxu0 0.0
      %1780 = vmatpush1.xpose.msra.mxu0 0.0
      %1781 = vmatprep.subr.mxu0 0.0
      %1782 = vmatpush1.xpose.msra.mxu0 0.0
      %1783 = vmatprep.subr.mxu0 0.0
      %1784 = vmatpush1.xpose.msra.mxu0 0.0
      %1785 = vmatprep.subr.mxu0 0.0
      %1786 = vmatpush1.xpose.msra.mxu0 0.0
      %1787 = vmatprep.subr.mxu0 0.0
      %1788 = vmatpush1.xpose.msra.mxu0 0.0
      %1789 = vmatprep.subr.mxu0 0.0
      %1790 = vmatpush1.xpose.msra.mxu0 0.0
      %1791 = vmatprep.subr.mxu0 0.0
      %1792 = vmatpush1.xpose.msra.mxu0 0.0
      %1793 = vmatprep.subr.mxu0 0.0
      %1794 = vmatpush1.xpose.msra.mxu0 0.0
      %1795 = vmatprep.subr.mxu0 0.0
      %1796 = vmatpush1.xpose.msra.mxu0 0.0
      %1797 = vmatprep.subr.mxu0 0.0
      %1798 = vmatpush1.xpose.msra.mxu0 0.0
      %1799 = vmatprep.subr.mxu0 0.0
      %1800 = vmatpush1.xpose.msra.mxu0 0.0
      %1801 = vmatprep.subr.mxu0 0.0
      %1802 = vmatpush1.xpose.msra.mxu0 0.0
      %1803 = vmatprep.subr.mxu0 0.0
      %1804 = vmatpush1.xpose.msra.mxu0 0.0
      %1805 = vmatprep.subr.mxu0 0.0
      %1806 = vmatpush1.xpose.msra.mxu0 0.0
      %1807 = vmatprep.subr.mxu0 0.0
      %1808 = vmatpush1.xpose.msra.mxu0 0.0
      %1809 = vmatprep.subr.mxu0 0.0
      %1810 = vmatpush1.xpose.msra.mxu0 0.0
      %1811 = vmatprep.subr.mxu0 0.0
      %1812 = vmatpush1.xpose.msra.mxu0 0.0
      %1813 = vmatprep.mubr.f32.mxu0 0.0
      %1814 = vmatmul.mubr.f32.gmra.mrb[0].mxu0 %v1745
      %v1815 = vpop.f32.mrb[0].mxu0
      %v1816 = vadd.f32 %v485, %v1815
      %v1817 = vpop.f32.mrb[0].mxu0
      %1818 = vdwg.mxu0
      %1819 = vrot.lane.b32.xlu0 %v1664, 96
      %v1820 = vpop.permute.xlu0 %1819
      %v1821 = vsel %vm490, %v1664, 0
      %v1823 = vsel %vm490, %v1820, 0
      %1825 = vmatprep.subr.mxu0 0.0
      %1826 = vmatpush1.xpose.msra.mxu0 %v1823
      %1827 = vmatprep.subr.mxu0 0.0
      %1828 = vmatpush1.xpose.msra.mxu0 0.0
      %1829 = vmatprep.subr.mxu0 0.0
      %1830 = vmatpush1.xpose.msra.mxu0 0.0
      %1831 = vmatprep.subr.mxu0 0.0
      %1832 = vmatpush1.xpose.msra.mxu0 0.0
      %1833 = vmatprep.subr.mxu0 0.0
      %1834 = vmatpush1.xpose.msra.mxu0 0.0
      %1835 = vmatprep.subr.mxu0 0.0
      %1836 = vmatpush1.xpose.msra.mxu0 0.0
      %1837 = vmatprep.subr.mxu0 0.0
      %1838 = vmatpush1.xpose.msra.mxu0 0.0
      %1839 = vmatprep.subr.mxu0 0.0
      %1840 = vmatpush1.xpose.msra.mxu0 0.0
      %1841 = vmatprep.subr.mxu0 0.0
      %1842 = vmatpush1.xpose.msra.mxu0 0.0
      %1843 = vmatprep.subr.mxu0 0.0
      %1844 = vmatpush1.xpose.msra.mxu0 0.0
      %1845 = vmatprep.subr.mxu0 0.0
      %1846 = vmatpush1.xpose.msra.mxu0 0.0
      %1847 = vmatprep.subr.mxu0 0.0
      %1848 = vmatpush1.xpose.msra.mxu0 0.0
      %1849 = vmatprep.subr.mxu0 0.0
      %1850 = vmatpush1.xpose.msra.mxu0 0.0
      %1851 = vmatprep.subr.mxu0 0.0
      %1852 = vmatpush1.xpose.msra.mxu0 0.0
      %1853 = vmatprep.subr.mxu0 0.0
      %1854 = vmatpush1.xpose.msra.mxu0 0.0
      %1855 = vmatprep.subr.mxu0 0.0
      %1856 = vmatpush1.xpose.msra.mxu0 0.0
      %1857 = vmatprep.subr.mxu0 0.0
      %1858 = vmatpush1.xpose.msra.mxu0 0.0
      %1859 = vmatprep.subr.mxu0 0.0
      %1860 = vmatpush1.xpose.msra.mxu0 0.0
      %1861 = vmatprep.subr.mxu0 0.0
      %1862 = vmatpush1.xpose.msra.mxu0 0.0
      %1863 = vmatprep.subr.mxu0 0.0
      %1864 = vmatpush1.xpose.msra.mxu0 0.0
      %1865 = vmatprep.subr.mxu0 0.0
      %1866 = vmatpush1.xpose.msra.mxu0 0.0
      %1867 = vmatprep.subr.mxu0 0.0
      %1868 = vmatpush1.xpose.msra.mxu0 0.0
      %1869 = vmatprep.subr.mxu0 0.0
      %1870 = vmatpush1.xpose.msra.mxu0 0.0
      %1871 = vmatprep.subr.mxu0 0.0
      %1872 = vmatpush1.xpose.msra.mxu0 0.0
      %1873 = vmatprep.subr.mxu0 0.0
      %1874 = vmatpush1.xpose.msra.mxu0 0.0
      %1875 = vmatprep.subr.mxu0 0.0
      %1876 = vmatpush1.xpose.msra.mxu0 0.0
      %1877 = vmatprep.subr.mxu0 0.0
      %1878 = vmatpush1.xpose.msra.mxu0 0.0
      %1879 = vmatprep.subr.mxu0 0.0
      %1880 = vmatpush1.xpose.msra.mxu0 0.0
      %1881 = vmatprep.subr.mxu0 0.0
      %1882 = vmatpush1.xpose.msra.mxu0 0.0
      %1883 = vmatprep.subr.mxu0 0.0
      %1884 = vmatpush1.xpose.msra.mxu0 0.0
      %1885 = vmatprep.subr.mxu0 0.0
      %1886 = vmatpush1.xpose.msra.mxu0 0.0
      %1887 = vmatprep.subr.mxu0 0.0
      %1888 = vmatpush1.xpose.msra.mxu0 0.0
      %1889 = vmatprep.mubr.f32.mxu0 0.0
      %1890 = vmatmul.mubr.f32.gmra.mrb[0].mxu0 %v1821
      %v1891 = vpop.f32.mrb[0].mxu0
      %v1892 = vadd.f32 %v481, %v1891
      %v1893 = vpop.f32.mrb[0].mxu0
      %1894 = vdwg.mxu0
      %1895 = vrot.lane.b32.xlu0 %v1666, 96
      %v1896 = vpop.permute.xlu0 %1895
      %v1897 = vsel %vm490, %v1666, 0
      %v1899 = vsel %vm490, %v1896, 0
      %1901 = vmatprep.subr.mxu0 0.0
      %1902 = vmatpush1.xpose.msra.mxu0 %v1899
      %1903 = vmatprep.subr.mxu0 0.0
      %1904 = vmatpush1.xpose.msra.mxu0 0.0
      %1905 = vmatprep.subr.mxu0 0.0
      %1906 = vmatpush1.xpose.msra.mxu0 0.0
      %1907 = vmatprep.subr.mxu0 0.0
      %1908 = vmatpush1.xpose.msra.mxu0 0.0
      %1909 = vmatprep.subr.mxu0 0.0
      %1910 = vmatpush1.xpose.msra.mxu0 0.0
      %1911 = vmatprep.subr.mxu0 0.0
      %1912 = vmatpush1.xpose.msra.mxu0 0.0
      %1913 = vmatprep.subr.mxu0 0.0
      %1914 = vmatpush1.xpose.msra.mxu0 0.0
      %1915 = vmatprep.subr.mxu0 0.0
      %1916 = vmatpush1.xpose.msra.mxu0 0.0
      %1917 = vmatprep.subr.mxu0 0.0
      %1918 = vmatpush1.xpose.msra.mxu0 0.0
      %1919 = vmatprep.subr.mxu0 0.0
      %1920 = vmatpush1.xpose.msra.mxu0 0.0
      %1921 = vmatprep.subr.mxu0 0.0
      %1922 = vmatpush1.xpose.msra.mxu0 0.0
      %1923 = vmatprep.subr.mxu0 0.0
      %1924 = vmatpush1.xpose.msra.mxu0 0.0
      %1925 = vmatprep.subr.mxu0 0.0
      %1926 = vmatpush1.xpose.msra.mxu0 0.0
      %1927 = vmatprep.subr.mxu0 0.0
      %1928 = vmatpush1.xpose.msra.mxu0 0.0
      %1929 = vmatprep.subr.mxu0 0.0
      %1930 = vmatpush1.xpose.msra.mxu0 0.0
      %1931 = vmatprep.subr.mxu0 0.0
      %1932 = vmatpush1.xpose.msra.mxu0 0.0
      %1933 = vmatprep.subr.mxu0 0.0
      %1934 = vmatpush1.xpose.msra.mxu0 0.0
      %1935 = vmatprep.subr.mxu0 0.0
      %1936 = vmatpush1.xpose.msra.mxu0 0.0
      %1937 = vmatprep.subr.mxu0 0.0
      %1938 = vmatpush1.xpose.msra.mxu0 0.0
      %1939 = vmatprep.subr.mxu0 0.0
      %1940 = vmatpush1.xpose.msra.mxu0 0.0
      %1941 = vmatprep.subr.mxu0 0.0
      %1942 = vmatpush1.xpose.msra.mxu0 0.0
      %1943 = vmatprep.subr.mxu0 0.0
      %1944 = vmatpush1.xpose.msra.mxu0 0.0
      %1945 = vmatprep.subr.mxu0 0.0
      %1946 = vmatpush1.xpose.msra.mxu0 0.0
      %1947 = vmatprep.subr.mxu0 0.0
      %1948 = vmatpush1.xpose.msra.mxu0 0.0
      %1949 = vmatprep.subr.mxu0 0.0
      %1950 = vmatpush1.xpose.msra.mxu0 0.0
      %1951 = vmatprep.subr.mxu0 0.0
      %1952 = vmatpush1.xpose.msra.mxu0 0.0
      %1953 = vmatprep.subr.mxu0 0.0
      %1954 = vmatpush1.xpose.msra.mxu0 0.0
      %1955 = vmatprep.subr.mxu0 0.0
      %1956 = vmatpush1.xpose.msra.mxu0 0.0
      %1957 = vmatprep.subr.mxu0 0.0
      %1958 = vmatpush1.xpose.msra.mxu0 0.0
      %1959 = vmatprep.subr.mxu0 0.0
      %1960 = vmatpush1.xpose.msra.mxu0 0.0
      %1961 = vmatprep.subr.mxu0 0.0
      %1962 = vmatpush1.xpose.msra.mxu0 0.0
      %1963 = vmatprep.subr.mxu0 0.0
      %1964 = vmatpush1.xpose.msra.mxu0 0.0
      %1965 = vmatprep.mubr.f32.mxu0 0.0
      %1966 = vmatmul.mubr.f32.gmra.mrb[0].mxu0 %v1897
      %v1967 = vpop.f32.mrb[0].mxu0
      %v1968 = vadd.f32 %v485, %v1967
      %v1969 = vpop.f32.mrb[0].mxu0
      %1970 = vdwg.mxu0
      %v1971 = vsel %vm793, %v1740, -inf
      %1972 = vmax.xlane.f32.xlu0 %v1971
      %v1973 = vpop.xlane.xlu0 %1972
      %v1974 = vsel %vm793, %v1816, -inf
      %1975 = vmax.xlane.f32.xlu0 %v1974
      %v1976 = vpop.xlane.xlu0 %1975
      %v1977 = vsel %vm793, %v1892, -inf
      %1978 = vmax.xlane.f32.xlu0 %v1977
      %v1979 = vpop.xlane.xlu0 %1978
      %v1980 = vsel %vm793, %v1968, -inf
      %1981 = vmax.xlane.f32.xlu0 %v1980
      %v1982 = vpop.xlane.xlu0 %1981
      %v1983 = vsub.f32 %v1740, %v1973
      %v1984 = vsub.f32 %v1816, %v1976
      %v1985 = vsub.f32 %v1892, %v1979
      %v1986 = vsub.f32 %v1968, %v1982
      %v1987 = vmul.f32 %v1983, 1.442695
      %v1988 = vpow.pop %v1987
      %v1989 = vmul.f32 %v1984, 1.442695
      %v1990 = vpow.pop %v1989
      %v1991 = vmul.f32 %v1985, 1.442695
      %v1992 = vpow.pop %v1991
      %v1993 = vmul.f32 %v1986, 1.442695
      %v1994 = vpow.pop %v1993
      %v1995 = vsel %vm793, %v1988, 0.0
      %1996 = vadd.xlane.f32.xlu0 %v1995
      %v1997 = vpop.xlane.xlu0 %1996
      %v1998 = vsel %vm793, %v1990, 0.0
      %1999 = vadd.xlane.f32.xlu0 %v1998
      %v2000 = vpop.xlane.xlu0 %1999
      %v2001 = vsel %vm793, %v1992, 0.0
      %2002 = vadd.xlane.f32.xlu0 %v2001
      %v2003 = vpop.xlane.xlu0 %2002
      %v2004 = vsel %vm793, %v1994, 0.0
      %2005 = vadd.xlane.f32.xlu0 %v2004
      %v2006 = vpop.xlane.xlu0 %2005
      %v2007 = vrcp.pop %v1997
      %v2008 = vmul.f32 %v1988, %v2007
      %v2009 = vrcp.pop %v2000
      %v2010 = vmul.f32 %v1990, %v2009
      %v2011 = vrcp.pop %v2003
      %v2012 = vmul.f32 %v1992, %v2011
      %v2013 = vrcp.pop %v2006
      %v2014 = vmul.f32 %v1994, %v2013
      %2015 = vrot.lane.b32.xlu0 %v1653, 64
      %v2016 = vpop.permute.xlu0 %2015
      %v2019 = vsel %vm793, %v2008, 0
      %2021 = vmatprep.subr.mxu0 0.0
      %2022 = vmatpush1.msra.mxu0 %v2016
      %2023 = vmatprep.subr.mxu0 0.0
      %2024 = vmatpush1.msra.mxu0 0.0
      %2025 = vmatprep.subr.mxu0 0.0
      %2026 = vmatpush1.msra.mxu0 0.0
      %2027 = vmatprep.subr.mxu0 0.0
      %2028 = vmatpush1.msra.mxu0 0.0
      %2029 = vmatprep.subr.mxu0 0.0
      %2030 = vmatpush1.msra.mxu0 0.0
      %2031 = vmatprep.subr.mxu0 0.0
      %2032 = vmatpush1.msra.mxu0 0.0
      %2033 = vmatprep.subr.mxu0 0.0
      %2034 = vmatpush1.msra.mxu0 0.0
      %2035 = vmatprep.subr.mxu0 0.0
      %2036 = vmatpush1.msra.mxu0 0.0
      %2037 = vmatprep.subr.mxu0 0.0
      %2038 = vmatpush1.msra.mxu0 0.0
      %2039 = vmatprep.subr.mxu0 0.0
      %2040 = vmatpush1.msra.mxu0 0.0
      %2041 = vmatprep.subr.mxu0 0.0
      %2042 = vmatpush1.msra.mxu0 0.0
      %2043 = vmatprep.subr.mxu0 0.0
      %2044 = vmatpush1.msra.mxu0 0.0
      %2045 = vmatprep.subr.mxu0 0.0
      %2046 = vmatpush1.msra.mxu0 0.0
      %2047 = vmatprep.subr.mxu0 0.0
      %2048 = vmatpush1.msra.mxu0 0.0
      %2049 = vmatprep.subr.mxu0 0.0
      %2050 = vmatpush1.msra.mxu0 0.0
      %2051 = vmatprep.subr.mxu0 0.0
      %2052 = vmatpush1.msra.mxu0 0.0
      %2053 = vmatprep.subr.mxu0 0.0
      %2054 = vmatpush1.msra.mxu0 0.0
      %2055 = vmatprep.subr.mxu0 0.0
      %2056 = vmatpush1.msra.mxu0 0.0
      %2057 = vmatprep.subr.mxu0 0.0
      %2058 = vmatpush1.msra.mxu0 0.0
      %2059 = vmatprep.subr.mxu0 0.0
      %2060 = vmatpush1.msra.mxu0 0.0
      %2061 = vmatprep.subr.mxu0 0.0
      %2062 = vmatpush1.msra.mxu0 0.0
      %2063 = vmatprep.subr.mxu0 0.0
      %2064 = vmatpush1.msra.mxu0 0.0
      %2065 = vmatprep.subr.mxu0 0.0
      %2066 = vmatpush1.msra.mxu0 0.0
      %2067 = vmatprep.subr.mxu0 0.0
      %2068 = vmatpush1.msra.mxu0 0.0
      %2069 = vmatprep.subr.mxu0 0.0
      %2070 = vmatpush1.msra.mxu0 0.0
      %2071 = vmatprep.subr.mxu0 0.0
      %2072 = vmatpush1.msra.mxu0 0.0
      %2073 = vmatprep.subr.mxu0 0.0
      %2074 = vmatpush1.msra.mxu0 0.0
      %2075 = vmatprep.subr.mxu0 0.0
      %2076 = vmatpush1.msra.mxu0 0.0
      %2077 = vmatprep.subr.mxu0 0.0
      %2078 = vmatpush1.msra.mxu0 0.0
      %2079 = vmatprep.subr.mxu0 0.0
      %2080 = vmatpush1.msra.mxu0 0.0
      %2081 = vmatprep.subr.mxu0 0.0
      %2082 = vmatpush1.msra.mxu0 0.0
      %2083 = vmatprep.subr.mxu0 0.0
      %2084 = vmatpush1.msra.mxu0 0.0
      %2085 = vmatprep.mubr.f32.mxu0 0.0
      %2086 = vmatmul.mubr.f32.gmra.mrb[0].mxu0 %v2019
      %v2087 = vpop.f32.mrb[0].mxu0
      %v2088 = vadd.f32 0.0, %v2087
      %v2089 = vpop.f32.mrb[0].mxu0
      %2090 = vdwg.mxu0
      %2091 = vrot.lane.b32.xlu0 %v1658, 64
      %v2092 = vpop.permute.xlu0 %2091
      %v2095 = vsel %vm793, %v2010, 0
      %2097 = vmatprep.subr.mxu0 0.0
      %2098 = vmatpush1.msra.mxu0 %v2092
      %2099 = vmatprep.subr.mxu0 0.0
      %2100 = vmatpush1.msra.mxu0 0.0
      %2101 = vmatprep.subr.mxu0 0.0
      %2102 = vmatpush1.msra.mxu0 0.0
      %2103 = vmatprep.subr.mxu0 0.0
      %2104 = vmatpush1.msra.mxu0 0.0
      %2105 = vmatprep.subr.mxu0 0.0
      %2106 = vmatpush1.msra.mxu0 0.0
      %2107 = vmatprep.subr.mxu0 0.0
      %2108 = vmatpush1.msra.mxu0 0.0
      %2109 = vmatprep.subr.mxu0 0.0
      %2110 = vmatpush1.msra.mxu0 0.0
      %2111 = vmatprep.subr.mxu0 0.0
      %2112 = vmatpush1.msra.mxu0 0.0
      %2113 = vmatprep.subr.mxu0 0.0
      %2114 = vmatpush1.msra.mxu0 0.0
      %2115 = vmatprep.subr.mxu0 0.0
      %2116 = vmatpush1.msra.mxu0 0.0
      %2117 = vmatprep.subr.mxu0 0.0
      %2118 = vmatpush1.msra.mxu0 0.0
      %2119 = vmatprep.subr.mxu0 0.0
      %2120 = vmatpush1.msra.mxu0 0.0
      %2121 = vmatprep.subr.mxu0 0.0
      %2122 = vmatpush1.msra.mxu0 0.0
      %2123 = vmatprep.subr.mxu0 0.0
      %2124 = vmatpush1.msra.mxu0 0.0
      %2125 = vmatprep.subr.mxu0 0.0
      %2126 = vmatpush1.msra.mxu0 0.0
      %2127 = vmatprep.subr.mxu0 0.0
      %2128 = vmatpush1.msra.mxu0 0.0
      %2129 = vmatprep.subr.mxu0 0.0
      %2130 = vmatpush1.msra.mxu0 0.0
      %2131 = vmatprep.subr.mxu0 0.0
      %2132 = vmatpush1.msra.mxu0 0.0
      %2133 = vmatprep.subr.mxu0 0.0
      %2134 = vmatpush1.msra.mxu0 0.0
      %2135 = vmatprep.subr.mxu0 0.0
      %2136 = vmatpush1.msra.mxu0 0.0
      %2137 = vmatprep.subr.mxu0 0.0
      %2138 = vmatpush1.msra.mxu0 0.0
      %2139 = vmatprep.subr.mxu0 0.0
      %2140 = vmatpush1.msra.mxu0 0.0
      %2141 = vmatprep.subr.mxu0 0.0
      %2142 = vmatpush1.msra.mxu0 0.0
      %2143 = vmatprep.subr.mxu0 0.0
      %2144 = vmatpush1.msra.mxu0 0.0
      %2145 = vmatprep.subr.mxu0 0.0
      %2146 = vmatpush1.msra.mxu0 0.0
      %2147 = vmatprep.subr.mxu0 0.0
      %2148 = vmatpush1.msra.mxu0 0.0
      %2149 = vmatprep.subr.mxu0 0.0
      %2150 = vmatpush1.msra.mxu0 0.0
      %2151 = vmatprep.subr.mxu0 0.0
      %2152 = vmatpush1.msra.mxu0 0.0
      %2153 = vmatprep.subr.mxu0 0.0
      %2154 = vmatpush1.msra.mxu0 0.0
      %2155 = vmatprep.subr.mxu0 0.0
      %2156 = vmatpush1.msra.mxu0 0.0
      %2157 = vmatprep.subr.mxu0 0.0
      %2158 = vmatpush1.msra.mxu0 0.0
      %2159 = vmatprep.subr.mxu0 0.0
      %2160 = vmatpush1.msra.mxu0 0.0
      %2161 = vmatprep.mubr.f32.mxu0 0.0
      %2162 = vmatmul.mubr.f32.gmra.mrb[0].mxu0 %v2095
      %v2163 = vpop.f32.mrb[0].mxu0
      %v2164 = vadd.f32 0.0, %v2163
      %v2165 = vpop.f32.mrb[0].mxu0
      %2166 = vdwg.mxu0
      %2167 = vrot.lane.b32.xlu0 %v1664, 64
      %v2168 = vpop.permute.xlu0 %2167
      %v2171 = vsel %vm793, %v2012, 0
      %2173 = vmatprep.subr.mxu0 0.0
      %2174 = vmatpush1.msra.mxu0 %v2168
      %2175 = vmatprep.subr.mxu0 0.0
      %2176 = vmatpush1.msra.mxu0 0.0
      %2177 = vmatprep.subr.mxu0 0.0
      %2178 = vmatpush1.msra.mxu0 0.0
      %2179 = vmatprep.subr.mxu0 0.0
      %2180 = vmatpush1.msra.mxu0 0.0
      %2181 = vmatprep.subr.mxu0 0.0
      %2182 = vmatpush1.msra.mxu0 0.0
      %2183 = vmatprep.subr.mxu0 0.0
      %2184 = vmatpush1.msra.mxu0 0.0
      %2185 = vmatprep.subr.mxu0 0.0
      %2186 = vmatpush1.msra.mxu0 0.0
      %2187 = vmatprep.subr.mxu0 0.0
      %2188 = vmatpush1.msra.mxu0 0.0
      %2189 = vmatprep.subr.mxu0 0.0
      %2190 = vmatpush1.msra.mxu0 0.0
      %2191 = vmatprep.subr.mxu0 0.0
      %2192 = vmatpush1.msra.mxu0 0.0
      %2193 = vmatprep.subr.mxu0 0.0
      %2194 = vmatpush1.msra.mxu0 0.0
      %2195 = vmatprep.subr.mxu0 0.0
      %2196 = vmatpush1.msra.mxu0 0.0
      %2197 = vmatprep.subr.mxu0 0.0
      %2198 = vmatpush1.msra.mxu0 0.0
      %2199 = vmatprep.subr.mxu0 0.0
      %2200 = vmatpush1.msra.mxu0 0.0
      %2201 = vmatprep.subr.mxu0 0.0
      %2202 = vmatpush1.msra.mxu0 0.0
      %2203 = vmatprep.subr.mxu0 0.0
      %2204 = vmatpush1.msra.mxu0 0.0
      %2205 = vmatprep.subr.mxu0 0.0
      %2206 = vmatpush1.msra.mxu0 0.0
      %2207 = vmatprep.subr.mxu0 0.0
      %2208 = vmatpush1.msra.mxu0 0.0
      %2209 = vmatprep.subr.mxu0 0.0
      %2210 = vmatpush1.msra.mxu0 0.0
      %2211 = vmatprep.subr.mxu0 0.0
      %2212 = vmatpush1.msra.mxu0 0.0
      %2213 = vmatprep.subr.mxu0 0.0
      %2214 = vmatpush1.msra.mxu0 0.0
      %2215 = vmatprep.subr.mxu0 0.0
      %2216 = vmatpush1.msra.mxu0 0.0
      %2217 = vmatprep.subr.mxu0 0.0
      %2218 = vmatpush1.msra.mxu0 0.0
      %2219 = vmatprep.subr.mxu0 0.0
      %2220 = vmatpush1.msra.mxu0 0.0
      %2221 = vmatprep.subr.mxu0 0.0
      %2222 = vmatpush1.msra.mxu0 0.0
      %2223 = vmatprep.subr.mxu0 0.0
      %2224 = vmatpush1.msra.mxu0 0.0
      %2225 = vmatprep.subr.mxu0 0.0
      %2226 = vmatpush1.msra.mxu0 0.0
      %2227 = vmatprep.subr.mxu0 0.0
      %2228 = vmatpush1.msra.mxu0 0.0
      %2229 = vmatprep.subr.mxu0 0.0
      %2230 = vmatpush1.msra.mxu0 0.0
      %2231 = vmatprep.subr.mxu0 0.0
      %2232 = vmatpush1.msra.mxu0 0.0
      %2233 = vmatprep.subr.mxu0 0.0
      %2234 = vmatpush1.msra.mxu0 0.0
      %2235 = vmatprep.subr.mxu0 0.0
      %2236 = vmatpush1.msra.mxu0 0.0
      %2237 = vmatprep.mubr.f32.mxu0 0.0
      %2238 = vmatmul.mubr.f32.gmra.mrb[0].mxu0 %v2171
      %v2239 = vpop.f32.mrb[0].mxu0
      %v2240 = vadd.f32 0.0, %v2239
      %v2241 = vpop.f32.mrb[0].mxu0
      %2242 = vdwg.mxu0
      %2243 = vrot.lane.b32.xlu0 %v1666, 64
      %v2244 = vpop.permute.xlu0 %2243
      %v2247 = vsel %vm793, %v2014, 0
      %2249 = vmatprep.subr.mxu0 0.0
      %2250 = vmatpush1.msra.mxu0 %v2244
      %2251 = vmatprep.subr.mxu0 0.0
      %2252 = vmatpush1.msra.mxu0 0.0
      %2253 = vmatprep.subr.mxu0 0.0
      %2254 = vmatpush1.msra.mxu0 0.0
      %2255 = vmatprep.subr.mxu0 0.0
      %2256 = vmatpush1.msra.mxu0 0.0
      %2257 = vmatprep.subr.mxu0 0.0
      %2258 = vmatpush1.msra.mxu0 0.0
      %2259 = vmatprep.subr.mxu0 0.0
      %2260 = vmatpush1.msra.mxu0 0.0
      %2261 = vmatprep.subr.mxu0 0.0
      %2262 = vmatpush1.msra.mxu0 0.0
      %2263 = vmatprep.subr.mxu0 0.0
      %2264 = vmatpush1.msra.mxu0 0.0
      %2265 = vmatprep.subr.mxu0 0.0
      %2266 = vmatpush1.msra.mxu0 0.0
      %2267 = vmatprep.subr.mxu0 0.0
      %2268 = vmatpush1.msra.mxu0 0.0
      %2269 = vmatprep.subr.mxu0 0.0
      %2270 = vmatpush1.msra.mxu0 0.0
      %2271 = vmatprep.subr.mxu0 0.0
      %2272 = vmatpush1.msra.mxu0 0.0
      %2273 = vmatprep.subr.mxu0 0.0
      %2274 = vmatpush1.msra.mxu0 0.0
      %2275 = vmatprep.subr.mxu0 0.0
      %2276 = vmatpush1.msra.mxu0 0.0
      %2277 = vmatprep.subr.mxu0 0.0
      %2278 = vmatpush1.msra.mxu0 0.0
      %2279 = vmatprep.subr.mxu0 0.0
      %2280 = vmatpush1.msra.mxu0 0.0
      %2281 = vmatprep.subr.mxu0 0.0
      %2282 = vmatpush1.msra.mxu0 0.0
      %2283 = vmatprep.subr.mxu0 0.0
      %2284 = vmatpush1.msra.mxu0 0.0
      %2285 = vmatprep.subr.mxu0 0.0
      %2286 = vmatpush1.msra.mxu0 0.0
      %2287 = vmatprep.subr.mxu0 0.0
      %2288 = vmatpush1.msra.mxu0 0.0
      %2289 = vmatprep.subr.mxu0 0.0
      %2290 = vmatpush1.msra.mxu0 0.0
      %2291 = vmatprep.subr.mxu0 0.0
      %2292 = vmatpush1.msra.mxu0 0.0
      %2293 = vmatprep.subr.mxu0 0.0
      %2294 = vmatpush1.msra.mxu0 0.0
      %2295 = vmatprep.subr.mxu0 0.0
      %2296 = vmatpush1.msra.mxu0 0.0
      %2297 = vmatprep.subr.mxu0 0.0
      %2298 = vmatpush1.msra.mxu0 0.0
      %2299 = vmatprep.subr.mxu0 0.0
      %2300 = vmatpush1.msra.mxu0 0.0
      %2301 = vmatprep.subr.mxu0 0.0
      %2302 = vmatpush1.msra.mxu0 0.0
      %2303 = vmatprep.subr.mxu0 0.0
      %2304 = vmatpush1.msra.mxu0 0.0
      %2305 = vmatprep.subr.mxu0 0.0
      %2306 = vmatpush1.msra.mxu0 0.0
      %2307 = vmatprep.subr.mxu0 0.0
      %2308 = vmatpush1.msra.mxu0 0.0
      %2309 = vmatprep.subr.mxu0 0.0
      %2310 = vmatpush1.msra.mxu0 0.0
      %2311 = vmatprep.subr.mxu0 0.0
      %2312 = vmatpush1.msra.mxu0 0.0
      %2313 = vmatprep.mubr.f32.mxu0 0.0
      %2314 = vmatmul.mubr.f32.gmra.mrb[0].mxu0 %v2247
      %v2315 = vpop.f32.mrb[0].mxu0
      %v2316 = vadd.f32 0.0, %v2315
      %v2317 = vpop.f32.mrb[0].mxu0
      %2318 = vdwg.mxu0
      %2321 = vrot.lane.b32.xlu0 %v2240, 16
      %v2322 = vpop.permute.xlu0 %2321
      %2323 = vrot.lane.b32.xlu0 %v2316, 16
      %v2324 = vpop.permute.xlu0 %2323
      %v2327 = vsel %vm490, %v2088, %v2322
      %v2328 = vsel %vm490, %v2164, %v2324
      %v2329 = vlaneseq
      %v2330 = vshrl.u32 %v2329, 7
      %v2331 = vsub.s32 3, %v2330
      %v2332 = vrot.slane %v302, %v2331
      %2337 = vrot.lane.b32.xlu0 %v1559, 32
      %v2338 = vpop.permute.xlu0 %2337
      %2339 = vrot.lane.b32.xlu0 %v1561, 32
      %v2340 = vpop.permute.xlu0 %2339
      %2341 = vrot.lane.b32.xlu0 %v1563, 32
      %v2342 = vpop.permute.xlu0 %2341
      %2343 = vrot.lane.b32.xlu0 %v1565, 32
      %v2344 = vpop.permute.xlu0 %2343
      %v2350 = vsel %vm306, %v2327, 0
      %v2353 = vsel %vm306, %v2328, 0
      %2355 = vmatprep.subr.mxu0 0.0
      %2356 = vmatpush1.msra.mxu0 %v2338
      %2357 = vmatprep.subr.mxu0 0.0
      %2358 = vmatpush1.msra.mxu0 %v2340
      %2359 = vmatprep.subr.mxu0 0.0
      %2360 = vmatpush1.msra.mxu0 %v2342
      %2361 = vmatprep.subr.mxu0 0.0
      %2362 = vmatpush1.msra.mxu0 %v2344
      %2363 = vmatprep.subr.mxu0 0.0
      %2364 = vmatpush1.msra.mxu0 0.0
      %2365 = vmatprep.subr.mxu0 0.0
      %2366 = vmatpush1.msra.mxu0 0.0
      %2367 = vmatprep.subr.mxu0 0.0
      %2368 = vmatpush1.msra.mxu0 0.0
      %2369 = vmatprep.subr.mxu0 0.0
      %2370 = vmatpush1.msra.mxu0 0.0
      %2371 = vmatprep.subr.mxu0 0.0
      %2372 = vmatpush1.msra.mxu0 0.0
      %2373 = vmatprep.subr.mxu0 0.0
      %2374 = vmatpush1.msra.mxu0 0.0
      %2375 = vmatprep.subr.mxu0 0.0
      %2376 = vmatpush1.msra.mxu0 0.0
      %2377 = vmatprep.subr.mxu0 0.0
      %2378 = vmatpush1.msra.mxu0 0.0
      %2379 = vmatprep.subr.mxu0 0.0
      %2380 = vmatpush1.msra.mxu0 0.0
      %2381 = vmatprep.subr.mxu0 0.0
      %2382 = vmatpush1.msra.mxu0 0.0
      %2383 = vmatprep.subr.mxu0 0.0
      %2384 = vmatpush1.msra.mxu0 0.0
      %2385 = vmatprep.subr.mxu0 0.0
      %2386 = vmatpush1.msra.mxu0 0.0
      %2387 = vmatprep.subr.mxu0 0.0
      %2388 = vmatpush1.msra.mxu0 0.0
      %2389 = vmatprep.subr.mxu0 0.0
      %2390 = vmatpush1.msra.mxu0 0.0
      %2391 = vmatprep.subr.mxu0 0.0
      %2392 = vmatpush1.msra.mxu0 0.0
      %2393 = vmatprep.subr.mxu0 0.0
      %2394 = vmatpush1.msra.mxu0 0.0
      %2395 = vmatprep.subr.mxu0 0.0
      %2396 = vmatpush1.msra.mxu0 0.0
      %2397 = vmatprep.subr.mxu0 0.0
      %2398 = vmatpush1.msra.mxu0 0.0
      %2399 = vmatprep.subr.mxu0 0.0
      %2400 = vmatpush1.msra.mxu0 0.0
      %2401 = vmatprep.subr.mxu0 0.0
      %2402 = vmatpush1.msra.mxu0 0.0
      %2403 = vmatprep.subr.mxu0 0.0
      %2404 = vmatpush1.msra.mxu0 0.0
      %2405 = vmatprep.subr.mxu0 0.0
      %2406 = vmatpush1.msra.mxu0 0.0
      %2407 = vmatprep.subr.mxu0 0.0
      %2408 = vmatpush1.msra.mxu0 0.0
      %2409 = vmatprep.subr.mxu0 0.0
      %2410 = vmatpush1.msra.mxu0 0.0
      %2411 = vmatprep.subr.mxu0 0.0
      %2412 = vmatpush1.msra.mxu0 0.0
      %2413 = vmatprep.subr.mxu0 0.0
      %2414 = vmatpush1.msra.mxu0 0.0
      %2415 = vmatprep.subr.mxu0 0.0
      %2416 = vmatpush1.msra.mxu0 0.0
      %2417 = vmatprep.subr.mxu0 0.0
      %2418 = vmatpush1.msra.mxu0 0.0
      %2419 = vmatprep.mubr.f32.mxu0 0.0
      %2420 = vmatmul.mubr.f32.gmra.mrb[0].mxu0 %v2350
      %v2421 = vpop.f32.mrb[0].mxu0
      %v2422 = vadd.f32 %v2332, %v2421
      %v2423 = vpop.f32.mrb[0].mxu0
      %2424 = vmatprep.mubr.f32.mxu0 0.0
      %2425 = vmatmul.mubr.f32.gmra.mrb[0].mxu0 %v2353
      %v2426 = vpop.f32.mrb[0].mxu0
      %v2427 = vadd.f32 %v2332, %v2426
      %v2428 = vpop.f32.mrb[0].mxu0
      %2429 = vdwg.mxu0
      %v2430 = vadd.f32 %v2422, %v1556
      %v2431 = vadd.f32 %v2427, %v1557
      %v2432 = vsel %vm306, %v2430, 0.0
      %2433 = vadd.xlane.f32.xlu0 %v2432
      %v2434 = vpop.xlane.xlu0 %2433
      %v2435 = vsel %vm306, %v2431, 0.0
      %2436 = vadd.xlane.f32.xlu0 %v2435
      %v2437 = vpop.xlane.xlu0 %2436
      %v2438 = vmul.f32 %v2434, %v313
      %v2439 = vmul.f32 %v2437, %v313
      %v2440 = vsub.f32 %v2430, %v2438
      %v2441 = vsub.f32 %v2431, %v2439
      %v2442 = vmul.f32 %v2440, %v2440
      %v2443 = vmul.f32 %v2441, %v2441
      %v2444 = vsel %vm306, %v2442, 0.0
      %2445 = vadd.xlane.f32.xlu0 %v2444
      %v2446 = vpop.xlane.xlu0 %2445
      %v2447 = vsel %vm306, %v2443, 0.0
      %2448 = vadd.xlane.f32.xlu0 %v2447
      %v2449 = vpop.xlane.xlu0 %2448
      %v2450 = vmul.f32 %v2446, %v313
      %v2451 = vmul.f32 %v2449, %v313
      %v2452 = vadd.f32 %v2450, 1e-12
      %v2453 = vadd.f32 %v2451, 1e-12
      %v2454 = vrsqrt.pop %v2452
      %v2455 = vrsqrt.pop %v2453
      %v2456 = vmul.f32 %v2440, %v2454
      %v2457 = vmul.f32 %v2441, %v2455
      %v2458 = vlaneseq
      %v2459 = vshrl.u32 %v2458, 7
      %v2460 = vsub.s32 4, %v2459
      %v2461 = vrot.slane %v302, %v2460
      %v2462 = vmul.f32 %v2456, %v2461
      %v2463 = vmul.f32 %v2457, %v2461
      %v2464 = vlaneseq
      %v2465 = vshrl.u32 %v2464, 7
      %v2466 = vsub.s32 5, %v2465
      %v2467 = vrot.slane %v302, %v2466
      %v2468 = vadd.f32 %v2462, %v2467
      %v2469 = vadd.f32 %v2463, %v2467
      %v2470 = vlaneseq
      %v2471 = vshrl.u32 %v2470, 7
      %v2472 = vsub.s32 6, %v2471
      %v2473 = vrot.slane %v302, %v2472
      %v2475 = vsel %vm306, %v2468, 0
      %v2478 = vsel %vm306, %v2469, 0
      %2480 = vmatprep.subr.mxu0 0.0
      %2481 = vmatpush1.msra.mxu0 %v1560
      %2482 = vmatprep.subr.mxu0 0.0
      %2483 = vmatpush1.msra.mxu0 %v1562
      %2484 = vmatprep.subr.mxu0 0.0
      %2485 = vmatpush1.msra.mxu0 %v1564
      %2486 = vmatprep.subr.mxu0 0.0
      %2487 = vmatpush1.msra.mxu0 %v1566
      %2488 = vmatprep.subr.mxu0 0.0
      %2489 = vmatpush1.msra.mxu0 0.0
      %2490 = vmatprep.subr.mxu0 0.0
      %2491 = vmatpush1.msra.mxu0 0.0
      %2492 = vmatprep.subr.mxu0 0.0
      %2493 = vmatpush1.msra.mxu0 0.0
      %2494 = vmatprep.subr.mxu0 0.0
      %2495 = vmatpush1.msra.mxu0 0.0
      %2496 = vmatprep.subr.mxu0 0.0
      %2497 = vmatpush1.msra.mxu0 0.0
      %2498 = vmatprep.subr.mxu0 0.0
      %2499 = vmatpush1.msra.mxu0 0.0
      %2500 = vmatprep.subr.mxu0 0.0
      %2501 = vmatpush1.msra.mxu0 0.0
      %2502 = vmatprep.subr.mxu0 0.0
      %2503 = vmatpush1.msra.mxu0 0.0
      %2504 = vmatprep.subr.mxu0 0.0
      %2505 = vmatpush1.msra.mxu0 0.0
      %2506 = vmatprep.subr.mxu0 0.0
      %2507 = vmatpush1.msra.mxu0 0.0
      %2508 = vmatprep.subr.mxu0 0.0
      %2509 = vmatpush1.msra.mxu0 0.0
      %2510 = vmatprep.subr.mxu0 0.0
      %2511 = vmatpush1.msra.mxu0 0.0
      %2512 = vmatprep.subr.mxu0 0.0
      %2513 = vmatpush1.msra.mxu0 0.0
      %2514 = vmatprep.subr.mxu0 0.0
      %2515 = vmatpush1.msra.mxu0 0.0
      %2516 = vmatprep.subr.mxu0 0.0
      %2517 = vmatpush1.msra.mxu0 0.0
      %2518 = vmatprep.subr.mxu0 0.0
      %2519 = vmatpush1.msra.mxu0 0.0
      %2520 = vmatprep.subr.mxu0 0.0
      %2521 = vmatpush1.msra.mxu0 0.0
      %2522 = vmatprep.subr.mxu0 0.0
      %2523 = vmatpush1.msra.mxu0 0.0
      %2524 = vmatprep.subr.mxu0 0.0
      %2525 = vmatpush1.msra.mxu0 0.0
      %2526 = vmatprep.subr.mxu0 0.0
      %2527 = vmatpush1.msra.mxu0 0.0
      %2528 = vmatprep.subr.mxu0 0.0
      %2529 = vmatpush1.msra.mxu0 0.0
      %2530 = vmatprep.subr.mxu0 0.0
      %2531 = vmatpush1.msra.mxu0 0.0
      %2532 = vmatprep.subr.mxu0 0.0
      %2533 = vmatpush1.msra.mxu0 0.0
      %2534 = vmatprep.subr.mxu0 0.0
      %2535 = vmatpush1.msra.mxu0 0.0
      %2536 = vmatprep.subr.mxu0 0.0
      %2537 = vmatpush1.msra.mxu0 0.0
      %2538 = vmatprep.subr.mxu0 0.0
      %2539 = vmatpush1.msra.mxu0 0.0
      %2540 = vmatprep.subr.mxu0 0.0
      %2541 = vmatpush1.msra.mxu0 0.0
      %2542 = vmatprep.subr.mxu0 0.0
      %2543 = vmatpush1.msra.mxu0 0.0
      %2544 = vmatprep.mubr.f32.mxu0 0.0
      %2545 = vmatmul.mubr.f32.gmra.mrb[0].mxu0 %v2475
      %v2546 = vpop.f32.mrb[0].mxu0
      %v2547 = vadd.f32 %v2473, %v2546
      %v2548 = vpop.f32.mrb[0].mxu0
      %2549 = vmatprep.mubr.f32.mxu0 0.0
      %2550 = vmatmul.mubr.f32.gmra.mrb[0].mxu0 %v2478
      %v2551 = vpop.f32.mrb[0].mxu0
      %v2552 = vadd.f32 %v2473, %v2551
      %v2553 = vpop.f32.mrb[0].mxu0
      %2554 = vdwg.mxu0
      %v2555 = vmul.f32 %v2547, 0.5
      %v2556 = vmul.f32 %v2552, 0.5
      %v2557 = vmul.f32 %v2547, 0.70710677
      %v2558 = vmul.f32 %v2552, 0.70710677
      %v2559 = vand.u32 2147483647, %v2557
      %v2560 = vand.u32 2147483647, %v2558
      %v2561 = vmul.f32 %v2559, 0.3275911
      %v2562 = vmul.f32 %v2560, 0.3275911
      %v2563 = vadd.f32 %v2561, 1.0
      %v2564 = vadd.f32 %v2562, 1.0
      %v2565 = vrcp.pop %v2563
      %v2566 = vmul.f32 1.0, %v2565
      %v2567 = vrcp.pop %v2564
      %v2568 = vmul.f32 1.0, %v2567
      %v2569 = vmul.f32 %v2566, 1.0614054
      %v2570 = vmul.f32 %v2568, 1.0614054
      %v2571 = vadd.f32 %v2569, -1.4531521
      %v2572 = vadd.f32 %v2570, -1.4531521
      %v2573 = vmul.f32 %v2571, %v2566
      %v2574 = vmul.f32 %v2572, %v2568
      %v2575 = vadd.f32 %v2573, 1.4214138
      %v2576 = vadd.f32 %v2574, 1.4214138
      %v2577 = vmul.f32 %v2575, %v2566
      %v2578 = vmul.f32 %v2576, %v2568
      %v2579 = vadd.f32 %v2577, -0.28449672
      %v2580 = vadd.f32 %v2578, -0.28449672
      %v2581 = vmul.f32 %v2579, %v2566
      %v2582 = vmul.f32 %v2580, %v2568
      %v2583 = vadd.f32 %v2581, 0.2548296
      %v2584 = vadd.f32 %v2582, 0.2548296
      %v2585 = vmul.f32 %v2583, %v2566
      %v2586 = vmul.f32 %v2584, %v2568
      %v2587 = vsub.f32 0.0, %v2559
      %v2588 = vsub.f32 0.0, %v2560
      %v2589 = vmul.f32 %v2587, %v2559
      %v2590 = vmul.f32 %v2588, %v2560
      %v2591 = vmul.f32 %v2589, 1.442695
      %v2592 = vpow.pop %v2591
      %v2593 = vmul.f32 %v2590, 1.442695
      %v2594 = vpow.pop %v2593
      %v2595 = vmul.f32 %v2585, %v2592
      %v2596 = vmul.f32 %v2586, %v2594
      %v2597 = vsub.f32 1.0, %v2595
      %v2598 = vsub.f32 1.0, %v2596
      %vm2599 = vcmp.ge.f32.partialorder %v2557, 0.0
      %vm2600 = vcmp.ge.f32.partialorder %v2558, 0.0
      %v2601 = vsub.f32 0.0, %v2597
      %v2602 = vsub.f32 0.0, %v2598
      %v2603 = vsel %vm2599, %v2597, %v2601
      %v2604 = vsel %vm2600, %v2598, %v2602
      %v2605 = vadd.f32 %v2603, 1.0
      %v2606 = vadd.f32 %v2604, 1.0
      %v2607 = vmul.f32 %v2555, %v2605
      %v2608 = vmul.f32 %v2556, %v2606
      %v2609 = vlaneseq
      %v2610 = vshrl.u32 %v2609, 7
      %v2611 = vsub.s32 7, %v2610
      %v2612 = vrot.slane %v302, %v2611
      %v2614 = vsel %vm1436, %v2607, 0
      %v2617 = vsel %vm1436, %v2608, 0
      %2619 = vmatprep.subr.mxu0 0.0
      %2620 = vmatpush1.msra.mxu0 %v1568
      %2621 = vmatprep.subr.mxu0 0.0
      %2622 = vmatpush1.msra.mxu0 %v1569
      %2623 = vmatprep.subr.mxu0 0.0
      %2624 = vmatpush1.msra.mxu0 %v1570
      %2625 = vmatprep.subr.mxu0 0.0
      %2626 = vmatpush1.msra.mxu0 %v1571
      %2627 = vmatprep.subr.mxu0 0.0
      %2628 = vmatpush1.msra.mxu0 %v1572
      %2629 = vmatprep.subr.mxu0 0.0
      %2630 = vmatpush1.msra.mxu0 %v1573
      %2631 = vmatprep.subr.mxu0 0.0
      %2632 = vmatpush1.msra.mxu0 %v1574
      %2633 = vmatprep.subr.mxu0 0.0
      %2634 = vmatpush1.msra.mxu0 %v1575
      %2635 = vmatprep.subr.mxu0 0.0
      %2636 = vmatpush1.msra.mxu0 0.0
      %2637 = vmatprep.subr.mxu0 0.0
      %2638 = vmatpush1.msra.mxu0 0.0
      %2639 = vmatprep.subr.mxu0 0.0
      %2640 = vmatpush1.msra.mxu0 0.0
      %2641 = vmatprep.subr.mxu0 0.0
      %2642 = vmatpush1.msra.mxu0 0.0
      %2643 = vmatprep.subr.mxu0 0.0
      %2644 = vmatpush1.msra.mxu0 0.0
      %2645 = vmatprep.subr.mxu0 0.0
      %2646 = vmatpush1.msra.mxu0 0.0
      %2647 = vmatprep.subr.mxu0 0.0
      %2648 = vmatpush1.msra.mxu0 0.0
      %2649 = vmatprep.subr.mxu0 0.0
      %2650 = vmatpush1.msra.mxu0 0.0
      %2651 = vmatprep.subr.mxu0 0.0
      %2652 = vmatpush1.msra.mxu0 0.0
      %2653 = vmatprep.subr.mxu0 0.0
      %2654 = vmatpush1.msra.mxu0 0.0
      %2655 = vmatprep.subr.mxu0 0.0
      %2656 = vmatpush1.msra.mxu0 0.0
      %2657 = vmatprep.subr.mxu0 0.0
      %2658 = vmatpush1.msra.mxu0 0.0
      %2659 = vmatprep.subr.mxu0 0.0
      %2660 = vmatpush1.msra.mxu0 0.0
      %2661 = vmatprep.subr.mxu0 0.0
      %2662 = vmatpush1.msra.mxu0 0.0
      %2663 = vmatprep.subr.mxu0 0.0
      %2664 = vmatpush1.msra.mxu0 0.0
      %2665 = vmatprep.subr.mxu0 0.0
      %2666 = vmatpush1.msra.mxu0 0.0
      %2667 = vmatprep.subr.mxu0 0.0
      %2668 = vmatpush1.msra.mxu0 0.0
      %2669 = vmatprep.subr.mxu0 0.0
      %2670 = vmatpush1.msra.mxu0 0.0
      %2671 = vmatprep.subr.mxu0 0.0
      %2672 = vmatpush1.msra.mxu0 0.0
      %2673 = vmatprep.subr.mxu0 0.0
      %2674 = vmatpush1.msra.mxu0 0.0
      %2675 = vmatprep.subr.mxu0 0.0
      %2676 = vmatpush1.msra.mxu0 0.0
      %2677 = vmatprep.subr.mxu0 0.0
      %2678 = vmatpush1.msra.mxu0 0.0
      %2679 = vmatprep.subr.mxu0 0.0
      %2680 = vmatpush1.msra.mxu0 0.0
      %2681 = vmatprep.subr.mxu0 0.0
      %2682 = vmatpush1.msra.mxu0 0.0
      %2683 = vmatprep.mubr.f32.mxu0 0.0
      %2684 = vmatmul.mubr.f32.gmra.mrb[0].mxu0 %v2614
      %v2685 = vpop.f32.mrb[0].mxu0
      %v2686 = vadd.f32 %v2612, %v2685
      %v2687 = vpop.f32.mrb[0].mxu0
      %2688 = vmatprep.mubr.f32.mxu0 0.0
      %2689 = vmatmul.mubr.f32.gmra.mrb[0].mxu0 %v2617
      %v2690 = vpop.f32.mrb[0].mxu0
      %v2691 = vadd.f32 %v2612, %v2690
      %v2692 = vpop.f32.mrb[0].mxu0
      %2693 = vdwg.mxu0
      %v2694 = vadd.f32 %v2686, %v2468
      %v2695 = vadd.f32 %v2691, %v2469
      %v2696 = vsel %vm306, %v2694, 0.0
      %2697 = vadd.xlane.f32.xlu0 %v2696
      %v2698 = vpop.xlane.xlu0 %2697
      %v2699 = vsel %vm306, %v2695, 0.0
      %2700 = vadd.xlane.f32.xlu0 %v2699
      %v2701 = vpop.xlane.xlu0 %2700
      %v2702 = vmul.f32 %v2698, %v313
      %v2703 = vmul.f32 %v2701, %v313
      %v2704 = vsub.f32 %v2694, %v2702
      %v2705 = vsub.f32 %v2695, %v2703
      %v2706 = vmul.f32 %v2704, %v2704
      %v2707 = vmul.f32 %v2705, %v2705
      %v2708 = vsel %vm306, %v2706, 0.0
      %2709 = vadd.xlane.f32.xlu0 %v2708
      %v2710 = vpop.xlane.xlu0 %2709
      %v2711 = vsel %vm306, %v2707, 0.0
      %2712 = vadd.xlane.f32.xlu0 %v2711
      %v2713 = vpop.xlane.xlu0 %2712
      %v2714 = vmul.f32 %v2710, %v313
      %v2715 = vmul.f32 %v2713, %v313
      %v2716 = vadd.f32 %v2714, 1e-12
      %v2717 = vadd.f32 %v2715, 1e-12
      %v2718 = vrsqrt.pop %v2716
      %v2719 = vrsqrt.pop %v2717
      %v2720 = vmul.f32 %v2704, %v2718
      %v2721 = vmul.f32 %v2705, %v2719
      %v2722 = vlaneseq
      %v2723 = vshrl.u32 %v2722, 7
      %v2724 = vsub.s32 0, %v2723
      %v2725 = vrot.slane %v303, %v2724
      %v2726 = vmul.f32 %v2720, %v2725
      %v2727 = vmul.f32 %v2721, %v2725
      %v2728 = vlaneseq
      %v2729 = vshrl.u32 %v2728, 7
      %v2730 = vsub.s32 1, %v2729
      %v2731 = vrot.slane %v303, %v2730
      %v2732 = vadd.f32 %v2726, %v2731
      %v2733 = vadd.f32 %v2727, %v2731
      %vm2734 = vcmask 58368
      %v2735 = vsel %vm2734, %v300, 0.0
      %2736 = vadd.xlane.f32.xlu0 %v2735
      %v2737 = vpop.xlane.xlu0 %2736
      %v2738 = vlaneseq
      %v2739 = vshrl.u32 %v2738, 7
      %v2740 = vsub.s32 0, %v2739
      %v2741 = vrot.slane %v300, %v2740
      %2743 = vbcast.lane.b32.xlu0 %v2741, 256
      %v2744 = vpop.permute.xlu0 %2743
      %v2745 = vlaneseq
      %v2746 = vshrl.u32 %v2745, 7
      %v2747 = vsub.s32 1, %v2746
      %v2748 = vrot.slane %v300, %v2747
      %2750 = vbcast.lane.b32.xlu0 %v2748, 256
      %v2751 = vpop.permute.xlu0 %2750
      %v2752 = vmul.f32 %v2732, %v2744
      %v2753 = vmul.f32 %v2733, %v2751
      %v2754 = vsel %vm306, %v2752, 0.0
      %v2755 = vrot.slane %v2754, 4
      %v2756 = vadd.f32 %v2754, %v2755
      %v2757 = vrot.slane %v2756, 2
      %v2758 = vadd.f32 %v2756, %v2757
      %v2759 = vrot.slane %v2758, 1
      %v2760 = vadd.f32 %v2758, %v2759
      %v2761 = vsel %vm306, %v2753, 0.0
      %v2762 = vrot.slane %v2761, 4
      %v2763 = vadd.f32 %v2761, %v2762
      %v2764 = vrot.slane %v2763, 2
      %v2765 = vadd.f32 %v2763, %v2764
      %v2766 = vrot.slane %v2765, 1
      %v2767 = vadd.f32 %v2765, %v2766
      %v2769 = vrot.slane %v2737, 1
      %v2772 = vrcp.pop %v2737
      %v2773 = vmul.f32 %v2760, %v2772
      %v2774 = vrcp.pop %v2769
      %v2775 = vmul.f32 %v2767, %v2774
      %v2776 = vmul.f32 %v2773, %v2773
      %v2777 = vmul.f32 %v2775, %v2775
      %v2780 = vrot.slane %v2777, 7
      %vm2781 = vcmask 1041409
      %v2782 = vsel %vm2781, %v2780, %v2776
      %vm2784 = vcmask 254976
      %v2785 = vsel %vm2784, %v2782, 0.0
      %2786 = vadd.xlane.f32.xlu0 %v2785
      %v2787 = vpop.xlane.xlu0 %2786
      %v2788 = vrsqrt.pop %v2787
      %v2789 = vmul.f32 %v2787, %v2788
      %vm2790 = vcmp.eq.f32.partialorder %v2787, inf
      %v2791 = vsel %vm2790, %v2787, %v2789
      %vm2792 = vcmp.eq.f32.partialorder %v2787, 0.0
      %v2793 = vand.u32 %v2787, 2147483648
      %v2794 = vsel %vm2792, %v2793, %v2791
      %v2795 = vmax.f32 %v2794, 1e-12
      %p2796 = scmp.eq.s32.totalorder %s16, 0
      %s2797 = scalar_select %p2796, 1, 0
      %s2798 = scvt.s32.f32 %s2797
      %v2800 = vrot.slane %v2795, 1
      %v2803 = vrcp.pop %v2795
      %v2804 = vmul.f32 %v2773, %v2803
      %v2805 = vrcp.pop %v2800
      %v2806 = vmul.f32 %v2775, %v2805
      %v2807 = vstv %s2798
      %v2808 = vmul.f32 %v2807, %v2804
      %v2809 = vmul.f32 %v2807, %v2806
      %s2810 = ssub.f32 1.0, %s2798
      %v2811 = vstv %s2810
      %v2812 = vmul.f32 %v2811, %v2773
      %v2813 = vmul.f32 %v2811, %v2775
      %v2814 = vadd.f32 %v2808, %v2812
      %v2815 = vadd.f32 %v2809, %v2813
      %v2818 = vrot.slane %v2815, 7
      %v2819 = vsel %vm2781, %v2818, %v2814
      %2821 = vst.msk [vmem:[%s299] sm:$0x3] %vm2784, %v2819
      %p2822 = scmp.lt.s32.totalorder %s16, 1
      %s2823 = scalar_select %p2822, %s16, 1
      %s2824 = smul.addr %s2823, 2
      %s2825 = scalar_lea.vmem %s5, %s2824
      // Predicated region
      $region41: #{concept_property_forward.1} parent=39 // pred_check
        %p2826 = pneg %p164
      $region42: #{concept_property_forward.1} parent=39 // pred_check_branch
        %2828 = sbr.rel (%p2826) target = $region44
      $region43: #{concept_property_forward.1} parent=39 // pred_region
        _
      $region44: #{concept_property_forward.1} parent=39 // pred_fallthru
        _
    $region40: #{concept_property_forward.1} parent=5 // pred_fallthru
      _
    %p2829 = scmp.le.s32.totalorder 2, %s11
    // Predicated region
    $region45: #{concept_property_forward.1} parent=5 // pred_check
      %p2830 = pneg %p2829
    $region46: #{concept_property_forward.1} parent=5 // pred_check_branch
      %2832 = sbr.rel (%p2830) target = $region48
    $region47: #{concept_property_forward.1} parent=5 // pred_region
      %s2833 = ssub.s32 %s11, 2
      // Predicated region
      $region49: #{concept_property_forward.1} parent=47 // pred_check
        %p2834 = pneg %p170
      $region50: #{concept_property_forward.1} parent=47 // pred_check_branch
        %2836 = sbr.rel (%p2834) target = $region52
      $region51: #{concept_property_forward.1} parent=47 // pred_region
        %p2837 = scmp.lt.s32.totalorder %s17, 1
        %s2838 = scalar_select %p2837, %s17, 1
        %s2839 = smul.addr %s2838, 2
        %s2840 = scalar_lea.vmem %s5, %s2839
      $region52: #{concept_property_forward.1} parent=47 // pred_fallthru
        _
    $region48: #{concept_property_forward.1} parent=5 // pred_fallthru
      _
  $region6: #{concept_property_forward.1} parent=0 // loop_footer
    %s15 = sadd.s32 1, %s11
  $region7: #{concept_property_forward.1} parent=0 // loop_footer_branch
    %10 = sbr.rel target = $region3
  $region8: #{concept_property_forward.1} parent=0 // loop_exit
    _

</llo_original>
